<compile_context>
chip_gen: v7x
topology: tpu7x:2x2x1
jax: 0.10.0
libtpu: 0.0.40
codegen_flags: <defaults>
</compile_context>

<pallas_src>
import numpy as np
import jax
import jax.numpy as jnp
from jax import lax
from jax.experimental import pallas as pl
from jax.experimental.pallas import tpu as pltpu

N, C_IN, H, W = 1, 3, 10, 10
C_OUT, K, PAD = 3, 5, 2
HP, WP = H + 2 * PAD, W + 2 * PAD      # 14, 14 (padded spatial dims)
HO, WO = H, W                          # pad 2 + valid 5x5 => same spatial size
assert PAD < H and PAD < W             # reflection-index construction assumes this


def _reflect(i, n):
    # torch.nn.ReflectionPad2d index semantics
    if i < 0:
        return -i
    if i >= n:
        return 2 * (n - 1) - i
    return i


def _build_pad_selectors():
    # Column-pad selector: (W, WP), RwT[r, j] = [r == reflect(j - PAD)]
    rw_t = np.zeros((W, WP), dtype=np.float32)
    for j in range(WP):
        rw_t[_reflect(j - PAD, W), j] = 1.0
    # Row-pad selector (block-diagonal over channels): (C_IN*HP, C_IN*H)
    rh_big = np.zeros((C_IN * HP, C_IN * H), dtype=np.float32)
    for c in range(C_IN):
        for i in range(HP):
            rh_big[c * HP + i, c * H + _reflect(i - PAD, H)] = 1.0
    return rh_big, rw_t


# Constant selection matrices, built once at import (hoisted out of the
# per-call path; under jit they are embedded constants).
_RH_NP, _RW_NP = _build_pad_selectors()
_RH_BIG = jnp.asarray(_RH_NP)          # (42, 30)
_RW_T = jnp.asarray(_RW_NP)            # (10, 14)


def _conv_tanh_kernel(x_ref, rh_ref, rw_ref, w_ref, b_ref, o_ref, xp_ref):
    # x_ref : (C_IN*H, W) = (30, 10)  VMEM, raw input (channel-stacked rows)
    # rh_ref: (42, 30)               VMEM, constant row-reflection selector
    # rw_ref: (10, 14)               VMEM, constant col-reflection selector
    # w_ref : (225,)                 SMEM, conv weight flattened (co, c, kh, kw)
    # b_ref : (3,)                   SMEM, conv bias
    # o_ref : (C_OUT, HO, WO)        VMEM, output
    # xp_ref: (C_IN*HP, WP) = (42,14) VMEM scratch, relu'd reflection-padded image

    # ReLU on the raw 300-element slab (commutes with the reflection gather).
    xr = jnp.maximum(x_ref[...], 0.0)                                    # (30, 10)

    # Reflection pad via two tiny 0/1 selection matmuls (exact gathers on MXU).
    xc = jnp.dot(xr, rw_ref[...], preferred_element_type=jnp.float32)    # (30, 14)
    xp_ref[...] = jnp.dot(rh_ref[...], xc,
                          preferred_element_type=jnp.float32)            # (42, 14)

    # Direct 5x5 conv: accumulate 25 statically-shifted windows per input chan.
    accs = [jnp.zeros((HO, WO), jnp.float32) for _ in range(C_OUT)]
    for c in range(C_IN):
        for kh in range(K):
            r0 = c * HP + kh                                             # static
            for kw in range(K):
                win = xp_ref[pl.ds(r0, HO), pl.ds(kw, WO)]               # (10, 10)
                for co in range(C_OUT):
                    w_s = w_ref[((co * C_IN + c) * K + kh) * K + kw]     # SMEM scalar
                    accs[co] = accs[co] + w_s * win

    # Bias (scalar broadcast) + tanh (EUP), store per output channel.
    for co in range(C_OUT):
        o_ref[co] = jnp.tanh(accs[co] + b_ref[co])


@jax.jit
def model_tanh_forward(x, w, b):
    # Wrapper is pure layout plumbing: bitcast reshapes only, no gather/concat.
    x2 = x.reshape(C_IN * H, W).astype(jnp.float32)        # (30, 10)
    w_flat = w.reshape(-1).astype(jnp.float32)             # (225,)
    b_f = b.astype(jnp.float32)                            # (3,)

    vmem = pltpu.MemorySpace.VMEM
    smem = pltpu.MemorySpace.SMEM

    cost = pl.CostEstimate(
        flops=2 * (C_OUT * C_IN * K * K * HO * WO)                  # conv MACs
              + 2 * (C_IN * H * W * WP)                             # col-pad matmul
              + 2 * (C_IN * HP * WP * C_IN * H),                    # row-pad matmul
        transcendentals=C_OUT * HO * WO,                            # tanh
        bytes_accessed=4 * (C_IN * H * W + _RH_NP.size + _RW_NP.size
                            + C_OUT * C_IN * K * K + C_OUT + C_OUT * HO * WO),
    )

    out3 = pl.pallas_call(
        _conv_tanh_kernel,
        out_shape=jax.ShapeDtypeStruct((C_OUT, HO, WO), jnp.float32),
        in_specs=[
            pl.BlockSpec(memory_space=vmem),   # x2
            pl.BlockSpec(memory_space=vmem),   # row-reflection selector (const)
            pl.BlockSpec(memory_space=vmem),   # col-reflection selector (const)
            pl.BlockSpec(memory_space=smem),   # w (scalars)
            pl.BlockSpec(memory_space=smem),   # b (scalars)
        ],
        out_specs=pl.BlockSpec(memory_space=vmem),
        scratch_shapes=[pltpu.VMEM((C_IN * HP, WP), jnp.float32)],   # padded image
        cost_estimate=cost,
    )(x2, _RH_BIG, _RW_T, w_flat, b_f)

    return out3.reshape(N, C_OUT, HO, WO)


def _reference(x, w, b):
    xpad = jnp.pad(x, ((0, 0), (0, 0), (PAD, PAD), (PAD, PAD)), mode="reflect")
    xr = jnp.maximum(xpad, 0.0)
    y = lax.conv_general_dilated(
        xr, w, window_strides=(1, 1), padding="VALID",
        dimension_numbers=("NCHW", "OIHW", "NCHW"))
    return jnp.tanh(y + b.reshape(1, C_OUT, 1, 1))


if __name__ == "__main__":
    key = jax.random.PRNGKey(0)
    kx, kw, kb = jax.random.split(key, 3)

    x = jax.random.normal(kx, (N, C_IN, H, W), dtype=jnp.float32)
    # PyTorch-like uniform init with bound 1/sqrt(fan_in)
    fan_in = C_IN * K * K
    bound = 1.0 / (fan_in ** 0.5)
    w = jax.random.uniform(kw, (C_OUT, C_IN, K, K), jnp.float32, -bound, bound)
    b = jax.random.uniform(kb, (C_OUT,), jnp.float32, -bound, bound)

    out = model_tanh_forward(x, w, b)
    out = jax.block_until_ready(out)

    ref = _reference(x, w, b)
    assert out.shape == (N, C_OUT, HO, WO)
    assert jnp.allclose(out, ref, atol=1e-5, rtol=1e-5)

    print("KERNEL_OK")
</pallas_src>

<mosaic_0001>
module attributes {stable_mosaic.version = 11 : i64} {
  func.func @_conv_tanh_kernel(%arg0: memref<30x10xf32, #tpu.memory_space<vmem>>, %arg1: memref<42x30xf32, #tpu.memory_space<vmem>>, %arg2: memref<10x14xf32, #tpu.memory_space<vmem>>, %arg3: memref<225xf32, #tpu.memory_space<smem>>, %arg4: memref<3xf32, #tpu.memory_space<smem>>, %arg5: memref<3x10x10xf32, #tpu.memory_space<vmem>>, %arg6: memref<42x14xf32, #tpu.memory_space<vmem>>) attributes {dimension_semantics = [], scalar_prefetch = 0 : i64, scratch_operands = 1 : i64, tpu.core_type = #tpu.core_type<tc>} {
    %c0 = arith.constant 0 : index
    %c0_0 = arith.constant 0 : index
    %0 = vector.load %arg0[%c0, %c0_0] : memref<30x10xf32, #tpu.memory_space<vmem>>, vector<30x10xf32>
    %cst = arith.constant 0.000000e+00 : f32
    %1 = vector.broadcast %cst : f32 to vector<30x10xf32>
    %2 = arith.maximumf %0, %1 : vector<30x10xf32>
    %c0_1 = arith.constant 0 : index
    %c0_2 = arith.constant 0 : index
    %3 = vector.load %arg2[%c0_1, %c0_2] : memref<10x14xf32, #tpu.memory_space<vmem>>, vector<10x14xf32>
    %cst_3 = arith.constant dense<0.000000e+00> : vector<30x14xf32>
    %4 = tpu.matmul %2, %3, %cst_3 {dimension_numbers = #tpu.dot_dimension_numbers<[1], [0], [0], [1], [0, 0, 1, 1], [], []>} : vector<30x10xf32>, vector<10x14xf32>, vector<30x14xf32> -> vector<30x14xf32>
    %c0_4 = arith.constant 0 : index
    %c0_5 = arith.constant 0 : index
    %5 = vector.load %arg1[%c0_4, %c0_5] : memref<42x30xf32, #tpu.memory_space<vmem>>, vector<42x30xf32>
    %cst_6 = arith.constant dense<0.000000e+00> : vector<42x14xf32>
    %6 = tpu.matmul %5, %4, %cst_6 {dimension_numbers = #tpu.dot_dimension_numbers<[1], [0], [0], [1], [0, 0, 1, 1], [], []>} : vector<42x30xf32>, vector<30x14xf32>, vector<42x14xf32> -> vector<42x14xf32>
    %c0_7 = arith.constant 0 : index
    %c0_8 = arith.constant 0 : index
    %7 = vector.load %arg6[%c0_7, %c0_8] : memref<42x14xf32, #tpu.memory_space<vmem>>, vector<42x14xf32>
    tpu.vector_store %arg6[%c0_7, %c0_8], %6 {strides = array<i32>} : memref<42x14xf32, #tpu.memory_space<vmem>>, vector<42x14xf32>,
    %cst_9 = arith.constant 0.000000e+00 : f32
    %8 = vector.broadcast %cst_9 : f32 to vector<10x10xf32>
    %cst_10 = arith.constant 0.000000e+00 : f32
    %9 = vector.broadcast %cst_10 : f32 to vector<10x10xf32>
    %cst_11 = arith.constant 0.000000e+00 : f32
    %10 = vector.broadcast %cst_11 : f32 to vector<10x10xf32>
    %c0_12 = arith.constant 0 : index
    %c0_13 = arith.constant 0 : index
    %11 = vector.load %arg6[%c0_12, %c0_13] : memref<42x14xf32, #tpu.memory_space<vmem>>, vector<10x10xf32>
    %c0_14 = arith.constant 0 : index
    %12 = memref.load %arg3[%c0_14] : memref<225xf32, #tpu.memory_space<smem>>
    %13 = vector.broadcast %12 : f32 to vector<10x10xf32>
    %14 = arith.mulf %13, %11 : vector<10x10xf32>
    %15 = arith.addf %8, %14 : vector<10x10xf32>
    %c75 = arith.constant 75 : index
    %16 = memref.load %arg3[%c75] : memref<225xf32, #tpu.memory_space<smem>>
    %17 = vector.broadcast %16 : f32 to vector<10x10xf32>
    %18 = arith.mulf %17, %11 : vector<10x10xf32>
    %19 = arith.addf %9, %18 : vector<10x10xf32>
    %c150 = arith.constant 150 : index
    %20 = memref.load %arg3[%c150] : memref<225xf32, #tpu.memory_space<smem>>
    %21 = vector.broadcast %20 : f32 to vector<10x10xf32>
    %22 = arith.mulf %21, %11 : vector<10x10xf32>
    %23 = arith.addf %10, %22 : vector<10x10xf32>
    %c0_15 = arith.constant 0 : index
    %c1 = arith.constant 1 : index
    %24 = vector.load %arg6[%c0_15, %c1] : memref<42x14xf32, #tpu.memory_space<vmem>>, vector<10x10xf32>
    %c1_16 = arith.constant 1 : index
    %25 = memref.load %arg3[%c1_16] : memref<225xf32, #tpu.memory_space<smem>>
    %26 = vector.broadcast %25 : f32 to vector<10x10xf32>
    %27 = arith.mulf %26, %24 : vector<10x10xf32>
    %28 = arith.addf %15, %27 : vector<10x10xf32>
    %c76 = arith.constant 76 : index
    %29 = memref.load %arg3[%c76] : memref<225xf32, #tpu.memory_space<smem>>
    %30 = vector.broadcast %29 : f32 to vector<10x10xf32>
    %31 = arith.mulf %30, %24 : vector<10x10xf32>
    %32 = arith.addf %19, %31 : vector<10x10xf32>
    %c151 = arith.constant 151 : index
    %33 = memref.load %arg3[%c151] : memref<225xf32, #tpu.memory_space<smem>>
    %34 = vector.broadcast %33 : f32 to vector<10x10xf32>
    %35 = arith.mulf %34, %24 : vector<10x10xf32>
    %36 = arith.addf %23, %35 : vector<10x10xf32>
    %c0_17 = arith.constant 0 : index
    %c2 = arith.constant 2 : index
    %37 = vector.load %arg6[%c0_17, %c2] : memref<42x14xf32, #tpu.memory_space<vmem>>, vector<10x10xf32>
    %c2_18 = arith.constant 2 : index
    %38 = memref.load %arg3[%c2_18] : memref<225xf32, #tpu.memory_space<smem>>
    %39 = vector.broadcast %38 : f32 to vector<10x10xf32>
    %40 = arith.mulf %39, %37 : vector<10x10xf32>
    %41 = arith.addf %28, %40 : vector<10x10xf32>
    %c77 = arith.constant 77 : index
    %42 = memref.load %arg3[%c77] : memref<225xf32, #tpu.memory_space<smem>>
    %43 = vector.broadcast %42 : f32 to vector<10x10xf32>
    %44 = arith.mulf %43, %37 : vector<10x10xf32>
    %45 = arith.addf %32, %44 : vector<10x10xf32>
    %c152 = arith.constant 152 : index
    %46 = memref.load %arg3[%c152] : memref<225xf32, #tpu.memory_space<smem>>
    %47 = vector.broadcast %46 : f32 to vector<10x10xf32>
    %48 = arith.mulf %47, %37 : vector<10x10xf32>
    %49 = arith.addf %36, %48 : vector<10x10xf32>
    %c0_19 = arith.constant 0 : index
    %c3 = arith.constant 3 : index
    %50 = vector.load %arg6[%c0_19, %c3] : memref<42x14xf32, #tpu.memory_space<vmem>>, vector<10x10xf32>
    %c3_20 = arith.constant 3 : index
    %51 = memref.load %arg3[%c3_20] : memref<225xf32, #tpu.memory_space<smem>>
    %52 = vector.broadcast %51 : f32 to vector<10x10xf32>
    %53 = arith.mulf %52, %50 : vector<10x10xf32>
    %54 = arith.addf %41, %53 : vector<10x10xf32>
    %c78 = arith.constant 78 : index
    %55 = memref.load %arg3[%c78] : memref<225xf32, #tpu.memory_space<smem>>
    %56 = vector.broadcast %55 : f32 to vector<10x10xf32>
    %57 = arith.mulf %56, %50 : vector<10x10xf32>
    %58 = arith.addf %45, %57 : vector<10x10xf32>
    %c153 = arith.constant 153 : index
    %59 = memref.load %arg3[%c153] : memref<225xf32, #tpu.memory_space<smem>>
    %60 = vector.broadcast %59 : f32 to vector<10x10xf32>
    %61 = arith.mulf %60, %50 : vector<10x10xf32>
    %62 = arith.addf %49, %61 : vector<10x10xf32>
    %c0_21 = arith.constant 0 : index
    %c4 = arith.constant 4 : index
    %63 = vector.load %arg6[%c0_21, %c4] : memref<42x14xf32, #tpu.memory_space<vmem>>, vector<10x10xf32>
    %c4_22 = arith.constant 4 : index
    %64 = memref.load %arg3[%c4_22] : memref<225xf32, #tpu.memory_space<smem>>
    %65 = vector.broadcast %64 : f32 to vector<10x10xf32>
    %66 = arith.mulf %65, %63 : vector<10x10xf32>
    %67 = arith.addf %54, %66 : vector<10x10xf32>
    %c79 = arith.constant 79 : index
    %68 = memref.load %arg3[%c79] : memref<225xf32, #tpu.memory_space<smem>>
    %69 = vector.broadcast %68 : f32 to vector<10x10xf32>
    %70 = arith.mulf %69, %63 : vector<10x10xf32>
    %71 = arith.addf %58, %70 : vector<10x10xf32>
    %c154 = arith.constant 154 : index
    %72 = memref.load %arg3[%c154] : memref<225xf32, #tpu.memory_space<smem>>
    %73 = vector.broadcast %72 : f32 to vector<10x10xf32>
    %74 = arith.mulf %73, %63 : vector<10x10xf32>
    %75 = arith.addf %62, %74 : vector<10x10xf32>
    %c1_23 = arith.constant 1 : index
    %c0_24 = arith.constant 0 : index
    %76 = vector.load %arg6[%c1_23, %c0_24] : memref<42x14xf32, #tpu.memory_space<vmem>>, vector<10x10xf32>
    %c5 = arith.constant 5 : index
    %77 = memref.load %arg3[%c5] : memref<225xf32, #tpu.memory_space<smem>>
    %78 = vector.broadcast %77 : f32 to vector<10x10xf32>
    %79 = arith.mulf %78, %76 : vector<10x10xf32>
    %80 = arith.addf %67, %79 : vector<10x10xf32>
    %c80 = arith.constant 80 : index
    %81 = memref.load %arg3[%c80] : memref<225xf32, #tpu.memory_space<smem>>
    %82 = vector.broadcast %81 : f32 to vector<10x10xf32>
    %83 = arith.mulf %82, %76 : vector<10x10xf32>
    %84 = arith.addf %71, %83 : vector<10x10xf32>
    %c155 = arith.constant 155 : index
    %85 = memref.load %arg3[%c155] : memref<225xf32, #tpu.memory_space<smem>>
    %86 = vector.broadcast %85 : f32 to vector<10x10xf32>
    %87 = arith.mulf %86, %76 : vector<10x10xf32>
    %88 = arith.addf %75, %87 : vector<10x10xf32>
    %c1_25 = arith.constant 1 : index
    %c1_26 = arith.constant 1 : index
    %89 = vector.load %arg6[%c1_25, %c1_26] : memref<42x14xf32, #tpu.memory_space<vmem>>, vector<10x10xf32>
    %c6 = arith.constant 6 : index
    %90 = memref.load %arg3[%c6] : memref<225xf32, #tpu.memory_space<smem>>
    %91 = vector.broadcast %90 : f32 to vector<10x10xf32>
    %92 = arith.mulf %91, %89 : vector<10x10xf32>
    %93 = arith.addf %80, %92 : vector<10x10xf32>
    %c81 = arith.constant 81 : index
    %94 = memref.load %arg3[%c81] : memref<225xf32, #tpu.memory_space<smem>>
    %95 = vector.broadcast %94 : f32 to vector<10x10xf32>
    %96 = arith.mulf %95, %89 : vector<10x10xf32>
    %97 = arith.addf %84, %96 : vector<10x10xf32>
    %c156 = arith.constant 156 : index
    %98 = memref.load %arg3[%c156] : memref<225xf32, #tpu.memory_space<smem>>
    %99 = vector.broadcast %98 : f32 to vector<10x10xf32>
    %100 = arith.mulf %99, %89 : vector<10x10xf32>
    %101 = arith.addf %88, %100 : vector<10x10xf32>
    %c1_27 = arith.constant 1 : index
    %c2_28 = arith.constant 2 : index
    %102 = vector.load %arg6[%c1_27, %c2_28] : memref<42x14xf32, #tpu.memory_space<vmem>>, vector<10x10xf32>
    %c7 = arith.constant 7 : index
    %103 = memref.load %arg3[%c7] : memref<225xf32, #tpu.memory_space<smem>>
    %104 = vector.broadcast %103 : f32 to vector<10x10xf32>
    %105 = arith.mulf %104, %102 : vector<10x10xf32>
    %106 = arith.addf %93, %105 : vector<10x10xf32>
    %c82 = arith.constant 82 : index
    %107 = memref.load %arg3[%c82] : memref<225xf32, #tpu.memory_space<smem>>
    %108 = vector.broadcast %107 : f32 to vector<10x10xf32>
    %109 = arith.mulf %108, %102 : vector<10x10xf32>
    %110 = arith.addf %97, %109 : vector<10x10xf32>
    %c157 = arith.constant 157 : index
    %111 = memref.load %arg3[%c157] : memref<225xf32, #tpu.memory_space<smem>>
    %112 = vector.broadcast %111 : f32 to vector<10x10xf32>
    %113 = arith.mulf %112, %102 : vector<10x10xf32>
    %114 = arith.addf %101, %113 : vector<10x10xf32>
    %c1_29 = arith.constant 1 : index
    %c3_30 = arith.constant 3 : index
    %115 = vector.load %arg6[%c1_29, %c3_30] : memref<42x14xf32, #tpu.memory_space<vmem>>, vector<10x10xf32>
    %c8 = arith.constant 8 : index
    %116 = memref.load %arg3[%c8] : memref<225xf32, #tpu.memory_space<smem>>
    %117 = vector.broadcast %116 : f32 to vector<10x10xf32>
    %118 = arith.mulf %117, %115 : vector<10x10xf32>
    %119 = arith.addf %106, %118 : vector<10x10xf32>
    %c83 = arith.constant 83 : index
    %120 = memref.load %arg3[%c83] : memref<225xf32, #tpu.memory_space<smem>>
    %121 = vector.broadcast %120 : f32 to vector<10x10xf32>
    %122 = arith.mulf %121, %115 : vector<10x10xf32>
    %123 = arith.addf %110, %122 : vector<10x10xf32>
    %c158 = arith.constant 158 : index
    %124 = memref.load %arg3[%c158] : memref<225xf32, #tpu.memory_space<smem>>
    %125 = vector.broadcast %124 : f32 to vector<10x10xf32>
    %126 = arith.mulf %125, %115 : vector<10x10xf32>
    %127 = arith.addf %114, %126 : vector<10x10xf32>
    %c1_31 = arith.constant 1 : index
    %c4_32 = arith.constant 4 : index
    %128 = vector.load %arg6[%c1_31, %c4_32] : memref<42x14xf32, #tpu.memory_space<vmem>>, vector<10x10xf32>
    %c9 = arith.constant 9 : index
    %129 = memref.load %arg3[%c9] : memref<225xf32, #tpu.memory_space<smem>>
    %130 = vector.broadcast %129 : f32 to vector<10x10xf32>
    %131 = arith.mulf %130, %128 : vector<10x10xf32>
    %132 = arith.addf %119, %131 : vector<10x10xf32>
    %c84 = arith.constant 84 : index
    %133 = memref.load %arg3[%c84] : memref<225xf32, #tpu.memory_space<smem>>
    %134 = vector.broadcast %133 : f32 to vector<10x10xf32>
    %135 = arith.mulf %134, %128 : vector<10x10xf32>
    %136 = arith.addf %123, %135 : vector<10x10xf32>
    %c159 = arith.constant 159 : index
    %137 = memref.load %arg3[%c159] : memref<225xf32, #tpu.memory_space<smem>>
    %138 = vector.broadcast %137 : f32 to vector<10x10xf32>
    %139 = arith.mulf %138, %128 : vector<10x10xf32>
    %140 = arith.addf %127, %139 : vector<10x10xf32>
    %c2_33 = arith.constant 2 : index
    %c0_34 = arith.constant 0 : index
    %141 = vector.load %arg6[%c2_33, %c0_34] : memref<42x14xf32, #tpu.memory_space<vmem>>, vector<10x10xf32>
    %c10 = arith.constant 10 : index
    %142 = memref.load %arg3[%c10] : memref<225xf32, #tpu.memory_space<smem>>
    %143 = vector.broadcast %142 : f32 to vector<10x10xf32>
    %144 = arith.mulf %143, %141 : vector<10x10xf32>
    %145 = arith.addf %132, %144 : vector<10x10xf32>
    %c85 = arith.constant 85 : index
    %146 = memref.load %arg3[%c85] : memref<225xf32, #tpu.memory_space<smem>>
    %147 = vector.broadcast %146 : f32 to vector<10x10xf32>
    %148 = arith.mulf %147, %141 : vector<10x10xf32>
    %149 = arith.addf %136, %148 : vector<10x10xf32>
    %c160 = arith.constant 160 : index
    %150 = memref.load %arg3[%c160] : memref<225xf32, #tpu.memory_space<smem>>
    %151 = vector.broadcast %150 : f32 to vector<10x10xf32>
    %152 = arith.mulf %151, %141 : vector<10x10xf32>
    %153 = arith.addf %140, %152 : vector<10x10xf32>
    %c2_35 = arith.constant 2 : index
    %c1_36 = arith.constant 1 : index
    %154 = vector.load %arg6[%c2_35, %c1_36] : memref<42x14xf32, #tpu.memory_space<vmem>>, vector<10x10xf32>
    %c11 = arith.constant 11 : index
    %155 = memref.load %arg3[%c11] : memref<225xf32, #tpu.memory_space<smem>>
    %156 = vector.broadcast %155 : f32 to vector<10x10xf32>
    %157 = arith.mulf %156, %154 : vector<10x10xf32>
    %158 = arith.addf %145, %157 : vector<10x10xf32>
    %c86 = arith.constant 86 : index
    %159 = memref.load %arg3[%c86] : memref<225xf32, #tpu.memory_space<smem>>
    %160 = vector.broadcast %159 : f32 to vector<10x10xf32>
    %161 = arith.mulf %160, %154 : vector<10x10xf32>
    %162 = arith.addf %149, %161 : vector<10x10xf32>
    %c161 = arith.constant 161 : index
    %163 = memref.load %arg3[%c161] : memref<225xf32, #tpu.memory_space<smem>>
    %164 = vector.broadcast %163 : f32 to vector<10x10xf32>
    %165 = arith.mulf %164, %154 : vector<10x10xf32>
    %166 = arith.addf %153, %165 : vector<10x10xf32>
    %c2_37 = arith.constant 2 : index
    %c2_38 = arith.constant 2 : index
    %167 = vector.load %arg6[%c2_37, %c2_38] : memref<42x14xf32, #tpu.memory_space<vmem>>, vector<10x10xf32>
    %c12 = arith.constant 12 : index
    %168 = memref.load %arg3[%c12] : memref<225xf32, #tpu.memory_space<smem>>
    %169 = vector.broadcast %168 : f32 to vector<10x10xf32>
    %170 = arith.mulf %169, %167 : vector<10x10xf32>
    %171 = arith.addf %158, %170 : vector<10x10xf32>
    %c87 = arith.constant 87 : index
    %172 = memref.load %arg3[%c87] : memref<225xf32, #tpu.memory_space<smem>>
    %173 = vector.broadcast %172 : f32 to vector<10x10xf32>
    %174 = arith.mulf %173, %167 : vector<10x10xf32>
    %175 = arith.addf %162, %174 : vector<10x10xf32>
    %c162 = arith.constant 162 : index
    %176 = memref.load %arg3[%c162] : memref<225xf32, #tpu.memory_space<smem>>
    %177 = vector.broadcast %176 : f32 to vector<10x10xf32>
    %178 = arith.mulf %177, %167 : vector<10x10xf32>
    %179 = arith.addf %166, %178 : vector<10x10xf32>
    %c2_39 = arith.constant 2 : index
    %c3_40 = arith.constant 3 : index
    %180 = vector.load %arg6[%c2_39, %c3_40] : memref<42x14xf32, #tpu.memory_space<vmem>>, vector<10x10xf32>
    %c13 = arith.constant 13 : index
    %181 = memref.load %arg3[%c13] : memref<225xf32, #tpu.memory_space<smem>>
    %182 = vector.broadcast %181 : f32 to vector<10x10xf32>
    %183 = arith.mulf %182, %180 : vector<10x10xf32>
    %184 = arith.addf %171, %183 : vector<10x10xf32>
    %c88 = arith.constant 88 : index
    %185 = memref.load %arg3[%c88] : memref<225xf32, #tpu.memory_space<smem>>
    %186 = vector.broadcast %185 : f32 to vector<10x10xf32>
    %187 = arith.mulf %186, %180 : vector<10x10xf32>
    %188 = arith.addf %175, %187 : vector<10x10xf32>
    %c163 = arith.constant 163 : index
    %189 = memref.load %arg3[%c163] : memref<225xf32, #tpu.memory_space<smem>>
    %190 = vector.broadcast %189 : f32 to vector<10x10xf32>
    %191 = arith.mulf %190, %180 : vector<10x10xf32>
    %192 = arith.addf %179, %191 : vector<10x10xf32>
    %c2_41 = arith.constant 2 : index
    %c4_42 = arith.constant 4 : index
    %193 = vector.load %arg6[%c2_41, %c4_42] : memref<42x14xf32, #tpu.memory_space<vmem>>, vector<10x10xf32>
    %c14 = arith.constant 14 : index
    %194 = memref.load %arg3[%c14] : memref<225xf32, #tpu.memory_space<smem>>
    %195 = vector.broadcast %194 : f32 to vector<10x10xf32>
    %196 = arith.mulf %195, %193 : vector<10x10xf32>
    %197 = arith.addf %184, %196 : vector<10x10xf32>
    %c89 = arith.constant 89 : index
    %198 = memref.load %arg3[%c89] : memref<225xf32, #tpu.memory_space<smem>>
    %199 = vector.broadcast %198 : f32 to vector<10x10xf32>
    %200 = arith.mulf %199, %193 : vector<10x10xf32>
    %201 = arith.addf %188, %200 : vector<10x10xf32>
    %c164 = arith.constant 164 : index
    %202 = memref.load %arg3[%c164] : memref<225xf32, #tpu.memory_space<smem>>
    %203 = vector.broadcast %202 : f32 to vector<10x10xf32>
    %204 = arith.mulf %203, %193 : vector<10x10xf32>
    %205 = arith.addf %192, %204 : vector<10x10xf32>
    %c3_43 = arith.constant 3 : index
    %c0_44 = arith.constant 0 : index
    %206 = vector.load %arg6[%c3_43, %c0_44] : memref<42x14xf32, #tpu.memory_space<vmem>>, vector<10x10xf32>
    %c15 = arith.constant 15 : index
    %207 = memref.load %arg3[%c15] : memref<225xf32, #tpu.memory_space<smem>>
    %208 = vector.broadcast %207 : f32 to vector<10x10xf32>
    %209 = arith.mulf %208, %206 : vector<10x10xf32>
    %210 = arith.addf %197, %209 : vector<10x10xf32>
    %c90 = arith.constant 90 : index
    %211 = memref.load %arg3[%c90] : memref<225xf32, #tpu.memory_space<smem>>
    %212 = vector.broadcast %211 : f32 to vector<10x10xf32>
    %213 = arith.mulf %212, %206 : vector<10x10xf32>
    %214 = arith.addf %201, %213 : vector<10x10xf32>
    %c165 = arith.constant 165 : index
    %215 = memref.load %arg3[%c165] : memref<225xf32, #tpu.memory_space<smem>>
    %216 = vector.broadcast %215 : f32 to vector<10x10xf32>
    %217 = arith.mulf %216, %206 : vector<10x10xf32>
    %218 = arith.addf %205, %217 : vector<10x10xf32>
    %c3_45 = arith.constant 3 : index
    %c1_46 = arith.constant 1 : index
    %219 = vector.load %arg6[%c3_45, %c1_46] : memref<42x14xf32, #tpu.memory_space<vmem>>, vector<10x10xf32>
    %c16 = arith.constant 16 : index
    %220 = memref.load %arg3[%c16] : memref<225xf32, #tpu.memory_space<smem>>
    %221 = vector.broadcast %220 : f32 to vector<10x10xf32>
    %222 = arith.mulf %221, %219 : vector<10x10xf32>
    %223 = arith.addf %210, %222 : vector<10x10xf32>
    %c91 = arith.constant 91 : index
    %224 = memref.load %arg3[%c91] : memref<225xf32, #tpu.memory_space<smem>>
    %225 = vector.broadcast %224 : f32 to vector<10x10xf32>
    %226 = arith.mulf %225, %219 : vector<10x10xf32>
    %227 = arith.addf %214, %226 : vector<10x10xf32>
    %c166 = arith.constant 166 : index
    %228 = memref.load %arg3[%c166] : memref<225xf32, #tpu.memory_space<smem>>
    %229 = vector.broadcast %228 : f32 to vector<10x10xf32>
    %230 = arith.mulf %229, %219 : vector<10x10xf32>
    %231 = arith.addf %218, %230 : vector<10x10xf32>
    %c3_47 = arith.constant 3 : index
    %c2_48 = arith.constant 2 : index
    %232 = vector.load %arg6[%c3_47, %c2_48] : memref<42x14xf32, #tpu.memory_space<vmem>>, vector<10x10xf32>
    %c17 = arith.constant 17 : index
    %233 = memref.load %arg3[%c17] : memref<225xf32, #tpu.memory_space<smem>>
    %234 = vector.broadcast %233 : f32 to vector<10x10xf32>
    %235 = arith.mulf %234, %232 : vector<10x10xf32>
    %236 = arith.addf %223, %235 : vector<10x10xf32>
    %c92 = arith.constant 92 : index
    %237 = memref.load %arg3[%c92] : memref<225xf32, #tpu.memory_space<smem>>
    %238 = vector.broadcast %237 : f32 to vector<10x10xf32>
    %239 = arith.mulf %238, %232 : vector<10x10xf32>
    %240 = arith.addf %227, %239 : vector<10x10xf32>
    %c167 = arith.constant 167 : index
    %241 = memref.load %arg3[%c167] : memref<225xf32, #tpu.memory_space<smem>>
    %242 = vector.broadcast %241 : f32 to vector<10x10xf32>
    %243 = arith.mulf %242, %232 : vector<10x10xf32>
    %244 = arith.addf %231, %243 : vector<10x10xf32>
    %c3_49 = arith.constant 3 : index
    %c3_50 = arith.constant 3 : index
    %245 = vector.load %arg6[%c3_49, %c3_50] : memref<42x14xf32, #tpu.memory_space<vmem>>, vector<10x10xf32>
    %c18 = arith.constant 18 : index
    %246 = memref.load %arg3[%c18] : memref<225xf32, #tpu.memory_space<smem>>
    %247 = vector.broadcast %246 : f32 to vector<10x10xf32>
    %248 = arith.mulf %247, %245 : vector<10x10xf32>
    %249 = arith.addf %236, %248 : vector<10x10xf32>
    %c93 = arith.constant 93 : index
    %250 = memref.load %arg3[%c93] : memref<225xf32, #tpu.memory_space<smem>>
    %251 = vector.broadcast %250 : f32 to vector<10x10xf32>
    %252 = arith.mulf %251, %245 : vector<10x10xf32>
    %253 = arith.addf %240, %252 : vector<10x10xf32>
    %c168 = arith.constant 168 : index
    %254 = memref.load %arg3[%c168] : memref<225xf32, #tpu.memory_space<smem>>
    %255 = vector.broadcast %254 : f32 to vector<10x10xf32>
    %256 = arith.mulf %255, %245 : vector<10x10xf32>
    %257 = arith.addf %244, %256 : vector<10x10xf32>
    %c3_51 = arith.constant 3 : index
    %c4_52 = arith.constant 4 : index
    %258 = vector.load %arg6[%c3_51, %c4_52] : memref<42x14xf32, #tpu.memory_space<vmem>>, vector<10x10xf32>
    %c19 = arith.constant 19 : index
    %259 = memref.load %arg3[%c19] : memref<225xf32, #tpu.memory_space<smem>>
    %260 = vector.broadcast %259 : f32 to vector<10x10xf32>
    %261 = arith.mulf %260, %258 : vector<10x10xf32>
    %262 = arith.addf %249, %261 : vector<10x10xf32>
    %c94 = arith.constant 94 : index
    %263 = memref.load %arg3[%c94] : memref<225xf32, #tpu.memory_space<smem>>
    %264 = vector.broadcast %263 : f32 to vector<10x10xf32>
    %265 = arith.mulf %264, %258 : vector<10x10xf32>
    %266 = arith.addf %253, %265 : vector<10x10xf32>
    %c169 = arith.constant 169 : index
    %267 = memref.load %arg3[%c169] : memref<225xf32, #tpu.memory_space<smem>>
    %268 = vector.broadcast %267 : f32 to vector<10x10xf32>
    %269 = arith.mulf %268, %258 : vector<10x10xf32>
    %270 = arith.addf %257, %269 : vector<10x10xf32>
    %c4_53 = arith.constant 4 : index
    %c0_54 = arith.constant 0 : index
    %271 = vector.load %arg6[%c4_53, %c0_54] : memref<42x14xf32, #tpu.memory_space<vmem>>, vector<10x10xf32>
    %c20 = arith.constant 20 : index
    %272 = memref.load %arg3[%c20] : memref<225xf32, #tpu.memory_space<smem>>
    %273 = vector.broadcast %272 : f32 to vector<10x10xf32>
    %274 = arith.mulf %273, %271 : vector<10x10xf32>
    %275 = arith.addf %262, %274 : vector<10x10xf32>
    %c95 = arith.constant 95 : index
    %276 = memref.load %arg3[%c95] : memref<225xf32, #tpu.memory_space<smem>>
    %277 = vector.broadcast %276 : f32 to vector<10x10xf32>
    %278 = arith.mulf %277, %271 : vector<10x10xf32>
    %279 = arith.addf %266, %278 : vector<10x10xf32>
    %c170 = arith.constant 170 : index
    %280 = memref.load %arg3[%c170] : memref<225xf32, #tpu.memory_space<smem>>
    %281 = vector.broadcast %280 : f32 to vector<10x10xf32>
    %282 = arith.mulf %281, %271 : vector<10x10xf32>
    %283 = arith.addf %270, %282 : vector<10x10xf32>
    %c4_55 = arith.constant 4 : index
    %c1_56 = arith.constant 1 : index
    %284 = vector.load %arg6[%c4_55, %c1_56] : memref<42x14xf32, #tpu.memory_space<vmem>>, vector<10x10xf32>
    %c21 = arith.constant 21 : index
    %285 = memref.load %arg3[%c21] : memref<225xf32, #tpu.memory_space<smem>>
    %286 = vector.broadcast %285 : f32 to vector<10x10xf32>
    %287 = arith.mulf %286, %284 : vector<10x10xf32>
    %288 = arith.addf %275, %287 : vector<10x10xf32>
    %c96 = arith.constant 96 : index
    %289 = memref.load %arg3[%c96] : memref<225xf32, #tpu.memory_space<smem>>
    %290 = vector.broadcast %289 : f32 to vector<10x10xf32>
    %291 = arith.mulf %290, %284 : vector<10x10xf32>
    %292 = arith.addf %279, %291 : vector<10x10xf32>
    %c171 = arith.constant 171 : index
    %293 = memref.load %arg3[%c171] : memref<225xf32, #tpu.memory_space<smem>>
    %294 = vector.broadcast %293 : f32 to vector<10x10xf32>
    %295 = arith.mulf %294, %284 : vector<10x10xf32>
    %296 = arith.addf %283, %295 : vector<10x10xf32>
    %c4_57 = arith.constant 4 : index
    %c2_58 = arith.constant 2 : index
    %297 = vector.load %arg6[%c4_57, %c2_58] : memref<42x14xf32, #tpu.memory_space<vmem>>, vector<10x10xf32>
    %c22 = arith.constant 22 : index
    %298 = memref.load %arg3[%c22] : memref<225xf32, #tpu.memory_space<smem>>
    %299 = vector.broadcast %298 : f32 to vector<10x10xf32>
    %300 = arith.mulf %299, %297 : vector<10x10xf32>
    %301 = arith.addf %288, %300 : vector<10x10xf32>
    %c97 = arith.constant 97 : index
    %302 = memref.load %arg3[%c97] : memref<225xf32, #tpu.memory_space<smem>>
    %303 = vector.broadcast %302 : f32 to vector<10x10xf32>
    %304 = arith.mulf %303, %297 : vector<10x10xf32>
    %305 = arith.addf %292, %304 : vector<10x10xf32>
    %c172 = arith.constant 172 : index
    %306 = memref.load %arg3[%c172] : memref<225xf32, #tpu.memory_space<smem>>
    %307 = vector.broadcast %306 : f32 to vector<10x10xf32>
    %308 = arith.mulf %307, %297 : vector<10x10xf32>
    %309 = arith.addf %296, %308 : vector<10x10xf32>
    %c4_59 = arith.constant 4 : index
    %c3_60 = arith.constant 3 : index
    %310 = vector.load %arg6[%c4_59, %c3_60] : memref<42x14xf32, #tpu.memory_space<vmem>>, vector<10x10xf32>
    %c23 = arith.constant 23 : index
    %311 = memref.load %arg3[%c23] : memref<225xf32, #tpu.memory_space<smem>>
    %312 = vector.broadcast %311 : f32 to vector<10x10xf32>
    %313 = arith.mulf %312, %310 : vector<10x10xf32>
    %314 = arith.addf %301, %313 : vector<10x10xf32>
    %c98 = arith.constant 98 : index
    %315 = memref.load %arg3[%c98] : memref<225xf32, #tpu.memory_space<smem>>
    %316 = vector.broadcast %315 : f32 to vector<10x10xf32>
    %317 = arith.mulf %316, %310 : vector<10x10xf32>
    %318 = arith.addf %305, %317 : vector<10x10xf32>
    %c173 = arith.constant 173 : index
    %319 = memref.load %arg3[%c173] : memref<225xf32, #tpu.memory_space<smem>>
    %320 = vector.broadcast %319 : f32 to vector<10x10xf32>
    %321 = arith.mulf %320, %310 : vector<10x10xf32>
    %322 = arith.addf %309, %321 : vector<10x10xf32>
    %c4_61 = arith.constant 4 : index
    %c4_62 = arith.constant 4 : index
    %323 = vector.load %arg6[%c4_61, %c4_62] : memref<42x14xf32, #tpu.memory_space<vmem>>, vector<10x10xf32>
    %c24 = arith.constant 24 : index
    %324 = memref.load %arg3[%c24] : memref<225xf32, #tpu.memory_space<smem>>
    %325 = vector.broadcast %324 : f32 to vector<10x10xf32>
    %326 = arith.mulf %325, %323 : vector<10x10xf32>
    %327 = arith.addf %314, %326 : vector<10x10xf32>
    %c99 = arith.constant 99 : index
    %328 = memref.load %arg3[%c99] : memref<225xf32, #tpu.memory_space<smem>>
    %329 = vector.broadcast %328 : f32 to vector<10x10xf32>
    %330 = arith.mulf %329, %323 : vector<10x10xf32>
    %331 = arith.addf %318, %330 : vector<10x10xf32>
    %c174 = arith.constant 174 : index
    %332 = memref.load %arg3[%c174] : memref<225xf32, #tpu.memory_space<smem>>
    %333 = vector.broadcast %332 : f32 to vector<10x10xf32>
    %334 = arith.mulf %333, %323 : vector<10x10xf32>
    %335 = arith.addf %322, %334 : vector<10x10xf32>
    %c14_63 = arith.constant 14 : index
    %c0_64 = arith.constant 0 : index
    %336 = vector.load %arg6[%c14_63, %c0_64] : memref<42x14xf32, #tpu.memory_space<vmem>>, vector<10x10xf32>
    %c25 = arith.constant 25 : index
    %337 = memref.load %arg3[%c25] : memref<225xf32, #tpu.memory_space<smem>>
    %338 = vector.broadcast %337 : f32 to vector<10x10xf32>
    %339 = arith.mulf %338, %336 : vector<10x10xf32>
    %340 = arith.addf %327, %339 : vector<10x10xf32>
    %c100 = arith.constant 100 : index
    %341 = memref.load %arg3[%c100] : memref<225xf32, #tpu.memory_space<smem>>
    %342 = vector.broadcast %341 : f32 to vector<10x10xf32>
    %343 = arith.mulf %342, %336 : vector<10x10xf32>
    %344 = arith.addf %331, %343 : vector<10x10xf32>
    %c175 = arith.constant 175 : index
    %345 = memref.load %arg3[%c175] : memref<225xf32, #tpu.memory_space<smem>>
    %346 = vector.broadcast %345 : f32 to vector<10x10xf32>
    %347 = arith.mulf %346, %336 : vector<10x10xf32>
    %348 = arith.addf %335, %347 : vector<10x10xf32>
    %c14_65 = arith.constant 14 : index
    %c1_66 = arith.constant 1 : index
    %349 = vector.load %arg6[%c14_65, %c1_66] : memref<42x14xf32, #tpu.memory_space<vmem>>, vector<10x10xf32>
    %c26 = arith.constant 26 : index
    %350 = memref.load %arg3[%c26] : memref<225xf32, #tpu.memory_space<smem>>
    %351 = vector.broadcast %350 : f32 to vector<10x10xf32>
    %352 = arith.mulf %351, %349 : vector<10x10xf32>
    %353 = arith.addf %340, %352 : vector<10x10xf32>
    %c101 = arith.constant 101 : index
    %354 = memref.load %arg3[%c101] : memref<225xf32, #tpu.memory_space<smem>>
    %355 = vector.broadcast %354 : f32 to vector<10x10xf32>
    %356 = arith.mulf %355, %349 : vector<10x10xf32>
    %357 = arith.addf %344, %356 : vector<10x10xf32>
    %c176 = arith.constant 176 : index
    %358 = memref.load %arg3[%c176] : memref<225xf32, #tpu.memory_space<smem>>
    %359 = vector.broadcast %358 : f32 to vector<10x10xf32>
    %360 = arith.mulf %359, %349 : vector<10x10xf32>
    %361 = arith.addf %348, %360 : vector<10x10xf32>
    %c14_67 = arith.constant 14 : index
    %c2_68 = arith.constant 2 : index
    %362 = vector.load %arg6[%c14_67, %c2_68] : memref<42x14xf32, #tpu.memory_space<vmem>>, vector<10x10xf32>
    %c27 = arith.constant 27 : index
    %363 = memref.load %arg3[%c27] : memref<225xf32, #tpu.memory_space<smem>>
    %364 = vector.broadcast %363 : f32 to vector<10x10xf32>
    %365 = arith.mulf %364, %362 : vector<10x10xf32>
    %366 = arith.addf %353, %365 : vector<10x10xf32>
    %c102 = arith.constant 102 : index
    %367 = memref.load %arg3[%c102] : memref<225xf32, #tpu.memory_space<smem>>
    %368 = vector.broadcast %367 : f32 to vector<10x10xf32>
    %369 = arith.mulf %368, %362 : vector<10x10xf32>
    %370 = arith.addf %357, %369 : vector<10x10xf32>
    %c177 = arith.constant 177 : index
    %371 = memref.load %arg3[%c177] : memref<225xf32, #tpu.memory_space<smem>>
    %372 = vector.broadcast %371 : f32 to vector<10x10xf32>
    %373 = arith.mulf %372, %362 : vector<10x10xf32>
    %374 = arith.addf %361, %373 : vector<10x10xf32>
    %c14_69 = arith.constant 14 : index
    %c3_70 = arith.constant 3 : index
    %375 = vector.load %arg6[%c14_69, %c3_70] : memref<42x14xf32, #tpu.memory_space<vmem>>, vector<10x10xf32>
    %c28 = arith.constant 28 : index
    %376 = memref.load %arg3[%c28] : memref<225xf32, #tpu.memory_space<smem>>
    %377 = vector.broadcast %376 : f32 to vector<10x10xf32>
    %378 = arith.mulf %377, %375 : vector<10x10xf32>
    %379 = arith.addf %366, %378 : vector<10x10xf32>
    %c103 = arith.constant 103 : index
    %380 = memref.load %arg3[%c103] : memref<225xf32, #tpu.memory_space<smem>>
    %381 = vector.broadcast %380 : f32 to vector<10x10xf32>
    %382 = arith.mulf %381, %375 : vector<10x10xf32>
    %383 = arith.addf %370, %382 : vector<10x10xf32>
    %c178 = arith.constant 178 : index
    %384 = memref.load %arg3[%c178] : memref<225xf32, #tpu.memory_space<smem>>
    %385 = vector.broadcast %384 : f32 to vector<10x10xf32>
    %386 = arith.mulf %385, %375 : vector<10x10xf32>
    %387 = arith.addf %374, %386 : vector<10x10xf32>
    %c14_71 = arith.constant 14 : index
    %c4_72 = arith.constant 4 : index
    %388 = vector.load %arg6[%c14_71, %c4_72] : memref<42x14xf32, #tpu.memory_space<vmem>>, vector<10x10xf32>
    %c29 = arith.constant 29 : index
    %389 = memref.load %arg3[%c29] : memref<225xf32, #tpu.memory_space<smem>>
    %390 = vector.broadcast %389 : f32 to vector<10x10xf32>
    %391 = arith.mulf %390, %388 : vector<10x10xf32>
    %392 = arith.addf %379, %391 : vector<10x10xf32>
    %c104 = arith.constant 104 : index
    %393 = memref.load %arg3[%c104] : memref<225xf32, #tpu.memory_space<smem>>
    %394 = vector.broadcast %393 : f32 to vector<10x10xf32>
    %395 = arith.mulf %394, %388 : vector<10x10xf32>
    %396 = arith.addf %383, %395 : vector<10x10xf32>
    %c179 = arith.constant 179 : index
    %397 = memref.load %arg3[%c179] : memref<225xf32, #tpu.memory_space<smem>>
    %398 = vector.broadcast %397 : f32 to vector<10x10xf32>
    %399 = arith.mulf %398, %388 : vector<10x10xf32>
    %400 = arith.addf %387, %399 : vector<10x10xf32>
    %c15_73 = arith.constant 15 : index
    %c0_74 = arith.constant 0 : index
    %401 = vector.load %arg6[%c15_73, %c0_74] : memref<42x14xf32, #tpu.memory_space<vmem>>, vector<10x10xf32>
    %c30 = arith.constant 30 : index
    %402 = memref.load %arg3[%c30] : memref<225xf32, #tpu.memory_space<smem>>
    %403 = vector.broadcast %402 : f32 to vector<10x10xf32>
    %404 = arith.mulf %403, %401 : vector<10x10xf32>
    %405 = arith.addf %392, %404 : vector<10x10xf32>
    %c105 = arith.constant 105 : index
    %406 = memref.load %arg3[%c105] : memref<225xf32, #tpu.memory_space<smem>>
    %407 = vector.broadcast %406 : f32 to vector<10x10xf32>
    %408 = arith.mulf %407, %401 : vector<10x10xf32>
    %409 = arith.addf %396, %408 : vector<10x10xf32>
    %c180 = arith.constant 180 : index
    %410 = memref.load %arg3[%c180] : memref<225xf32, #tpu.memory_space<smem>>
    %411 = vector.broadcast %410 : f32 to vector<10x10xf32>
    %412 = arith.mulf %411, %401 : vector<10x10xf32>
    %413 = arith.addf %400, %412 : vector<10x10xf32>
    %c15_75 = arith.constant 15 : index
    %c1_76 = arith.constant 1 : index
    %414 = vector.load %arg6[%c15_75, %c1_76] : memref<42x14xf32, #tpu.memory_space<vmem>>, vector<10x10xf32>
    %c31 = arith.constant 31 : index
    %415 = memref.load %arg3[%c31] : memref<225xf32, #tpu.memory_space<smem>>
    %416 = vector.broadcast %415 : f32 to vector<10x10xf32>
    %417 = arith.mulf %416, %414 : vector<10x10xf32>
    %418 = arith.addf %405, %417 : vector<10x10xf32>
    %c106 = arith.constant 106 : index
    %419 = memref.load %arg3[%c106] : memref<225xf32, #tpu.memory_space<smem>>
    %420 = vector.broadcast %419 : f32 to vector<10x10xf32>
    %421 = arith.mulf %420, %414 : vector<10x10xf32>
    %422 = arith.addf %409, %421 : vector<10x10xf32>
    %c181 = arith.constant 181 : index
    %423 = memref.load %arg3[%c181] : memref<225xf32, #tpu.memory_space<smem>>
    %424 = vector.broadcast %423 : f32 to vector<10x10xf32>
    %425 = arith.mulf %424, %414 : vector<10x10xf32>
    %426 = arith.addf %413, %425 : vector<10x10xf32>
    %c15_77 = arith.constant 15 : index
    %c2_78 = arith.constant 2 : index
    %427 = vector.load %arg6[%c15_77, %c2_78] : memref<42x14xf32, #tpu.memory_space<vmem>>, vector<10x10xf32>
    %c32 = arith.constant 32 : index
    %428 = memref.load %arg3[%c32] : memref<225xf32, #tpu.memory_space<smem>>
    %429 = vector.broadcast %428 : f32 to vector<10x10xf32>
    %430 = arith.mulf %429, %427 : vector<10x10xf32>
    %431 = arith.addf %418, %430 : vector<10x10xf32>
    %c107 = arith.constant 107 : index
    %432 = memref.load %arg3[%c107] : memref<225xf32, #tpu.memory_space<smem>>
    %433 = vector.broadcast %432 : f32 to vector<10x10xf32>
    %434 = arith.mulf %433, %427 : vector<10x10xf32>
    %435 = arith.addf %422, %434 : vector<10x10xf32>
    %c182 = arith.constant 182 : index
    %436 = memref.load %arg3[%c182] : memref<225xf32, #tpu.memory_space<smem>>
    %437 = vector.broadcast %436 : f32 to vector<10x10xf32>
    %438 = arith.mulf %437, %427 : vector<10x10xf32>
    %439 = arith.addf %426, %438 : vector<10x10xf32>
    %c15_79 = arith.constant 15 : index
    %c3_80 = arith.constant 3 : index
    %440 = vector.load %arg6[%c15_79, %c3_80] : memref<42x14xf32, #tpu.memory_space<vmem>>, vector<10x10xf32>
    %c33 = arith.constant 33 : index
    %441 = memref.load %arg3[%c33] : memref<225xf32, #tpu.memory_space<smem>>
    %442 = vector.broadcast %441 : f32 to vector<10x10xf32>
    %443 = arith.mulf %442, %440 : vector<10x10xf32>
    %444 = arith.addf %431, %443 : vector<10x10xf32>
    %c108 = arith.constant 108 : index
    %445 = memref.load %arg3[%c108] : memref<225xf32, #tpu.memory_space<smem>>
    %446 = vector.broadcast %445 : f32 to vector<10x10xf32>
    %447 = arith.mulf %446, %440 : vector<10x10xf32>
    %448 = arith.addf %435, %447 : vector<10x10xf32>
    %c183 = arith.constant 183 : index
    %449 = memref.load %arg3[%c183] : memref<225xf32, #tpu.memory_space<smem>>
    %450 = vector.broadcast %449 : f32 to vector<10x10xf32>
    %451 = arith.mulf %450, %440 : vector<10x10xf32>
    %452 = arith.addf %439, %451 : vector<10x10xf32>
    %c15_81 = arith.constant 15 : index
    %c4_82 = arith.constant 4 : index
    %453 = vector.load %arg6[%c15_81, %c4_82] : memref<42x14xf32, #tpu.memory_space<vmem>>, vector<10x10xf32>
    %c34 = arith.constant 34 : index
    %454 = memref.load %arg3[%c34] : memref<225xf32, #tpu.memory_space<smem>>
    %455 = vector.broadcast %454 : f32 to vector<10x10xf32>
    %456 = arith.mulf %455, %453 : vector<10x10xf32>
    %457 = arith.addf %444, %456 : vector<10x10xf32>
    %c109 = arith.constant 109 : index
    %458 = memref.load %arg3[%c109] : memref<225xf32, #tpu.memory_space<smem>>
    %459 = vector.broadcast %458 : f32 to vector<10x10xf32>
    %460 = arith.mulf %459, %453 : vector<10x10xf32>
    %461 = arith.addf %448, %460 : vector<10x10xf32>
    %c184 = arith.constant 184 : index
    %462 = memref.load %arg3[%c184] : memref<225xf32, #tpu.memory_space<smem>>
    %463 = vector.broadcast %462 : f32 to vector<10x10xf32>
    %464 = arith.mulf %463, %453 : vector<10x10xf32>
    %465 = arith.addf %452, %464 : vector<10x10xf32>
    %c16_83 = arith.constant 16 : index
    %c0_84 = arith.constant 0 : index
    %466 = vector.load %arg6[%c16_83, %c0_84] : memref<42x14xf32, #tpu.memory_space<vmem>>, vector<10x10xf32>
    %c35 = arith.constant 35 : index
    %467 = memref.load %arg3[%c35] : memref<225xf32, #tpu.memory_space<smem>>
    %468 = vector.broadcast %467 : f32 to vector<10x10xf32>
    %469 = arith.mulf %468, %466 : vector<10x10xf32>
    %470 = arith.addf %457, %469 : vector<10x10xf32>
    %c110 = arith.constant 110 : index
    %471 = memref.load %arg3[%c110] : memref<225xf32, #tpu.memory_space<smem>>
    %472 = vector.broadcast %471 : f32 to vector<10x10xf32>
    %473 = arith.mulf %472, %466 : vector<10x10xf32>
    %474 = arith.addf %461, %473 : vector<10x10xf32>
    %c185 = arith.constant 185 : index
    %475 = memref.load %arg3[%c185] : memref<225xf32, #tpu.memory_space<smem>>
    %476 = vector.broadcast %475 : f32 to vector<10x10xf32>
    %477 = arith.mulf %476, %466 : vector<10x10xf32>
    %478 = arith.addf %465, %477 : vector<10x10xf32>
    %c16_85 = arith.constant 16 : index
    %c1_86 = arith.constant 1 : index
    %479 = vector.load %arg6[%c16_85, %c1_86] : memref<42x14xf32, #tpu.memory_space<vmem>>, vector<10x10xf32>
    %c36 = arith.constant 36 : index
    %480 = memref.load %arg3[%c36] : memref<225xf32, #tpu.memory_space<smem>>
    %481 = vector.broadcast %480 : f32 to vector<10x10xf32>
    %482 = arith.mulf %481, %479 : vector<10x10xf32>
    %483 = arith.addf %470, %482 : vector<10x10xf32>
    %c111 = arith.constant 111 : index
    %484 = memref.load %arg3[%c111] : memref<225xf32, #tpu.memory_space<smem>>
    %485 = vector.broadcast %484 : f32 to vector<10x10xf32>
    %486 = arith.mulf %485, %479 : vector<10x10xf32>
    %487 = arith.addf %474, %486 : vector<10x10xf32>
    %c186 = arith.constant 186 : index
    %488 = memref.load %arg3[%c186] : memref<225xf32, #tpu.memory_space<smem>>
    %489 = vector.broadcast %488 : f32 to vector<10x10xf32>
    %490 = arith.mulf %489, %479 : vector<10x10xf32>
    %491 = arith.addf %478, %490 : vector<10x10xf32>
    %c16_87 = arith.constant 16 : index
    %c2_88 = arith.constant 2 : index
    %492 = vector.load %arg6[%c16_87, %c2_88] : memref<42x14xf32, #tpu.memory_space<vmem>>, vector<10x10xf32>
    %c37 = arith.constant 37 : index
    %493 = memref.load %arg3[%c37] : memref<225xf32, #tpu.memory_space<smem>>
    %494 = vector.broadcast %493 : f32 to vector<10x10xf32>
    %495 = arith.mulf %494, %492 : vector<10x10xf32>
    %496 = arith.addf %483, %495 : vector<10x10xf32>
    %c112 = arith.constant 112 : index
    %497 = memref.load %arg3[%c112] : memref<225xf32, #tpu.memory_space<smem>>
    %498 = vector.broadcast %497 : f32 to vector<10x10xf32>
    %499 = arith.mulf %498, %492 : vector<10x10xf32>
    %500 = arith.addf %487, %499 : vector<10x10xf32>
    %c187 = arith.constant 187 : index
    %501 = memref.load %arg3[%c187] : memref<225xf32, #tpu.memory_space<smem>>
    %502 = vector.broadcast %501 : f32 to vector<10x10xf32>
    %503 = arith.mulf %502, %492 : vector<10x10xf32>
    %504 = arith.addf %491, %503 : vector<10x10xf32>
    %c16_89 = arith.constant 16 : index
    %c3_90 = arith.constant 3 : index
    %505 = vector.load %arg6[%c16_89, %c3_90] : memref<42x14xf32, #tpu.memory_space<vmem>>, vector<10x10xf32>
    %c38 = arith.constant 38 : index
    %506 = memref.load %arg3[%c38] : memref<225xf32, #tpu.memory_space<smem>>
    %507 = vector.broadcast %506 : f32 to vector<10x10xf32>
    %508 = arith.mulf %507, %505 : vector<10x10xf32>
    %509 = arith.addf %496, %508 : vector<10x10xf32>
    %c113 = arith.constant 113 : index
    %510 = memref.load %arg3[%c113] : memref<225xf32, #tpu.memory_space<smem>>
    %511 = vector.broadcast %510 : f32 to vector<10x10xf32>
    %512 = arith.mulf %511, %505 : vector<10x10xf32>
    %513 = arith.addf %500, %512 : vector<10x10xf32>
    %c188 = arith.constant 188 : index
    %514 = memref.load %arg3[%c188] : memref<225xf32, #tpu.memory_space<smem>>
    %515 = vector.broadcast %514 : f32 to vector<10x10xf32>
    %516 = arith.mulf %515, %505 : vector<10x10xf32>
    %517 = arith.addf %504, %516 : vector<10x10xf32>
    %c16_91 = arith.constant 16 : index
    %c4_92 = arith.constant 4 : index
    %518 = vector.load %arg6[%c16_91, %c4_92] : memref<42x14xf32, #tpu.memory_space<vmem>>, vector<10x10xf32>
    %c39 = arith.constant 39 : index
    %519 = memref.load %arg3[%c39] : memref<225xf32, #tpu.memory_space<smem>>
    %520 = vector.broadcast %519 : f32 to vector<10x10xf32>
    %521 = arith.mulf %520, %518 : vector<10x10xf32>
    %522 = arith.addf %509, %521 : vector<10x10xf32>
    %c114 = arith.constant 114 : index
    %523 = memref.load %arg3[%c114] : memref<225xf32, #tpu.memory_space<smem>>
    %524 = vector.broadcast %523 : f32 to vector<10x10xf32>
    %525 = arith.mulf %524, %518 : vector<10x10xf32>
    %526 = arith.addf %513, %525 : vector<10x10xf32>
    %c189 = arith.constant 189 : index
    %527 = memref.load %arg3[%c189] : memref<225xf32, #tpu.memory_space<smem>>
    %528 = vector.broadcast %527 : f32 to vector<10x10xf32>
    %529 = arith.mulf %528, %518 : vector<10x10xf32>
    %530 = arith.addf %517, %529 : vector<10x10xf32>
    %c17_93 = arith.constant 17 : index
    %c0_94 = arith.constant 0 : index
    %531 = vector.load %arg6[%c17_93, %c0_94] : memref<42x14xf32, #tpu.memory_space<vmem>>, vector<10x10xf32>
    %c40 = arith.constant 40 : index
    %532 = memref.load %arg3[%c40] : memref<225xf32, #tpu.memory_space<smem>>
    %533 = vector.broadcast %532 : f32 to vector<10x10xf32>
    %534 = arith.mulf %533, %531 : vector<10x10xf32>
    %535 = arith.addf %522, %534 : vector<10x10xf32>
    %c115 = arith.constant 115 : index
    %536 = memref.load %arg3[%c115] : memref<225xf32, #tpu.memory_space<smem>>
    %537 = vector.broadcast %536 : f32 to vector<10x10xf32>
    %538 = arith.mulf %537, %531 : vector<10x10xf32>
    %539 = arith.addf %526, %538 : vector<10x10xf32>
    %c190 = arith.constant 190 : index
    %540 = memref.load %arg3[%c190] : memref<225xf32, #tpu.memory_space<smem>>
    %541 = vector.broadcast %540 : f32 to vector<10x10xf32>
    %542 = arith.mulf %541, %531 : vector<10x10xf32>
    %543 = arith.addf %530, %542 : vector<10x10xf32>
    %c17_95 = arith.constant 17 : index
    %c1_96 = arith.constant 1 : index
    %544 = vector.load %arg6[%c17_95, %c1_96] : memref<42x14xf32, #tpu.memory_space<vmem>>, vector<10x10xf32>
    %c41 = arith.constant 41 : index
    %545 = memref.load %arg3[%c41] : memref<225xf32, #tpu.memory_space<smem>>
    %546 = vector.broadcast %545 : f32 to vector<10x10xf32>
    %547 = arith.mulf %546, %544 : vector<10x10xf32>
    %548 = arith.addf %535, %547 : vector<10x10xf32>
    %c116 = arith.constant 116 : index
    %549 = memref.load %arg3[%c116] : memref<225xf32, #tpu.memory_space<smem>>
    %550 = vector.broadcast %549 : f32 to vector<10x10xf32>
    %551 = arith.mulf %550, %544 : vector<10x10xf32>
    %552 = arith.addf %539, %551 : vector<10x10xf32>
    %c191 = arith.constant 191 : index
    %553 = memref.load %arg3[%c191] : memref<225xf32, #tpu.memory_space<smem>>
    %554 = vector.broadcast %553 : f32 to vector<10x10xf32>
    %555 = arith.mulf %554, %544 : vector<10x10xf32>
    %556 = arith.addf %543, %555 : vector<10x10xf32>
    %c17_97 = arith.constant 17 : index
    %c2_98 = arith.constant 2 : index
    %557 = vector.load %arg6[%c17_97, %c2_98] : memref<42x14xf32, #tpu.memory_space<vmem>>, vector<10x10xf32>
    %c42 = arith.constant 42 : index
    %558 = memref.load %arg3[%c42] : memref<225xf32, #tpu.memory_space<smem>>
    %559 = vector.broadcast %558 : f32 to vector<10x10xf32>
    %560 = arith.mulf %559, %557 : vector<10x10xf32>
    %561 = arith.addf %548, %560 : vector<10x10xf32>
    %c117 = arith.constant 117 : index
    %562 = memref.load %arg3[%c117] : memref<225xf32, #tpu.memory_space<smem>>
    %563 = vector.broadcast %562 : f32 to vector<10x10xf32>
    %564 = arith.mulf %563, %557 : vector<10x10xf32>
    %565 = arith.addf %552, %564 : vector<10x10xf32>
    %c192 = arith.constant 192 : index
    %566 = memref.load %arg3[%c192] : memref<225xf32, #tpu.memory_space<smem>>
    %567 = vector.broadcast %566 : f32 to vector<10x10xf32>
    %568 = arith.mulf %567, %557 : vector<10x10xf32>
    %569 = arith.addf %556, %568 : vector<10x10xf32>
    %c17_99 = arith.constant 17 : index
    %c3_100 = arith.constant 3 : index
    %570 = vector.load %arg6[%c17_99, %c3_100] : memref<42x14xf32, #tpu.memory_space<vmem>>, vector<10x10xf32>
    %c43 = arith.constant 43 : index
    %571 = memref.load %arg3[%c43] : memref<225xf32, #tpu.memory_space<smem>>
    %572 = vector.broadcast %571 : f32 to vector<10x10xf32>
    %573 = arith.mulf %572, %570 : vector<10x10xf32>
    %574 = arith.addf %561, %573 : vector<10x10xf32>
    %c118 = arith.constant 118 : index
    %575 = memref.load %arg3[%c118] : memref<225xf32, #tpu.memory_space<smem>>
    %576 = vector.broadcast %575 : f32 to vector<10x10xf32>
    %577 = arith.mulf %576, %570 : vector<10x10xf32>
    %578 = arith.addf %565, %577 : vector<10x10xf32>
    %c193 = arith.constant 193 : index
    %579 = memref.load %arg3[%c193] : memref<225xf32, #tpu.memory_space<smem>>
    %580 = vector.broadcast %579 : f32 to vector<10x10xf32>
    %581 = arith.mulf %580, %570 : vector<10x10xf32>
    %582 = arith.addf %569, %581 : vector<10x10xf32>
    %c17_101 = arith.constant 17 : index
    %c4_102 = arith.constant 4 : index
    %583 = vector.load %arg6[%c17_101, %c4_102] : memref<42x14xf32, #tpu.memory_space<vmem>>, vector<10x10xf32>
    %c44 = arith.constant 44 : index
    %584 = memref.load %arg3[%c44] : memref<225xf32, #tpu.memory_space<smem>>
    %585 = vector.broadcast %584 : f32 to vector<10x10xf32>
    %586 = arith.mulf %585, %583 : vector<10x10xf32>
    %587 = arith.addf %574, %586 : vector<10x10xf32>
    %c119 = arith.constant 119 : index
    %588 = memref.load %arg3[%c119] : memref<225xf32, #tpu.memory_space<smem>>
    %589 = vector.broadcast %588 : f32 to vector<10x10xf32>
    %590 = arith.mulf %589, %583 : vector<10x10xf32>
    %591 = arith.addf %578, %590 : vector<10x10xf32>
    %c194 = arith.constant 194 : index
    %592 = memref.load %arg3[%c194] : memref<225xf32, #tpu.memory_space<smem>>
    %593 = vector.broadcast %592 : f32 to vector<10x10xf32>
    %594 = arith.mulf %593, %583 : vector<10x10xf32>
    %595 = arith.addf %582, %594 : vector<10x10xf32>
    %c18_103 = arith.constant 18 : index
    %c0_104 = arith.constant 0 : index
    %596 = vector.load %arg6[%c18_103, %c0_104] : memref<42x14xf32, #tpu.memory_space<vmem>>, vector<10x10xf32>
    %c45 = arith.constant 45 : index
    %597 = memref.load %arg3[%c45] : memref<225xf32, #tpu.memory_space<smem>>
    %598 = vector.broadcast %597 : f32 to vector<10x10xf32>
    %599 = arith.mulf %598, %596 : vector<10x10xf32>
    %600 = arith.addf %587, %599 : vector<10x10xf32>
    %c120 = arith.constant 120 : index
    %601 = memref.load %arg3[%c120] : memref<225xf32, #tpu.memory_space<smem>>
    %602 = vector.broadcast %601 : f32 to vector<10x10xf32>
    %603 = arith.mulf %602, %596 : vector<10x10xf32>
    %604 = arith.addf %591, %603 : vector<10x10xf32>
    %c195 = arith.constant 195 : index
    %605 = memref.load %arg3[%c195] : memref<225xf32, #tpu.memory_space<smem>>
    %606 = vector.broadcast %605 : f32 to vector<10x10xf32>
    %607 = arith.mulf %606, %596 : vector<10x10xf32>
    %608 = arith.addf %595, %607 : vector<10x10xf32>
    %c18_105 = arith.constant 18 : index
    %c1_106 = arith.constant 1 : index
    %609 = vector.load %arg6[%c18_105, %c1_106] : memref<42x14xf32, #tpu.memory_space<vmem>>, vector<10x10xf32>
    %c46 = arith.constant 46 : index
    %610 = memref.load %arg3[%c46] : memref<225xf32, #tpu.memory_space<smem>>
    %611 = vector.broadcast %610 : f32 to vector<10x10xf32>
    %612 = arith.mulf %611, %609 : vector<10x10xf32>
    %613 = arith.addf %600, %612 : vector<10x10xf32>
    %c121 = arith.constant 121 : index
    %614 = memref.load %arg3[%c121] : memref<225xf32, #tpu.memory_space<smem>>
    %615 = vector.broadcast %614 : f32 to vector<10x10xf32>
    %616 = arith.mulf %615, %609 : vector<10x10xf32>
    %617 = arith.addf %604, %616 : vector<10x10xf32>
    %c196 = arith.constant 196 : index
    %618 = memref.load %arg3[%c196] : memref<225xf32, #tpu.memory_space<smem>>
    %619 = vector.broadcast %618 : f32 to vector<10x10xf32>
    %620 = arith.mulf %619, %609 : vector<10x10xf32>
    %621 = arith.addf %608, %620 : vector<10x10xf32>
    %c18_107 = arith.constant 18 : index
    %c2_108 = arith.constant 2 : index
    %622 = vector.load %arg6[%c18_107, %c2_108] : memref<42x14xf32, #tpu.memory_space<vmem>>, vector<10x10xf32>
    %c47 = arith.constant 47 : index
    %623 = memref.load %arg3[%c47] : memref<225xf32, #tpu.memory_space<smem>>
    %624 = vector.broadcast %623 : f32 to vector<10x10xf32>
    %625 = arith.mulf %624, %622 : vector<10x10xf32>
    %626 = arith.addf %613, %625 : vector<10x10xf32>
    %c122 = arith.constant 122 : index
    %627 = memref.load %arg3[%c122] : memref<225xf32, #tpu.memory_space<smem>>
    %628 = vector.broadcast %627 : f32 to vector<10x10xf32>
    %629 = arith.mulf %628, %622 : vector<10x10xf32>
    %630 = arith.addf %617, %629 : vector<10x10xf32>
    %c197 = arith.constant 197 : index
    %631 = memref.load %arg3[%c197] : memref<225xf32, #tpu.memory_space<smem>>
    %632 = vector.broadcast %631 : f32 to vector<10x10xf32>
    %633 = arith.mulf %632, %622 : vector<10x10xf32>
    %634 = arith.addf %621, %633 : vector<10x10xf32>
    %c18_109 = arith.constant 18 : index
    %c3_110 = arith.constant 3 : index
    %635 = vector.load %arg6[%c18_109, %c3_110] : memref<42x14xf32, #tpu.memory_space<vmem>>, vector<10x10xf32>
    %c48 = arith.constant 48 : index
    %636 = memref.load %arg3[%c48] : memref<225xf32, #tpu.memory_space<smem>>
    %637 = vector.broadcast %636 : f32 to vector<10x10xf32>
    %638 = arith.mulf %637, %635 : vector<10x10xf32>
    %639 = arith.addf %626, %638 : vector<10x10xf32>
    %c123 = arith.constant 123 : index
    %640 = memref.load %arg3[%c123] : memref<225xf32, #tpu.memory_space<smem>>
    %641 = vector.broadcast %640 : f32 to vector<10x10xf32>
    %642 = arith.mulf %641, %635 : vector<10x10xf32>
    %643 = arith.addf %630, %642 : vector<10x10xf32>
    %c198 = arith.constant 198 : index
    %644 = memref.load %arg3[%c198] : memref<225xf32, #tpu.memory_space<smem>>
    %645 = vector.broadcast %644 : f32 to vector<10x10xf32>
    %646 = arith.mulf %645, %635 : vector<10x10xf32>
    %647 = arith.addf %634, %646 : vector<10x10xf32>
    %c18_111 = arith.constant 18 : index
    %c4_112 = arith.constant 4 : index
    %648 = vector.load %arg6[%c18_111, %c4_112] : memref<42x14xf32, #tpu.memory_space<vmem>>, vector<10x10xf32>
    %c49 = arith.constant 49 : index
    %649 = memref.load %arg3[%c49] : memref<225xf32, #tpu.memory_space<smem>>
    %650 = vector.broadcast %649 : f32 to vector<10x10xf32>
    %651 = arith.mulf %650, %648 : vector<10x10xf32>
    %652 = arith.addf %639, %651 : vector<10x10xf32>
    %c124 = arith.constant 124 : index
    %653 = memref.load %arg3[%c124] : memref<225xf32, #tpu.memory_space<smem>>
    %654 = vector.broadcast %653 : f32 to vector<10x10xf32>
    %655 = arith.mulf %654, %648 : vector<10x10xf32>
    %656 = arith.addf %643, %655 : vector<10x10xf32>
    %c199 = arith.constant 199 : index
    %657 = memref.load %arg3[%c199] : memref<225xf32, #tpu.memory_space<smem>>
    %658 = vector.broadcast %657 : f32 to vector<10x10xf32>
    %659 = arith.mulf %658, %648 : vector<10x10xf32>
    %660 = arith.addf %647, %659 : vector<10x10xf32>
    %c28_113 = arith.constant 28 : index
    %c0_114 = arith.constant 0 : index
    %661 = vector.load %arg6[%c28_113, %c0_114] : memref<42x14xf32, #tpu.memory_space<vmem>>, vector<10x10xf32>
    %c50 = arith.constant 50 : index
    %662 = memref.load %arg3[%c50] : memref<225xf32, #tpu.memory_space<smem>>
    %663 = vector.broadcast %662 : f32 to vector<10x10xf32>
    %664 = arith.mulf %663, %661 : vector<10x10xf32>
    %665 = arith.addf %652, %664 : vector<10x10xf32>
    %c125 = arith.constant 125 : index
    %666 = memref.load %arg3[%c125] : memref<225xf32, #tpu.memory_space<smem>>
    %667 = vector.broadcast %666 : f32 to vector<10x10xf32>
    %668 = arith.mulf %667, %661 : vector<10x10xf32>
    %669 = arith.addf %656, %668 : vector<10x10xf32>
    %c200 = arith.constant 200 : index
    %670 = memref.load %arg3[%c200] : memref<225xf32, #tpu.memory_space<smem>>
    %671 = vector.broadcast %670 : f32 to vector<10x10xf32>
    %672 = arith.mulf %671, %661 : vector<10x10xf32>
    %673 = arith.addf %660, %672 : vector<10x10xf32>
    %c28_115 = arith.constant 28 : index
    %c1_116 = arith.constant 1 : index
    %674 = vector.load %arg6[%c28_115, %c1_116] : memref<42x14xf32, #tpu.memory_space<vmem>>, vector<10x10xf32>
    %c51 = arith.constant 51 : index
    %675 = memref.load %arg3[%c51] : memref<225xf32, #tpu.memory_space<smem>>
    %676 = vector.broadcast %675 : f32 to vector<10x10xf32>
    %677 = arith.mulf %676, %674 : vector<10x10xf32>
    %678 = arith.addf %665, %677 : vector<10x10xf32>
    %c126 = arith.constant 126 : index
    %679 = memref.load %arg3[%c126] : memref<225xf32, #tpu.memory_space<smem>>
    %680 = vector.broadcast %679 : f32 to vector<10x10xf32>
    %681 = arith.mulf %680, %674 : vector<10x10xf32>
    %682 = arith.addf %669, %681 : vector<10x10xf32>
    %c201 = arith.constant 201 : index
    %683 = memref.load %arg3[%c201] : memref<225xf32, #tpu.memory_space<smem>>
    %684 = vector.broadcast %683 : f32 to vector<10x10xf32>
    %685 = arith.mulf %684, %674 : vector<10x10xf32>
    %686 = arith.addf %673, %685 : vector<10x10xf32>
    %c28_117 = arith.constant 28 : index
    %c2_118 = arith.constant 2 : index
    %687 = vector.load %arg6[%c28_117, %c2_118] : memref<42x14xf32, #tpu.memory_space<vmem>>, vector<10x10xf32>
    %c52 = arith.constant 52 : index
    %688 = memref.load %arg3[%c52] : memref<225xf32, #tpu.memory_space<smem>>
    %689 = vector.broadcast %688 : f32 to vector<10x10xf32>
    %690 = arith.mulf %689, %687 : vector<10x10xf32>
    %691 = arith.addf %678, %690 : vector<10x10xf32>
    %c127 = arith.constant 127 : index
    %692 = memref.load %arg3[%c127] : memref<225xf32, #tpu.memory_space<smem>>
    %693 = vector.broadcast %692 : f32 to vector<10x10xf32>
    %694 = arith.mulf %693, %687 : vector<10x10xf32>
    %695 = arith.addf %682, %694 : vector<10x10xf32>
    %c202 = arith.constant 202 : index
    %696 = memref.load %arg3[%c202] : memref<225xf32, #tpu.memory_space<smem>>
    %697 = vector.broadcast %696 : f32 to vector<10x10xf32>
    %698 = arith.mulf %697, %687 : vector<10x10xf32>
    %699 = arith.addf %686, %698 : vector<10x10xf32>
    %c28_119 = arith.constant 28 : index
    %c3_120 = arith.constant 3 : index
    %700 = vector.load %arg6[%c28_119, %c3_120] : memref<42x14xf32, #tpu.memory_space<vmem>>, vector<10x10xf32>
    %c53 = arith.constant 53 : index
    %701 = memref.load %arg3[%c53] : memref<225xf32, #tpu.memory_space<smem>>
    %702 = vector.broadcast %701 : f32 to vector<10x10xf32>
    %703 = arith.mulf %702, %700 : vector<10x10xf32>
    %704 = arith.addf %691, %703 : vector<10x10xf32>
    %c128 = arith.constant 128 : index
    %705 = memref.load %arg3[%c128] : memref<225xf32, #tpu.memory_space<smem>>
    %706 = vector.broadcast %705 : f32 to vector<10x10xf32>
    %707 = arith.mulf %706, %700 : vector<10x10xf32>
    %708 = arith.addf %695, %707 : vector<10x10xf32>
    %c203 = arith.constant 203 : index
    %709 = memref.load %arg3[%c203] : memref<225xf32, #tpu.memory_space<smem>>
    %710 = vector.broadcast %709 : f32 to vector<10x10xf32>
    %711 = arith.mulf %710, %700 : vector<10x10xf32>
    %712 = arith.addf %699, %711 : vector<10x10xf32>
    %c28_121 = arith.constant 28 : index
    %c4_122 = arith.constant 4 : index
    %713 = vector.load %arg6[%c28_121, %c4_122] : memref<42x14xf32, #tpu.memory_space<vmem>>, vector<10x10xf32>
    %c54 = arith.constant 54 : index
    %714 = memref.load %arg3[%c54] : memref<225xf32, #tpu.memory_space<smem>>
    %715 = vector.broadcast %714 : f32 to vector<10x10xf32>
    %716 = arith.mulf %715, %713 : vector<10x10xf32>
    %717 = arith.addf %704, %716 : vector<10x10xf32>
    %c129 = arith.constant 129 : index
    %718 = memref.load %arg3[%c129] : memref<225xf32, #tpu.memory_space<smem>>
    %719 = vector.broadcast %718 : f32 to vector<10x10xf32>
    %720 = arith.mulf %719, %713 : vector<10x10xf32>
    %721 = arith.addf %708, %720 : vector<10x10xf32>
    %c204 = arith.constant 204 : index
    %722 = memref.load %arg3[%c204] : memref<225xf32, #tpu.memory_space<smem>>
    %723 = vector.broadcast %722 : f32 to vector<10x10xf32>
    %724 = arith.mulf %723, %713 : vector<10x10xf32>
    %725 = arith.addf %712, %724 : vector<10x10xf32>
    %c29_123 = arith.constant 29 : index
    %c0_124 = arith.constant 0 : index
    %726 = vector.load %arg6[%c29_123, %c0_124] : memref<42x14xf32, #tpu.memory_space<vmem>>, vector<10x10xf32>
    %c55 = arith.constant 55 : index
    %727 = memref.load %arg3[%c55] : memref<225xf32, #tpu.memory_space<smem>>
    %728 = vector.broadcast %727 : f32 to vector<10x10xf32>
    %729 = arith.mulf %728, %726 : vector<10x10xf32>
    %730 = arith.addf %717, %729 : vector<10x10xf32>
    %c130 = arith.constant 130 : index
    %731 = memref.load %arg3[%c130] : memref<225xf32, #tpu.memory_space<smem>>
    %732 = vector.broadcast %731 : f32 to vector<10x10xf32>
    %733 = arith.mulf %732, %726 : vector<10x10xf32>
    %734 = arith.addf %721, %733 : vector<10x10xf32>
    %c205 = arith.constant 205 : index
    %735 = memref.load %arg3[%c205] : memref<225xf32, #tpu.memory_space<smem>>
    %736 = vector.broadcast %735 : f32 to vector<10x10xf32>
    %737 = arith.mulf %736, %726 : vector<10x10xf32>
    %738 = arith.addf %725, %737 : vector<10x10xf32>
    %c29_125 = arith.constant 29 : index
    %c1_126 = arith.constant 1 : index
    %739 = vector.load %arg6[%c29_125, %c1_126] : memref<42x14xf32, #tpu.memory_space<vmem>>, vector<10x10xf32>
    %c56 = arith.constant 56 : index
    %740 = memref.load %arg3[%c56] : memref<225xf32, #tpu.memory_space<smem>>
    %741 = vector.broadcast %740 : f32 to vector<10x10xf32>
    %742 = arith.mulf %741, %739 : vector<10x10xf32>
    %743 = arith.addf %730, %742 : vector<10x10xf32>
    %c131 = arith.constant 131 : index
    %744 = memref.load %arg3[%c131] : memref<225xf32, #tpu.memory_space<smem>>
    %745 = vector.broadcast %744 : f32 to vector<10x10xf32>
    %746 = arith.mulf %745, %739 : vector<10x10xf32>
    %747 = arith.addf %734, %746 : vector<10x10xf32>
    %c206 = arith.constant 206 : index
    %748 = memref.load %arg3[%c206] : memref<225xf32, #tpu.memory_space<smem>>
    %749 = vector.broadcast %748 : f32 to vector<10x10xf32>
    %750 = arith.mulf %749, %739 : vector<10x10xf32>
    %751 = arith.addf %738, %750 : vector<10x10xf32>
    %c29_127 = arith.constant 29 : index
    %c2_128 = arith.constant 2 : index
    %752 = vector.load %arg6[%c29_127, %c2_128] : memref<42x14xf32, #tpu.memory_space<vmem>>, vector<10x10xf32>
    %c57 = arith.constant 57 : index
    %753 = memref.load %arg3[%c57] : memref<225xf32, #tpu.memory_space<smem>>
    %754 = vector.broadcast %753 : f32 to vector<10x10xf32>
    %755 = arith.mulf %754, %752 : vector<10x10xf32>
    %756 = arith.addf %743, %755 : vector<10x10xf32>
    %c132 = arith.constant 132 : index
    %757 = memref.load %arg3[%c132] : memref<225xf32, #tpu.memory_space<smem>>
    %758 = vector.broadcast %757 : f32 to vector<10x10xf32>
    %759 = arith.mulf %758, %752 : vector<10x10xf32>
    %760 = arith.addf %747, %759 : vector<10x10xf32>
    %c207 = arith.constant 207 : index
    %761 = memref.load %arg3[%c207] : memref<225xf32, #tpu.memory_space<smem>>
    %762 = vector.broadcast %761 : f32 to vector<10x10xf32>
    %763 = arith.mulf %762, %752 : vector<10x10xf32>
    %764 = arith.addf %751, %763 : vector<10x10xf32>
    %c29_129 = arith.constant 29 : index
    %c3_130 = arith.constant 3 : index
    %765 = vector.load %arg6[%c29_129, %c3_130] : memref<42x14xf32, #tpu.memory_space<vmem>>, vector<10x10xf32>
    %c58 = arith.constant 58 : index
    %766 = memref.load %arg3[%c58] : memref<225xf32, #tpu.memory_space<smem>>
    %767 = vector.broadcast %766 : f32 to vector<10x10xf32>
    %768 = arith.mulf %767, %765 : vector<10x10xf32>
    %769 = arith.addf %756, %768 : vector<10x10xf32>
    %c133 = arith.constant 133 : index
    %770 = memref.load %arg3[%c133] : memref<225xf32, #tpu.memory_space<smem>>
    %771 = vector.broadcast %770 : f32 to vector<10x10xf32>
    %772 = arith.mulf %771, %765 : vector<10x10xf32>
    %773 = arith.addf %760, %772 : vector<10x10xf32>
    %c208 = arith.constant 208 : index
    %774 = memref.load %arg3[%c208] : memref<225xf32, #tpu.memory_space<smem>>
    %775 = vector.broadcast %774 : f32 to vector<10x10xf32>
    %776 = arith.mulf %775, %765 : vector<10x10xf32>
    %777 = arith.addf %764, %776 : vector<10x10xf32>
    %c29_131 = arith.constant 29 : index
    %c4_132 = arith.constant 4 : index
    %778 = vector.load %arg6[%c29_131, %c4_132] : memref<42x14xf32, #tpu.memory_space<vmem>>, vector<10x10xf32>
    %c59 = arith.constant 59 : index
    %779 = memref.load %arg3[%c59] : memref<225xf32, #tpu.memory_space<smem>>
    %780 = vector.broadcast %779 : f32 to vector<10x10xf32>
    %781 = arith.mulf %780, %778 : vector<10x10xf32>
    %782 = arith.addf %769, %781 : vector<10x10xf32>
    %c134 = arith.constant 134 : index
    %783 = memref.load %arg3[%c134] : memref<225xf32, #tpu.memory_space<smem>>
    %784 = vector.broadcast %783 : f32 to vector<10x10xf32>
    %785 = arith.mulf %784, %778 : vector<10x10xf32>
    %786 = arith.addf %773, %785 : vector<10x10xf32>
    %c209 = arith.constant 209 : index
    %787 = memref.load %arg3[%c209] : memref<225xf32, #tpu.memory_space<smem>>
    %788 = vector.broadcast %787 : f32 to vector<10x10xf32>
    %789 = arith.mulf %788, %778 : vector<10x10xf32>
    %790 = arith.addf %777, %789 : vector<10x10xf32>
    %c30_133 = arith.constant 30 : index
    %c0_134 = arith.constant 0 : index
    %791 = vector.load %arg6[%c30_133, %c0_134] : memref<42x14xf32, #tpu.memory_space<vmem>>, vector<10x10xf32>
    %c60 = arith.constant 60 : index
    %792 = memref.load %arg3[%c60] : memref<225xf32, #tpu.memory_space<smem>>
    %793 = vector.broadcast %792 : f32 to vector<10x10xf32>
    %794 = arith.mulf %793, %791 : vector<10x10xf32>
    %795 = arith.addf %782, %794 : vector<10x10xf32>
    %c135 = arith.constant 135 : index
    %796 = memref.load %arg3[%c135] : memref<225xf32, #tpu.memory_space<smem>>
    %797 = vector.broadcast %796 : f32 to vector<10x10xf32>
    %798 = arith.mulf %797, %791 : vector<10x10xf32>
    %799 = arith.addf %786, %798 : vector<10x10xf32>
    %c210 = arith.constant 210 : index
    %800 = memref.load %arg3[%c210] : memref<225xf32, #tpu.memory_space<smem>>
    %801 = vector.broadcast %800 : f32 to vector<10x10xf32>
    %802 = arith.mulf %801, %791 : vector<10x10xf32>
    %803 = arith.addf %790, %802 : vector<10x10xf32>
    %c30_135 = arith.constant 30 : index
    %c1_136 = arith.constant 1 : index
    %804 = vector.load %arg6[%c30_135, %c1_136] : memref<42x14xf32, #tpu.memory_space<vmem>>, vector<10x10xf32>
    %c61 = arith.constant 61 : index
    %805 = memref.load %arg3[%c61] : memref<225xf32, #tpu.memory_space<smem>>
    %806 = vector.broadcast %805 : f32 to vector<10x10xf32>
    %807 = arith.mulf %806, %804 : vector<10x10xf32>
    %808 = arith.addf %795, %807 : vector<10x10xf32>
    %c136 = arith.constant 136 : index
    %809 = memref.load %arg3[%c136] : memref<225xf32, #tpu.memory_space<smem>>
    %810 = vector.broadcast %809 : f32 to vector<10x10xf32>
    %811 = arith.mulf %810, %804 : vector<10x10xf32>
    %812 = arith.addf %799, %811 : vector<10x10xf32>
    %c211 = arith.constant 211 : index
    %813 = memref.load %arg3[%c211] : memref<225xf32, #tpu.memory_space<smem>>
    %814 = vector.broadcast %813 : f32 to vector<10x10xf32>
    %815 = arith.mulf %814, %804 : vector<10x10xf32>
    %816 = arith.addf %803, %815 : vector<10x10xf32>
    %c30_137 = arith.constant 30 : index
    %c2_138 = arith.constant 2 : index
    %817 = vector.load %arg6[%c30_137, %c2_138] : memref<42x14xf32, #tpu.memory_space<vmem>>, vector<10x10xf32>
    %c62 = arith.constant 62 : index
    %818 = memref.load %arg3[%c62] : memref<225xf32, #tpu.memory_space<smem>>
    %819 = vector.broadcast %818 : f32 to vector<10x10xf32>
    %820 = arith.mulf %819, %817 : vector<10x10xf32>
    %821 = arith.addf %808, %820 : vector<10x10xf32>
    %c137 = arith.constant 137 : index
    %822 = memref.load %arg3[%c137] : memref<225xf32, #tpu.memory_space<smem>>
    %823 = vector.broadcast %822 : f32 to vector<10x10xf32>
    %824 = arith.mulf %823, %817 : vector<10x10xf32>
    %825 = arith.addf %812, %824 : vector<10x10xf32>
    %c212 = arith.constant 212 : index
    %826 = memref.load %arg3[%c212] : memref<225xf32, #tpu.memory_space<smem>>
    %827 = vector.broadcast %826 : f32 to vector<10x10xf32>
    %828 = arith.mulf %827, %817 : vector<10x10xf32>
    %829 = arith.addf %816, %828 : vector<10x10xf32>
    %c30_139 = arith.constant 30 : index
    %c3_140 = arith.constant 3 : index
    %830 = vector.load %arg6[%c30_139, %c3_140] : memref<42x14xf32, #tpu.memory_space<vmem>>, vector<10x10xf32>
    %c63 = arith.constant 63 : index
    %831 = memref.load %arg3[%c63] : memref<225xf32, #tpu.memory_space<smem>>
    %832 = vector.broadcast %831 : f32 to vector<10x10xf32>
    %833 = arith.mulf %832, %830 : vector<10x10xf32>
    %834 = arith.addf %821, %833 : vector<10x10xf32>
    %c138 = arith.constant 138 : index
    %835 = memref.load %arg3[%c138] : memref<225xf32, #tpu.memory_space<smem>>
    %836 = vector.broadcast %835 : f32 to vector<10x10xf32>
    %837 = arith.mulf %836, %830 : vector<10x10xf32>
    %838 = arith.addf %825, %837 : vector<10x10xf32>
    %c213 = arith.constant 213 : index
    %839 = memref.load %arg3[%c213] : memref<225xf32, #tpu.memory_space<smem>>
    %840 = vector.broadcast %839 : f32 to vector<10x10xf32>
    %841 = arith.mulf %840, %830 : vector<10x10xf32>
    %842 = arith.addf %829, %841 : vector<10x10xf32>
    %c30_141 = arith.constant 30 : index
    %c4_142 = arith.constant 4 : index
    %843 = vector.load %arg6[%c30_141, %c4_142] : memref<42x14xf32, #tpu.memory_space<vmem>>, vector<10x10xf32>
    %c64 = arith.constant 64 : index
    %844 = memref.load %arg3[%c64] : memref<225xf32, #tpu.memory_space<smem>>
    %845 = vector.broadcast %844 : f32 to vector<10x10xf32>
    %846 = arith.mulf %845, %843 : vector<10x10xf32>
    %847 = arith.addf %834, %846 : vector<10x10xf32>
    %c139 = arith.constant 139 : index
    %848 = memref.load %arg3[%c139] : memref<225xf32, #tpu.memory_space<smem>>
    %849 = vector.broadcast %848 : f32 to vector<10x10xf32>
    %850 = arith.mulf %849, %843 : vector<10x10xf32>
    %851 = arith.addf %838, %850 : vector<10x10xf32>
    %c214 = arith.constant 214 : index
    %852 = memref.load %arg3[%c214] : memref<225xf32, #tpu.memory_space<smem>>
    %853 = vector.broadcast %852 : f32 to vector<10x10xf32>
    %854 = arith.mulf %853, %843 : vector<10x10xf32>
    %855 = arith.addf %842, %854 : vector<10x10xf32>
    %c31_143 = arith.constant 31 : index
    %c0_144 = arith.constant 0 : index
    %856 = vector.load %arg6[%c31_143, %c0_144] : memref<42x14xf32, #tpu.memory_space<vmem>>, vector<10x10xf32>
    %c65 = arith.constant 65 : index
    %857 = memref.load %arg3[%c65] : memref<225xf32, #tpu.memory_space<smem>>
    %858 = vector.broadcast %857 : f32 to vector<10x10xf32>
    %859 = arith.mulf %858, %856 : vector<10x10xf32>
    %860 = arith.addf %847, %859 : vector<10x10xf32>
    %c140 = arith.constant 140 : index
    %861 = memref.load %arg3[%c140] : memref<225xf32, #tpu.memory_space<smem>>
    %862 = vector.broadcast %861 : f32 to vector<10x10xf32>
    %863 = arith.mulf %862, %856 : vector<10x10xf32>
    %864 = arith.addf %851, %863 : vector<10x10xf32>
    %c215 = arith.constant 215 : index
    %865 = memref.load %arg3[%c215] : memref<225xf32, #tpu.memory_space<smem>>
    %866 = vector.broadcast %865 : f32 to vector<10x10xf32>
    %867 = arith.mulf %866, %856 : vector<10x10xf32>
    %868 = arith.addf %855, %867 : vector<10x10xf32>
    %c31_145 = arith.constant 31 : index
    %c1_146 = arith.constant 1 : index
    %869 = vector.load %arg6[%c31_145, %c1_146] : memref<42x14xf32, #tpu.memory_space<vmem>>, vector<10x10xf32>
    %c66 = arith.constant 66 : index
    %870 = memref.load %arg3[%c66] : memref<225xf32, #tpu.memory_space<smem>>
    %871 = vector.broadcast %870 : f32 to vector<10x10xf32>
    %872 = arith.mulf %871, %869 : vector<10x10xf32>
    %873 = arith.addf %860, %872 : vector<10x10xf32>
    %c141 = arith.constant 141 : index
    %874 = memref.load %arg3[%c141] : memref<225xf32, #tpu.memory_space<smem>>
    %875 = vector.broadcast %874 : f32 to vector<10x10xf32>
    %876 = arith.mulf %875, %869 : vector<10x10xf32>
    %877 = arith.addf %864, %876 : vector<10x10xf32>
    %c216 = arith.constant 216 : index
    %878 = memref.load %arg3[%c216] : memref<225xf32, #tpu.memory_space<smem>>
    %879 = vector.broadcast %878 : f32 to vector<10x10xf32>
    %880 = arith.mulf %879, %869 : vector<10x10xf32>
    %881 = arith.addf %868, %880 : vector<10x10xf32>
    %c31_147 = arith.constant 31 : index
    %c2_148 = arith.constant 2 : index
    %882 = vector.load %arg6[%c31_147, %c2_148] : memref<42x14xf32, #tpu.memory_space<vmem>>, vector<10x10xf32>
    %c67 = arith.constant 67 : index
    %883 = memref.load %arg3[%c67] : memref<225xf32, #tpu.memory_space<smem>>
    %884 = vector.broadcast %883 : f32 to vector<10x10xf32>
    %885 = arith.mulf %884, %882 : vector<10x10xf32>
    %886 = arith.addf %873, %885 : vector<10x10xf32>
    %c142 = arith.constant 142 : index
    %887 = memref.load %arg3[%c142] : memref<225xf32, #tpu.memory_space<smem>>
    %888 = vector.broadcast %887 : f32 to vector<10x10xf32>
    %889 = arith.mulf %888, %882 : vector<10x10xf32>
    %890 = arith.addf %877, %889 : vector<10x10xf32>
    %c217 = arith.constant 217 : index
    %891 = memref.load %arg3[%c217] : memref<225xf32, #tpu.memory_space<smem>>
    %892 = vector.broadcast %891 : f32 to vector<10x10xf32>
    %893 = arith.mulf %892, %882 : vector<10x10xf32>
    %894 = arith.addf %881, %893 : vector<10x10xf32>
    %c31_149 = arith.constant 31 : index
    %c3_150 = arith.constant 3 : index
    %895 = vector.load %arg6[%c31_149, %c3_150] : memref<42x14xf32, #tpu.memory_space<vmem>>, vector<10x10xf32>
    %c68 = arith.constant 68 : index
    %896 = memref.load %arg3[%c68] : memref<225xf32, #tpu.memory_space<smem>>
    %897 = vector.broadcast %896 : f32 to vector<10x10xf32>
    %898 = arith.mulf %897, %895 : vector<10x10xf32>
    %899 = arith.addf %886, %898 : vector<10x10xf32>
    %c143 = arith.constant 143 : index
    %900 = memref.load %arg3[%c143] : memref<225xf32, #tpu.memory_space<smem>>
    %901 = vector.broadcast %900 : f32 to vector<10x10xf32>
    %902 = arith.mulf %901, %895 : vector<10x10xf32>
    %903 = arith.addf %890, %902 : vector<10x10xf32>
    %c218 = arith.constant 218 : index
    %904 = memref.load %arg3[%c218] : memref<225xf32, #tpu.memory_space<smem>>
    %905 = vector.broadcast %904 : f32 to vector<10x10xf32>
    %906 = arith.mulf %905, %895 : vector<10x10xf32>
    %907 = arith.addf %894, %906 : vector<10x10xf32>
    %c31_151 = arith.constant 31 : index
    %c4_152 = arith.constant 4 : index
    %908 = vector.load %arg6[%c31_151, %c4_152] : memref<42x14xf32, #tpu.memory_space<vmem>>, vector<10x10xf32>
    %c69 = arith.constant 69 : index
    %909 = memref.load %arg3[%c69] : memref<225xf32, #tpu.memory_space<smem>>
    %910 = vector.broadcast %909 : f32 to vector<10x10xf32>
    %911 = arith.mulf %910, %908 : vector<10x10xf32>
    %912 = arith.addf %899, %911 : vector<10x10xf32>
    %c144 = arith.constant 144 : index
    %913 = memref.load %arg3[%c144] : memref<225xf32, #tpu.memory_space<smem>>
    %914 = vector.broadcast %913 : f32 to vector<10x10xf32>
    %915 = arith.mulf %914, %908 : vector<10x10xf32>
    %916 = arith.addf %903, %915 : vector<10x10xf32>
    %c219 = arith.constant 219 : index
    %917 = memref.load %arg3[%c219] : memref<225xf32, #tpu.memory_space<smem>>
    %918 = vector.broadcast %917 : f32 to vector<10x10xf32>
    %919 = arith.mulf %918, %908 : vector<10x10xf32>
    %920 = arith.addf %907, %919 : vector<10x10xf32>
    %c32_153 = arith.constant 32 : index
    %c0_154 = arith.constant 0 : index
    %921 = vector.load %arg6[%c32_153, %c0_154] : memref<42x14xf32, #tpu.memory_space<vmem>>, vector<10x10xf32>
    %c70 = arith.constant 70 : index
    %922 = memref.load %arg3[%c70] : memref<225xf32, #tpu.memory_space<smem>>
    %923 = vector.broadcast %922 : f32 to vector<10x10xf32>
    %924 = arith.mulf %923, %921 : vector<10x10xf32>
    %925 = arith.addf %912, %924 : vector<10x10xf32>
    %c145 = arith.constant 145 : index
    %926 = memref.load %arg3[%c145] : memref<225xf32, #tpu.memory_space<smem>>
    %927 = vector.broadcast %926 : f32 to vector<10x10xf32>
    %928 = arith.mulf %927, %921 : vector<10x10xf32>
    %929 = arith.addf %916, %928 : vector<10x10xf32>
    %c220 = arith.constant 220 : index
    %930 = memref.load %arg3[%c220] : memref<225xf32, #tpu.memory_space<smem>>
    %931 = vector.broadcast %930 : f32 to vector<10x10xf32>
    %932 = arith.mulf %931, %921 : vector<10x10xf32>
    %933 = arith.addf %920, %932 : vector<10x10xf32>
    %c32_155 = arith.constant 32 : index
    %c1_156 = arith.constant 1 : index
    %934 = vector.load %arg6[%c32_155, %c1_156] : memref<42x14xf32, #tpu.memory_space<vmem>>, vector<10x10xf32>
    %c71 = arith.constant 71 : index
    %935 = memref.load %arg3[%c71] : memref<225xf32, #tpu.memory_space<smem>>
    %936 = vector.broadcast %935 : f32 to vector<10x10xf32>
    %937 = arith.mulf %936, %934 : vector<10x10xf32>
    %938 = arith.addf %925, %937 : vector<10x10xf32>
    %c146 = arith.constant 146 : index
    %939 = memref.load %arg3[%c146] : memref<225xf32, #tpu.memory_space<smem>>
    %940 = vector.broadcast %939 : f32 to vector<10x10xf32>
    %941 = arith.mulf %940, %934 : vector<10x10xf32>
    %942 = arith.addf %929, %941 : vector<10x10xf32>
    %c221 = arith.constant 221 : index
    %943 = memref.load %arg3[%c221] : memref<225xf32, #tpu.memory_space<smem>>
    %944 = vector.broadcast %943 : f32 to vector<10x10xf32>
    %945 = arith.mulf %944, %934 : vector<10x10xf32>
    %946 = arith.addf %933, %945 : vector<10x10xf32>
    %c32_157 = arith.constant 32 : index
    %c2_158 = arith.constant 2 : index
    %947 = vector.load %arg6[%c32_157, %c2_158] : memref<42x14xf32, #tpu.memory_space<vmem>>, vector<10x10xf32>
    %c72 = arith.constant 72 : index
    %948 = memref.load %arg3[%c72] : memref<225xf32, #tpu.memory_space<smem>>
    %949 = vector.broadcast %948 : f32 to vector<10x10xf32>
    %950 = arith.mulf %949, %947 : vector<10x10xf32>
    %951 = arith.addf %938, %950 : vector<10x10xf32>
    %c147 = arith.constant 147 : index
    %952 = memref.load %arg3[%c147] : memref<225xf32, #tpu.memory_space<smem>>
    %953 = vector.broadcast %952 : f32 to vector<10x10xf32>
    %954 = arith.mulf %953, %947 : vector<10x10xf32>
    %955 = arith.addf %942, %954 : vector<10x10xf32>
    %c222 = arith.constant 222 : index
    %956 = memref.load %arg3[%c222] : memref<225xf32, #tpu.memory_space<smem>>
    %957 = vector.broadcast %956 : f32 to vector<10x10xf32>
    %958 = arith.mulf %957, %947 : vector<10x10xf32>
    %959 = arith.addf %946, %958 : vector<10x10xf32>
    %c32_159 = arith.constant 32 : index
    %c3_160 = arith.constant 3 : index
    %960 = vector.load %arg6[%c32_159, %c3_160] : memref<42x14xf32, #tpu.memory_space<vmem>>, vector<10x10xf32>
    %c73 = arith.constant 73 : index
    %961 = memref.load %arg3[%c73] : memref<225xf32, #tpu.memory_space<smem>>
    %962 = vector.broadcast %961 : f32 to vector<10x10xf32>
    %963 = arith.mulf %962, %960 : vector<10x10xf32>
    %964 = arith.addf %951, %963 : vector<10x10xf32>
    %c148 = arith.constant 148 : index
    %965 = memref.load %arg3[%c148] : memref<225xf32, #tpu.memory_space<smem>>
    %966 = vector.broadcast %965 : f32 to vector<10x10xf32>
    %967 = arith.mulf %966, %960 : vector<10x10xf32>
    %968 = arith.addf %955, %967 : vector<10x10xf32>
    %c223 = arith.constant 223 : index
    %969 = memref.load %arg3[%c223] : memref<225xf32, #tpu.memory_space<smem>>
    %970 = vector.broadcast %969 : f32 to vector<10x10xf32>
    %971 = arith.mulf %970, %960 : vector<10x10xf32>
    %972 = arith.addf %959, %971 : vector<10x10xf32>
    %c32_161 = arith.constant 32 : index
    %c4_162 = arith.constant 4 : index
    %973 = vector.load %arg6[%c32_161, %c4_162] : memref<42x14xf32, #tpu.memory_space<vmem>>, vector<10x10xf32>
    %c74 = arith.constant 74 : index
    %974 = memref.load %arg3[%c74] : memref<225xf32, #tpu.memory_space<smem>>
    %975 = vector.broadcast %974 : f32 to vector<10x10xf32>
    %976 = arith.mulf %975, %973 : vector<10x10xf32>
    %977 = arith.addf %964, %976 : vector<10x10xf32>
    %c149 = arith.constant 149 : index
    %978 = memref.load %arg3[%c149] : memref<225xf32, #tpu.memory_space<smem>>
    %979 = vector.broadcast %978 : f32 to vector<10x10xf32>
    %980 = arith.mulf %979, %973 : vector<10x10xf32>
    %981 = arith.addf %968, %980 : vector<10x10xf32>
    %c224 = arith.constant 224 : index
    %982 = memref.load %arg3[%c224] : memref<225xf32, #tpu.memory_space<smem>>
    %983 = vector.broadcast %982 : f32 to vector<10x10xf32>
    %984 = arith.mulf %983, %973 : vector<10x10xf32>
    %985 = arith.addf %972, %984 : vector<10x10xf32>
    %c0_163 = arith.constant 0 : index
    %986 = memref.load %arg4[%c0_163] : memref<3xf32, #tpu.memory_space<smem>>
    %987 = vector.broadcast %986 : f32 to vector<10x10xf32>
    %988 = arith.addf %977, %987 : vector<10x10xf32>
    %989 = math.tanh %988 : vector<10x10xf32>
    %c0_164 = arith.constant 0 : index
    %c0_165 = arith.constant 0 : index
    %c0_166 = arith.constant 0 : index
    %990 = vector.load %arg5[%c0_164, %c0_165, %c0_166] : memref<3x10x10xf32, #tpu.memory_space<vmem>>, vector<1x10x10xf32>
    %991 = vector.shape_cast %990 : vector<1x10x10xf32> to vector<10x10xf32>
    %992 = vector.shape_cast %989 : vector<10x10xf32> to vector<1x10x10xf32>
    tpu.vector_store %arg5[%c0_164, %c0_165, %c0_166], %992 {strides = array<i32>} : memref<3x10x10xf32, #tpu.memory_space<vmem>>, vector<1x10x10xf32>,
    %c1_167 = arith.constant 1 : index
    %993 = memref.load %arg4[%c1_167] : memref<3xf32, #tpu.memory_space<smem>>
    %994 = vector.broadcast %993 : f32 to vector<10x10xf32>
    %995 = arith.addf %981, %994 : vector<10x10xf32>
    %996 = math.tanh %995 : vector<10x10xf32>
    %c1_168 = arith.constant 1 : index
    %c0_169 = arith.constant 0 : index
    %c0_170 = arith.constant 0 : index
    %997 = vector.load %arg5[%c1_168, %c0_169, %c0_170] : memref<3x10x10xf32, #tpu.memory_space<vmem>>, vector<1x10x10xf32>
    %998 = vector.shape_cast %997 : vector<1x10x10xf32> to vector<10x10xf32>
    %999 = vector.shape_cast %996 : vector<10x10xf32> to vector<1x10x10xf32>
    tpu.vector_store %arg5[%c1_168, %c0_169, %c0_170], %999 {strides = array<i32>} : memref<3x10x10xf32, #tpu.memory_space<vmem>>, vector<1x10x10xf32>,
    %c2_171 = arith.constant 2 : index
    %1000 = memref.load %arg4[%c2_171] : memref<3xf32, #tpu.memory_space<smem>>
    %1001 = vector.broadcast %1000 : f32 to vector<10x10xf32>
    %1002 = arith.addf %985, %1001 : vector<10x10xf32>
    %1003 = math.tanh %1002 : vector<10x10xf32>
    %c2_172 = arith.constant 2 : index
    %c0_173 = arith.constant 0 : index
    %c0_174 = arith.constant 0 : index
    %1004 = vector.load %arg5[%c2_172, %c0_173, %c0_174] : memref<3x10x10xf32, #tpu.memory_space<vmem>>, vector<1x10x10xf32>
    %1005 = vector.shape_cast %1004 : vector<1x10x10xf32> to vector<10x10xf32>
    %1006 = vector.shape_cast %1003 : vector<10x10xf32> to vector<1x10x10xf32>
    tpu.vector_store %arg5[%c2_172, %c0_173, %c0_174], %1006 {strides = array<i32>} : memref<3x10x10xf32, #tpu.memory_space<vmem>>, vector<1x10x10xf32>,
    return
  }
}

</mosaic_0001>

<llo_original>
// kernel: model_tanh_forward.1
$region0: #{model_tanh_forward.1}
  #allocation0 [shape = 'u32[]', space=smem, size = 0x4, offset = 0x4, fixed_abs, tag = 'smem constant byte address 0x4 - core index']
  #allocation1 [shape = 'u32[144,128]{1,0:T(1,128)}', space=vmem, size = 0x12000, scoped, tag = 'internal scratch']
  #allocation2 [shape = 'f32[42,14]{1,0:T(8,128)}', space=vmem, size = 0x6000, scoped, tag = 'scratch operand']
  %s0 = inlined_call_operand.vmem [shape: f32[30,10], index: 0, kind: input, shape index: {}]
  %s1 = inlined_call_operand.vmem [shape: f32[42,30], index: 1, kind: input, shape index: {}]
  %s2 = inlined_call_operand.vmem [shape: f32[10,14], index: 2, kind: input, shape index: {}]
  %s3 = inlined_call_operand.vmem [shape: f32[225], index: 3, kind: input, shape index: {}]
  %s4 = inlined_call_operand.vmem [shape: f32[3], index: 4, kind: input, shape index: {}]
  %s5 = inlined_call_operand.vmem [shape: f32[3,10,10], index: 5, kind: output, shape index: {}]
  %s6 = sld [smem:[#allocation0]]
  $region38: #{model_tanh_forward.1} parent=0
    _
  %s8 = ssub.s32 1, %s6
  %s9 = scalar_select 0, %s8, %s6
  $region1: #{model_tanh_forward.1} parent=0
    #allocation3 [shape = 'u8[1024]{0}', space=smem, size = 0x400, scoped, tag = 'input window, operand 3, single buffered']
    #allocation4 [shape = 's32[1]{0}', space=sflag, size = 0x4, scoped, tag = 'scoped memory for model_tanh_forward.1']
    #allocation5 [shape = 'u8[512]{0}', space=smem, size = 0x200, scoped, tag = 'input window, operand 4, single buffered']
    #allocation6 [shape = 's32[1]{0}', space=sflag, size = 0x4, scoped, tag = 'scoped memory for model_tanh_forward.1']
    %10 = vsyncpa [#allocation4], 0
    %11 = vsyncpa [#allocation6], 0
    // Predicated region
    $region2: #{model_tanh_forward.1} parent=1 // pred_check
      _
    $region3: #{model_tanh_forward.1} parent=1 // pred_check_branch
      %13 = sbr.rel (0) target = $region5
    $region4: #{model_tanh_forward.1} parent=1 // pred_region
      _
    $region5: #{model_tanh_forward.1} parent=1 // pred_fallthru
      _
    // Predicated region
    $region6: #{model_tanh_forward.1} parent=1 // pred_check
      _
    $region7: #{model_tanh_forward.1} parent=1 // pred_check_branch
      %15 = sbr.rel (0) target = $region9
    $region8: #{model_tanh_forward.1} parent=1 // pred_region
      _
    $region9: #{model_tanh_forward.1} parent=1 // pred_fallthru
      _
    // Predicated region
    $region10: #{model_tanh_forward.1} parent=1 // pred_check
      _
    $region11: #{model_tanh_forward.1} parent=1 // pred_check_branch
      %17 = sbr.rel (0) target = $region13
    $region12: #{model_tanh_forward.1} parent=1 // pred_region
      _
    $region13: #{model_tanh_forward.1} parent=1 // pred_fallthru
      _
    // Predicated region
    $region14: #{model_tanh_forward.1} parent=1 // pred_check
      _
    $region15: #{model_tanh_forward.1} parent=1 // pred_check_branch
      %19 = sbr.rel (0) target = $region17
    $region16: #{model_tanh_forward.1} parent=1 // pred_region
      %s21 = ssub.s32 32, 32
      %22 = vsyncadd [#allocation4], %s21
      %s24 = sshll.u32 %s3, 4
      %s25 = int_to_ptr.vmem [resolvable:$true] %s24
      %27 = dma.vmem_to_smem %s25, 32, [#allocation3], [#allocation4]
    $region17: #{model_tanh_forward.1} parent=1 // pred_fallthru
      _
    // Predicated region
    $region18: #{model_tanh_forward.1} parent=1 // pred_check
      _
    $region19: #{model_tanh_forward.1} parent=1 // pred_check_branch
      %29 = sbr.rel (0) target = $region21
    $region20: #{model_tanh_forward.1} parent=1 // pred_region
      %s31 = ssub.s32 16, 16
      %32 = vsyncadd [#allocation6], %s31
      %s34 = sshll.u32 %s4, 4
      %s35 = int_to_ptr.vmem [resolvable:$true] %s34
      %37 = dma.vmem_to_smem %s35, 16, [#allocation5], [#allocation6]
    $region21: #{model_tanh_forward.1} parent=1 // pred_fallthru
      _
    // Predicated region
    $region22: #{model_tanh_forward.1} parent=1 // pred_check
      _
    $region23: #{model_tanh_forward.1} parent=1 // pred_check_branch
      %39 = sbr.rel (0) target = $region25
    $region24: #{model_tanh_forward.1} parent=1 // pred_region
      %40 = dma.done [#allocation4], 32
    $region25: #{model_tanh_forward.1} parent=1 // pred_fallthru
      _
    // Predicated region
    $region26: #{model_tanh_forward.1} parent=1 // pred_check
      _
    $region27: #{model_tanh_forward.1} parent=1 // pred_check_branch
      %42 = sbr.rel (0) target = $region29
    $region28: #{model_tanh_forward.1} parent=1 // pred_region
      %43 = dma.done [#allocation6], 16
    $region29: #{model_tanh_forward.1} parent=1 // pred_fallthru
      _
    %44 = sfence
    %v45 = vld [vmem:[%s0] sm:$0xff]
    %v46 = vld [vmem:[%s0 + $0x8] sm:$0xff]
    %v47 = vld [vmem:[%s0 + $0x10] sm:$0xff]
    %v48 = vld [vmem:[%s0 + $0x18] sm:$0x3f]
    %v49 = vmax.f32 %v45, 0.0
    %v50 = vmax.f32 %v46, 0.0
    %v51 = vmax.f32 %v47, 0.0
    %v52 = vmax.f32 %v48, 0.0
    %v53 = vld [vmem:[%s2] sm:$0xff]
    %v54 = vld [vmem:[%s2 + $0x8] sm:$0x3]
    %vm55 = vcmask 80896
    %v57 = vsel %vm55, %v49, 0
    %v60 = vsel %vm55, %v50, 0
    %v63 = vsel %vm55, %v51, 0
    %v66 = vsel %vm55, %v52, 0
    %vm68 = vcmask 1041408
    %v70 = vsel %vm68, %v54, 0
    %72 = vmatprep.subr.mxu0 0.0
    %73 = vmatpush1.msra.mxu0 %v53
    %74 = vmatprep.subr.mxu0 0.0
    %75 = vmatpush1.msra.mxu0 %v70
    %76 = vmatprep.subr.mxu0 0.0
    %77 = vmatpush1.msra.mxu0 0.0
    %78 = vmatprep.subr.mxu0 0.0
    %79 = vmatpush1.msra.mxu0 0.0
    %80 = vmatprep.subr.mxu0 0.0
    %81 = vmatpush1.msra.mxu0 0.0
    %82 = vmatprep.subr.mxu0 0.0
    %83 = vmatpush1.msra.mxu0 0.0
    %84 = vmatprep.subr.mxu0 0.0
    %85 = vmatpush1.msra.mxu0 0.0
    %86 = vmatprep.subr.mxu0 0.0
    %87 = vmatpush1.msra.mxu0 0.0
    %88 = vmatprep.subr.mxu0 0.0
    %89 = vmatpush1.msra.mxu0 0.0
    %90 = vmatprep.subr.mxu0 0.0
    %91 = vmatpush1.msra.mxu0 0.0
    %92 = vmatprep.subr.mxu0 0.0
    %93 = vmatpush1.msra.mxu0 0.0
    %94 = vmatprep.subr.mxu0 0.0
    %95 = vmatpush1.msra.mxu0 0.0
    %96 = vmatprep.subr.mxu0 0.0
    %97 = vmatpush1.msra.mxu0 0.0
    %98 = vmatprep.subr.mxu0 0.0
    %99 = vmatpush1.msra.mxu0 0.0
    %100 = vmatprep.subr.mxu0 0.0
    %101 = vmatpush1.msra.mxu0 0.0
    %102 = vmatprep.subr.mxu0 0.0
    %103 = vmatpush1.msra.mxu0 0.0
    %104 = vmatprep.subr.mxu0 0.0
    %105 = vmatpush1.msra.mxu0 0.0
    %106 = vmatprep.subr.mxu0 0.0
    %107 = vmatpush1.msra.mxu0 0.0
    %108 = vmatprep.subr.mxu0 0.0
    %109 = vmatpush1.msra.mxu0 0.0
    %110 = vmatprep.subr.mxu0 0.0
    %111 = vmatpush1.msra.mxu0 0.0
    %112 = vmatprep.subr.mxu0 0.0
    %113 = vmatpush1.msra.mxu0 0.0
    %114 = vmatprep.subr.mxu0 0.0
    %115 = vmatpush1.msra.mxu0 0.0
    %116 = vmatprep.subr.mxu0 0.0
    %117 = vmatpush1.msra.mxu0 0.0
    %118 = vmatprep.subr.mxu0 0.0
    %119 = vmatpush1.msra.mxu0 0.0
    %120 = vmatprep.subr.mxu0 0.0
    %121 = vmatpush1.msra.mxu0 0.0
    %122 = vmatprep.subr.mxu0 0.0
    %123 = vmatpush1.msra.mxu0 0.0
    %124 = vmatprep.subr.mxu0 0.0
    %125 = vmatpush1.msra.mxu0 0.0
    %126 = vmatprep.subr.mxu0 0.0
    %127 = vmatpush1.msra.mxu0 0.0
    %128 = vmatprep.subr.mxu0 0.0
    %129 = vmatpush1.msra.mxu0 0.0
    %130 = vmatprep.subr.mxu0 0.0
    %131 = vmatpush1.msra.mxu0 0.0
    %132 = vmatprep.subr.mxu0 0.0
    %133 = vmatpush1.msra.mxu0 0.0
    %134 = vmatprep.subr.mxu0 0.0
    %135 = vmatpush1.msra.mxu0 0.0
    %136 = vmatprep.mubr.f32.mxu0 0.0
    %137 = vmatmul.mubr.f32.gmra.mrb[0].mxu0 %v57
    %v138 = vpop.f32.mrb[0].mxu0
    %v139 = vadd.f32 0.0, %v138
    %v140 = vpop.f32.mrb[0].mxu0
    %141 = vmatprep.mubr.f32.mxu0 0.0
    %142 = vmatmul.mubr.f32.gmra.mrb[0].mxu0 %v60
    %v143 = vpop.f32.mrb[0].mxu0
    %v144 = vadd.f32 0.0, %v143
    %v145 = vpop.f32.mrb[0].mxu0
    %146 = vmatprep.mubr.f32.mxu0 0.0
    %147 = vmatmul.mubr.f32.gmra.mrb[0].mxu0 %v63
    %v148 = vpop.f32.mrb[0].mxu0
    %v149 = vadd.f32 0.0, %v148
    %v150 = vpop.f32.mrb[0].mxu0
    %151 = vmatprep.mubr.f32.mxu0 0.0
    %152 = vmatmul.mubr.f32.gmra.mrb[0].mxu0 %v66
    %v153 = vpop.f32.mrb[0].mxu0
    %v154 = vadd.f32 0.0, %v153
    %v155 = vpop.f32.mrb[0].mxu0
    %156 = vdwg.mxu0
    %v157 = vld [vmem:[%s1] sm:$0xff]
    %v158 = vld [vmem:[%s1 + $0x8] sm:$0xff]
    %v159 = vld [vmem:[%s1 + $0x10] sm:$0xff]
    %v160 = vld [vmem:[%s1 + $0x18] sm:$0xff]
    %v161 = vld [vmem:[%s1 + $0x20] sm:$0xff]
    %v162 = vld [vmem:[%s1 + $0x28] sm:$0x3]
    %vm163 = vcmask 244736
    %v165 = vsel %vm163, %v157, 0
    %v168 = vsel %vm163, %v158, 0
    %v171 = vsel %vm163, %v159, 0
    %v174 = vsel %vm163, %v160, 0
    %v177 = vsel %vm163, %v161, 0
    %v180 = vsel %vm163, %v162, 0
    %vm182 = vcmask 1045504
    %v184 = vsel %vm182, %v154, 0
    %186 = vmatprep.subr.mxu0 0.0
    %187 = vmatpush1.msra.mxu0 %v139
    %188 = vmatprep.subr.mxu0 0.0
    %189 = vmatpush1.msra.mxu0 %v144
    %190 = vmatprep.subr.mxu0 0.0
    %191 = vmatpush1.msra.mxu0 %v149
    %192 = vmatprep.subr.mxu0 0.0
    %193 = vmatpush1.msra.mxu0 %v184
    %194 = vmatprep.subr.mxu0 0.0
    %195 = vmatpush1.msra.mxu0 0.0
    %196 = vmatprep.subr.mxu0 0.0
    %197 = vmatpush1.msra.mxu0 0.0
    %198 = vmatprep.subr.mxu0 0.0
    %199 = vmatpush1.msra.mxu0 0.0
    %200 = vmatprep.subr.mxu0 0.0
    %201 = vmatpush1.msra.mxu0 0.0
    %202 = vmatprep.subr.mxu0 0.0
    %203 = vmatpush1.msra.mxu0 0.0
    %204 = vmatprep.subr.mxu0 0.0
    %205 = vmatpush1.msra.mxu0 0.0
    %206 = vmatprep.subr.mxu0 0.0
    %207 = vmatpush1.msra.mxu0 0.0
    %208 = vmatprep.subr.mxu0 0.0
    %209 = vmatpush1.msra.mxu0 0.0
    %210 = vmatprep.subr.mxu0 0.0
    %211 = vmatpush1.msra.mxu0 0.0
    %212 = vmatprep.subr.mxu0 0.0
    %213 = vmatpush1.msra.mxu0 0.0
    %214 = vmatprep.subr.mxu0 0.0
    %215 = vmatpush1.msra.mxu0 0.0
    %216 = vmatprep.subr.mxu0 0.0
    %217 = vmatpush1.msra.mxu0 0.0
    %218 = vmatprep.subr.mxu0 0.0
    %219 = vmatpush1.msra.mxu0 0.0
    %220 = vmatprep.subr.mxu0 0.0
    %221 = vmatpush1.msra.mxu0 0.0
    %222 = vmatprep.subr.mxu0 0.0
    %223 = vmatpush1.msra.mxu0 0.0
    %224 = vmatprep.subr.mxu0 0.0
    %225 = vmatpush1.msra.mxu0 0.0
    %226 = vmatprep.subr.mxu0 0.0
    %227 = vmatpush1.msra.mxu0 0.0
    %228 = vmatprep.subr.mxu0 0.0
    %229 = vmatpush1.msra.mxu0 0.0
    %230 = vmatprep.subr.mxu0 0.0
    %231 = vmatpush1.msra.mxu0 0.0
    %232 = vmatprep.subr.mxu0 0.0
    %233 = vmatpush1.msra.mxu0 0.0
    %234 = vmatprep.subr.mxu0 0.0
    %235 = vmatpush1.msra.mxu0 0.0
    %236 = vmatprep.subr.mxu0 0.0
    %237 = vmatpush1.msra.mxu0 0.0
    %238 = vmatprep.subr.mxu0 0.0
    %239 = vmatpush1.msra.mxu0 0.0
    %240 = vmatprep.subr.mxu0 0.0
    %241 = vmatpush1.msra.mxu0 0.0
    %242 = vmatprep.subr.mxu0 0.0
    %243 = vmatpush1.msra.mxu0 0.0
    %244 = vmatprep.subr.mxu0 0.0
    %245 = vmatpush1.msra.mxu0 0.0
    %246 = vmatprep.subr.mxu0 0.0
    %247 = vmatpush1.msra.mxu0 0.0
    %248 = vmatprep.subr.mxu0 0.0
    %249 = vmatpush1.msra.mxu0 0.0
    %250 = vmatprep.mubr.f32.mxu0 0.0
    %251 = vmatmul.mubr.f32.gmra.mrb[0].mxu0 %v165
    %v252 = vpop.f32.mrb[0].mxu0
    %v253 = vadd.f32 0.0, %v252
    %v254 = vpop.f32.mrb[0].mxu0
    %255 = vmatprep.mubr.f32.mxu0 0.0
    %256 = vmatmul.mubr.f32.gmra.mrb[0].mxu0 %v168
    %v257 = vpop.f32.mrb[0].mxu0
    %v258 = vadd.f32 0.0, %v257
    %v259 = vpop.f32.mrb[0].mxu0
    %260 = vmatprep.mubr.f32.mxu0 0.0
    %261 = vmatmul.mubr.f32.gmra.mrb[0].mxu0 %v171
    %v262 = vpop.f32.mrb[0].mxu0
    %v263 = vadd.f32 0.0, %v262
    %v264 = vpop.f32.mrb[0].mxu0
    %265 = vmatprep.mubr.f32.mxu0 0.0
    %266 = vmatmul.mubr.f32.gmra.mrb[0].mxu0 %v174
    %v267 = vpop.f32.mrb[0].mxu0
    %v268 = vadd.f32 0.0, %v267
    %v269 = vpop.f32.mrb[0].mxu0
    %270 = vmatprep.mubr.f32.mxu0 0.0
    %271 = vmatmul.mubr.f32.gmra.mrb[0].mxu0 %v177
    %v272 = vpop.f32.mrb[0].mxu0
    %v273 = vadd.f32 0.0, %v272
    %v274 = vpop.f32.mrb[0].mxu0
    %275 = vmatprep.mubr.f32.mxu0 0.0
    %276 = vmatmul.mubr.f32.gmra.mrb[0].mxu0 %v180
    %v277 = vpop.f32.mrb[0].mxu0
    %v278 = vadd.f32 0.0, %v277
    %v279 = vpop.f32.mrb[0].mxu0
    %280 = vdwg.mxu0
    %vm281 = vcmask 113664
    %282 = vst.msk [vmem:[#allocation2] sm:$0xff] %vm281, %v253
    %283 = vst.msk [vmem:[#allocation2 + $0x8] sm:$0xff] %vm281, %v258
    %284 = vst.msk [vmem:[#allocation2 + $0x10] sm:$0xff] %vm281, %v263
    %285 = vst.msk [vmem:[#allocation2 + $0x18] sm:$0xff] %vm281, %v268
    %286 = vst.msk [vmem:[#allocation2 + $0x20] sm:$0xff] %vm281, %v273
    %vm287 = vcmask 107520
    %288 = vst.msk [vmem:[#allocation2 + $0x28] sm:$0x3] %vm287, %v278
    %v289 = vld [vmem:[#allocation2] sm:$0xff]
    %v290 = vld [vmem:[#allocation2 + $0x8] sm:$0x3]
    %s291 = sld [smem:[#allocation3]]
    %v292 = vstv %s291
    %v293 = vmul.f32 %v292, %v289
    %v294 = vmul.f32 %v292, %v290
    %v295 = vadd.f32 %v293, 0.0
    %v296 = vadd.f32 %v294, 0.0
    %s297 = sld [smem:[#allocation3 + $0x4b]]
    %v298 = vstv %s297
    %v299 = vmul.f32 %v298, %v289
    %v300 = vmul.f32 %v298, %v290
    %v301 = vadd.f32 %v299, 0.0
    %v302 = vadd.f32 %v300, 0.0
    %s303 = sld [smem:[#allocation3 + $0x96]]
    %v304 = vstv %s303
    %v305 = vmul.f32 %v304, %v289
    %v306 = vmul.f32 %v304, %v290
    %v307 = vadd.f32 %v305, 0.0
    %v308 = vadd.f32 %v306, 0.0
    %s309 = sld [smem:[#allocation3 + $0x1]]
    %v310 = vstv %s309
    %v311 = vmul.f32 %v310, %v289
    %v312 = vmul.f32 %v310, %v290
    %315 = vrot.lane.b32.xlu0 %v311, 127
    %v316 = vpop.permute.xlu0 %315
    %317 = vrot.lane.b32.xlu0 %v312, 127
    %v318 = vpop.permute.xlu0 %317
    %v321 = vadd.f32 %v295, %v316
    %v322 = vadd.f32 %v296, %v318
    %s323 = sld [smem:[#allocation3 + $0x4c]]
    %v324 = vstv %s323
    %v325 = vmul.f32 %v324, %v289
    %v326 = vmul.f32 %v324, %v290
    %329 = vrot.lane.b32.xlu0 %v325, 127
    %v330 = vpop.permute.xlu0 %329
    %331 = vrot.lane.b32.xlu0 %v326, 127
    %v332 = vpop.permute.xlu0 %331
    %v335 = vadd.f32 %v301, %v330
    %v336 = vadd.f32 %v302, %v332
    %s337 = sld [smem:[#allocation3 + $0x97]]
    %v338 = vstv %s337
    %v339 = vmul.f32 %v338, %v289
    %v340 = vmul.f32 %v338, %v290
    %343 = vrot.lane.b32.xlu0 %v339, 127
    %v344 = vpop.permute.xlu0 %343
    %345 = vrot.lane.b32.xlu0 %v340, 127
    %v346 = vpop.permute.xlu0 %345
    %v349 = vadd.f32 %v307, %v344
    %v350 = vadd.f32 %v308, %v346
    %s351 = sld [smem:[#allocation3 + $0x2]]
    %v352 = vstv %s351
    %v353 = vmul.f32 %v352, %v289
    %v354 = vmul.f32 %v352, %v290
    %357 = vrot.lane.b32.xlu0 %v353, 126
    %v358 = vpop.permute.xlu0 %357
    %359 = vrot.lane.b32.xlu0 %v354, 126
    %v360 = vpop.permute.xlu0 %359
    %v363 = vadd.f32 %v321, %v358
    %v364 = vadd.f32 %v322, %v360
    %s365 = sld [smem:[#allocation3 + $0x4d]]
    %v366 = vstv %s365
    %v367 = vmul.f32 %v366, %v289
    %v368 = vmul.f32 %v366, %v290
    %371 = vrot.lane.b32.xlu0 %v367, 126
    %v372 = vpop.permute.xlu0 %371
    %373 = vrot.lane.b32.xlu0 %v368, 126
    %v374 = vpop.permute.xlu0 %373
    %v377 = vadd.f32 %v335, %v372
    %v378 = vadd.f32 %v336, %v374
    %s379 = sld [smem:[#allocation3 + $0x98]]
    %v380 = vstv %s379
    %v381 = vmul.f32 %v380, %v289
    %v382 = vmul.f32 %v380, %v290
    %385 = vrot.lane.b32.xlu0 %v381, 126
    %v386 = vpop.permute.xlu0 %385
    %387 = vrot.lane.b32.xlu0 %v382, 126
    %v388 = vpop.permute.xlu0 %387
    %v391 = vadd.f32 %v349, %v386
    %v392 = vadd.f32 %v350, %v388
    %s393 = sld [smem:[#allocation3 + $0x3]]
    %v394 = vstv %s393
    %v395 = vmul.f32 %v394, %v289
    %v396 = vmul.f32 %v394, %v290
    %399 = vrot.lane.b32.xlu0 %v395, 125
    %v400 = vpop.permute.xlu0 %399
    %401 = vrot.lane.b32.xlu0 %v396, 125
    %v402 = vpop.permute.xlu0 %401
    %v405 = vadd.f32 %v363, %v400
    %v406 = vadd.f32 %v364, %v402
    %s407 = sld [smem:[#allocation3 + $0x4e]]
    %v408 = vstv %s407
    %v409 = vmul.f32 %v408, %v289
    %v410 = vmul.f32 %v408, %v290
    %413 = vrot.lane.b32.xlu0 %v409, 125
    %v414 = vpop.permute.xlu0 %413
    %415 = vrot.lane.b32.xlu0 %v410, 125
    %v416 = vpop.permute.xlu0 %415
    %v419 = vadd.f32 %v377, %v414
    %v420 = vadd.f32 %v378, %v416
    %s421 = sld [smem:[#allocation3 + $0x99]]
    %v422 = vstv %s421
    %v423 = vmul.f32 %v422, %v289
    %v424 = vmul.f32 %v422, %v290
    %427 = vrot.lane.b32.xlu0 %v423, 125
    %v428 = vpop.permute.xlu0 %427
    %429 = vrot.lane.b32.xlu0 %v424, 125
    %v430 = vpop.permute.xlu0 %429
    %v433 = vadd.f32 %v391, %v428
    %v434 = vadd.f32 %v392, %v430
    %s435 = sld [smem:[#allocation3 + $0x4]]
    %v436 = vstv %s435
    %v437 = vmul.f32 %v436, %v289
    %v438 = vmul.f32 %v436, %v290
    %441 = vrot.lane.b32.xlu0 %v437, 124
    %v442 = vpop.permute.xlu0 %441
    %443 = vrot.lane.b32.xlu0 %v438, 124
    %v444 = vpop.permute.xlu0 %443
    %v447 = vadd.f32 %v405, %v442
    %v448 = vadd.f32 %v406, %v444
    %s449 = sld [smem:[#allocation3 + $0x4f]]
    %v450 = vstv %s449
    %v451 = vmul.f32 %v450, %v289
    %v452 = vmul.f32 %v450, %v290
    %455 = vrot.lane.b32.xlu0 %v451, 124
    %v456 = vpop.permute.xlu0 %455
    %457 = vrot.lane.b32.xlu0 %v452, 124
    %v458 = vpop.permute.xlu0 %457
    %v461 = vadd.f32 %v419, %v456
    %v462 = vadd.f32 %v420, %v458
    %s463 = sld [smem:[#allocation3 + $0x9a]]
    %v464 = vstv %s463
    %v465 = vmul.f32 %v464, %v289
    %v466 = vmul.f32 %v464, %v290
    %469 = vrot.lane.b32.xlu0 %v465, 124
    %v470 = vpop.permute.xlu0 %469
    %471 = vrot.lane.b32.xlu0 %v466, 124
    %v472 = vpop.permute.xlu0 %471
    %v475 = vadd.f32 %v433, %v470
    %v476 = vadd.f32 %v434, %v472
    %v477 = vld [vmem:[#allocation2 + $0x1] sm:$0xff]
    %v478 = vld [vmem:[#allocation2 + $0x9] sm:$0x3]
    %s479 = sld [smem:[#allocation3 + $0x5]]
    %v480 = vstv %s479
    %v481 = vmul.f32 %v480, %v477
    %v482 = vmul.f32 %v480, %v478
    %v483 = vadd.f32 %v447, %v481
    %v484 = vadd.f32 %v448, %v482
    %s485 = sld [smem:[#allocation3 + $0x50]]
    %v486 = vstv %s485
    %v487 = vmul.f32 %v486, %v477
    %v488 = vmul.f32 %v486, %v478
    %v489 = vadd.f32 %v461, %v487
    %v490 = vadd.f32 %v462, %v488
    %s491 = sld [smem:[#allocation3 + $0x9b]]
    %v492 = vstv %s491
    %v493 = vmul.f32 %v492, %v477
    %v494 = vmul.f32 %v492, %v478
    %v495 = vadd.f32 %v475, %v493
    %v496 = vadd.f32 %v476, %v494
    %s497 = sld [smem:[#allocation3 + $0x6]]
    %v498 = vstv %s497
    %v499 = vmul.f32 %v498, %v477
    %v500 = vmul.f32 %v498, %v478
    %503 = vrot.lane.b32.xlu0 %v499, 127
    %v504 = vpop.permute.xlu0 %503
    %505 = vrot.lane.b32.xlu0 %v500, 127
    %v506 = vpop.permute.xlu0 %505
    %v509 = vadd.f32 %v483, %v504
    %v510 = vadd.f32 %v484, %v506
    %s511 = sld [smem:[#allocation3 + $0x51]]
    %v512 = vstv %s511
    %v513 = vmul.f32 %v512, %v477
    %v514 = vmul.f32 %v512, %v478
    %517 = vrot.lane.b32.xlu0 %v513, 127
    %v518 = vpop.permute.xlu0 %517
    %519 = vrot.lane.b32.xlu0 %v514, 127
    %v520 = vpop.permute.xlu0 %519
    %v523 = vadd.f32 %v489, %v518
    %v524 = vadd.f32 %v490, %v520
    %s525 = sld [smem:[#allocation3 + $0x9c]]
    %v526 = vstv %s525
    %v527 = vmul.f32 %v526, %v477
    %v528 = vmul.f32 %v526, %v478
    %531 = vrot.lane.b32.xlu0 %v527, 127
    %v532 = vpop.permute.xlu0 %531
    %533 = vrot.lane.b32.xlu0 %v528, 127
    %v534 = vpop.permute.xlu0 %533
    %v537 = vadd.f32 %v495, %v532
    %v538 = vadd.f32 %v496, %v534
    %s539 = sld [smem:[#allocation3 + $0x7]]
    %v540 = vstv %s539
    %v541 = vmul.f32 %v540, %v477
    %v542 = vmul.f32 %v540, %v478
    %545 = vrot.lane.b32.xlu0 %v541, 126
    %v546 = vpop.permute.xlu0 %545
    %547 = vrot.lane.b32.xlu0 %v542, 126
    %v548 = vpop.permute.xlu0 %547
    %v551 = vadd.f32 %v509, %v546
    %v552 = vadd.f32 %v510, %v548
    %s553 = sld [smem:[#allocation3 + $0x52]]
    %v554 = vstv %s553
    %v555 = vmul.f32 %v554, %v477
    %v556 = vmul.f32 %v554, %v478
    %559 = vrot.lane.b32.xlu0 %v555, 126
    %v560 = vpop.permute.xlu0 %559
    %561 = vrot.lane.b32.xlu0 %v556, 126
    %v562 = vpop.permute.xlu0 %561
    %v565 = vadd.f32 %v523, %v560
    %v566 = vadd.f32 %v524, %v562
    %s567 = sld [smem:[#allocation3 + $0x9d]]
    %v568 = vstv %s567
    %v569 = vmul.f32 %v568, %v477
    %v570 = vmul.f32 %v568, %v478
    %573 = vrot.lane.b32.xlu0 %v569, 126
    %v574 = vpop.permute.xlu0 %573
    %575 = vrot.lane.b32.xlu0 %v570, 126
    %v576 = vpop.permute.xlu0 %575
    %v579 = vadd.f32 %v537, %v574
    %v580 = vadd.f32 %v538, %v576
    %s581 = sld [smem:[#allocation3 + $0x8]]
    %v582 = vstv %s581
    %v583 = vmul.f32 %v582, %v477
    %v584 = vmul.f32 %v582, %v478
    %587 = vrot.lane.b32.xlu0 %v583, 125
    %v588 = vpop.permute.xlu0 %587
    %589 = vrot.lane.b32.xlu0 %v584, 125
    %v590 = vpop.permute.xlu0 %589
    %v593 = vadd.f32 %v551, %v588
    %v594 = vadd.f32 %v552, %v590
    %s595 = sld [smem:[#allocation3 + $0x53]]
    %v596 = vstv %s595
    %v597 = vmul.f32 %v596, %v477
    %v598 = vmul.f32 %v596, %v478
    %601 = vrot.lane.b32.xlu0 %v597, 125
    %v602 = vpop.permute.xlu0 %601
    %603 = vrot.lane.b32.xlu0 %v598, 125
    %v604 = vpop.permute.xlu0 %603
    %v607 = vadd.f32 %v565, %v602
    %v608 = vadd.f32 %v566, %v604
    %s609 = sld [smem:[#allocation3 + $0x9e]]
    %v610 = vstv %s609
    %v611 = vmul.f32 %v610, %v477
    %v612 = vmul.f32 %v610, %v478
    %615 = vrot.lane.b32.xlu0 %v611, 125
    %v616 = vpop.permute.xlu0 %615
    %617 = vrot.lane.b32.xlu0 %v612, 125
    %v618 = vpop.permute.xlu0 %617
    %v621 = vadd.f32 %v579, %v616
    %v622 = vadd.f32 %v580, %v618
    %s623 = sld [smem:[#allocation3 + $0x9]]
    %v624 = vstv %s623
    %v625 = vmul.f32 %v624, %v477
    %v626 = vmul.f32 %v624, %v478
    %629 = vrot.lane.b32.xlu0 %v625, 124
    %v630 = vpop.permute.xlu0 %629
    %631 = vrot.lane.b32.xlu0 %v626, 124
    %v632 = vpop.permute.xlu0 %631
    %v635 = vadd.f32 %v593, %v630
    %v636 = vadd.f32 %v594, %v632
    %s637 = sld [smem:[#allocation3 + $0x54]]
    %v638 = vstv %s637
    %v639 = vmul.f32 %v638, %v477
    %v640 = vmul.f32 %v638, %v478
    %643 = vrot.lane.b32.xlu0 %v639, 124
    %v644 = vpop.permute.xlu0 %643
    %645 = vrot.lane.b32.xlu0 %v640, 124
    %v646 = vpop.permute.xlu0 %645
    %v649 = vadd.f32 %v607, %v644
    %v650 = vadd.f32 %v608, %v646
    %s651 = sld [smem:[#allocation3 + $0x9f]]
    %v652 = vstv %s651
    %v653 = vmul.f32 %v652, %v477
    %v654 = vmul.f32 %v652, %v478
    %657 = vrot.lane.b32.xlu0 %v653, 124
    %v658 = vpop.permute.xlu0 %657
    %659 = vrot.lane.b32.xlu0 %v654, 124
    %v660 = vpop.permute.xlu0 %659
    %v663 = vadd.f32 %v621, %v658
    %v664 = vadd.f32 %v622, %v660
    %v665 = vld [vmem:[#allocation2 + $0x2] sm:$0xff]
    %v666 = vld [vmem:[#allocation2 + $0xa] sm:$0x3]
    %s667 = sld [smem:[#allocation3 + $0xa]]
    %v668 = vstv %s667
    %v669 = vmul.f32 %v668, %v665
    %v670 = vmul.f32 %v668, %v666
    %v671 = vadd.f32 %v635, %v669
    %v672 = vadd.f32 %v636, %v670
    %s673 = sld [smem:[#allocation3 + $0x55]]
    %v674 = vstv %s673
    %v675 = vmul.f32 %v674, %v665
    %v676 = vmul.f32 %v674, %v666
    %v677 = vadd.f32 %v649, %v675
    %v678 = vadd.f32 %v650, %v676
    %s679 = sld [smem:[#allocation3 + $0xa0]]
    %v680 = vstv %s679
    %v681 = vmul.f32 %v680, %v665
    %v682 = vmul.f32 %v680, %v666
    %v683 = vadd.f32 %v663, %v681
    %v684 = vadd.f32 %v664, %v682
    %s685 = sld [smem:[#allocation3 + $0xb]]
    %v686 = vstv %s685
    %v687 = vmul.f32 %v686, %v665
    %v688 = vmul.f32 %v686, %v666
    %691 = vrot.lane.b32.xlu0 %v687, 127
    %v692 = vpop.permute.xlu0 %691
    %693 = vrot.lane.b32.xlu0 %v688, 127
    %v694 = vpop.permute.xlu0 %693
    %v697 = vadd.f32 %v671, %v692
    %v698 = vadd.f32 %v672, %v694
    %s699 = sld [smem:[#allocation3 + $0x56]]
    %v700 = vstv %s699
    %v701 = vmul.f32 %v700, %v665
    %v702 = vmul.f32 %v700, %v666
    %705 = vrot.lane.b32.xlu0 %v701, 127
    %v706 = vpop.permute.xlu0 %705
    %707 = vrot.lane.b32.xlu0 %v702, 127
    %v708 = vpop.permute.xlu0 %707
    %v711 = vadd.f32 %v677, %v706
    %v712 = vadd.f32 %v678, %v708
    %s713 = sld [smem:[#allocation3 + $0xa1]]
    %v714 = vstv %s713
    %v715 = vmul.f32 %v714, %v665
    %v716 = vmul.f32 %v714, %v666
    %719 = vrot.lane.b32.xlu0 %v715, 127
    %v720 = vpop.permute.xlu0 %719
    %721 = vrot.lane.b32.xlu0 %v716, 127
    %v722 = vpop.permute.xlu0 %721
    %v725 = vadd.f32 %v683, %v720
    %v726 = vadd.f32 %v684, %v722
    %s727 = sld [smem:[#allocation3 + $0xc]]
    %v728 = vstv %s727
    %v729 = vmul.f32 %v728, %v665
    %v730 = vmul.f32 %v728, %v666
    %733 = vrot.lane.b32.xlu0 %v729, 126
    %v734 = vpop.permute.xlu0 %733
    %735 = vrot.lane.b32.xlu0 %v730, 126
    %v736 = vpop.permute.xlu0 %735
    %v739 = vadd.f32 %v697, %v734
    %v740 = vadd.f32 %v698, %v736
    %s741 = sld [smem:[#allocation3 + $0x57]]
    %v742 = vstv %s741
    %v743 = vmul.f32 %v742, %v665
    %v744 = vmul.f32 %v742, %v666
    %747 = vrot.lane.b32.xlu0 %v743, 126
    %v748 = vpop.permute.xlu0 %747
    %749 = vrot.lane.b32.xlu0 %v744, 126
    %v750 = vpop.permute.xlu0 %749
    %v753 = vadd.f32 %v711, %v748
    %v754 = vadd.f32 %v712, %v750
    %s755 = sld [smem:[#allocation3 + $0xa2]]
    %v756 = vstv %s755
    %v757 = vmul.f32 %v756, %v665
    %v758 = vmul.f32 %v756, %v666
    %761 = vrot.lane.b32.xlu0 %v757, 126
    %v762 = vpop.permute.xlu0 %761
    %763 = vrot.lane.b32.xlu0 %v758, 126
    %v764 = vpop.permute.xlu0 %763
    %v767 = vadd.f32 %v725, %v762
    %v768 = vadd.f32 %v726, %v764
    %s769 = sld [smem:[#allocation3 + $0xd]]
    %v770 = vstv %s769
    %v771 = vmul.f32 %v770, %v665
    %v772 = vmul.f32 %v770, %v666
    %775 = vrot.lane.b32.xlu0 %v771, 125
    %v776 = vpop.permute.xlu0 %775
    %777 = vrot.lane.b32.xlu0 %v772, 125
    %v778 = vpop.permute.xlu0 %777
    %v781 = vadd.f32 %v739, %v776
    %v782 = vadd.f32 %v740, %v778
    %s783 = sld [smem:[#allocation3 + $0x58]]
    %v784 = vstv %s783
    %v785 = vmul.f32 %v784, %v665
    %v786 = vmul.f32 %v784, %v666
    %789 = vrot.lane.b32.xlu0 %v785, 125
    %v790 = vpop.permute.xlu0 %789
    %791 = vrot.lane.b32.xlu0 %v786, 125
    %v792 = vpop.permute.xlu0 %791
    %v795 = vadd.f32 %v753, %v790
    %v796 = vadd.f32 %v754, %v792
    %s797 = sld [smem:[#allocation3 + $0xa3]]
    %v798 = vstv %s797
    %v799 = vmul.f32 %v798, %v665
    %v800 = vmul.f32 %v798, %v666
    %803 = vrot.lane.b32.xlu0 %v799, 125
    %v804 = vpop.permute.xlu0 %803
    %805 = vrot.lane.b32.xlu0 %v800, 125
    %v806 = vpop.permute.xlu0 %805
    %v809 = vadd.f32 %v767, %v804
    %v810 = vadd.f32 %v768, %v806
    %s811 = sld [smem:[#allocation3 + $0xe]]
    %v812 = vstv %s811
    %v813 = vmul.f32 %v812, %v665
    %v814 = vmul.f32 %v812, %v666
    %817 = vrot.lane.b32.xlu0 %v813, 124
    %v818 = vpop.permute.xlu0 %817
    %819 = vrot.lane.b32.xlu0 %v814, 124
    %v820 = vpop.permute.xlu0 %819
    %v823 = vadd.f32 %v781, %v818
    %v824 = vadd.f32 %v782, %v820
    %s825 = sld [smem:[#allocation3 + $0x59]]
    %v826 = vstv %s825
    %v827 = vmul.f32 %v826, %v665
    %v828 = vmul.f32 %v826, %v666
    %831 = vrot.lane.b32.xlu0 %v827, 124
    %v832 = vpop.permute.xlu0 %831
    %833 = vrot.lane.b32.xlu0 %v828, 124
    %v834 = vpop.permute.xlu0 %833
    %v837 = vadd.f32 %v795, %v832
    %v838 = vadd.f32 %v796, %v834
    %s839 = sld [smem:[#allocation3 + $0xa4]]
    %v840 = vstv %s839
    %v841 = vmul.f32 %v840, %v665
    %v842 = vmul.f32 %v840, %v666
    %845 = vrot.lane.b32.xlu0 %v841, 124
    %v846 = vpop.permute.xlu0 %845
    %847 = vrot.lane.b32.xlu0 %v842, 124
    %v848 = vpop.permute.xlu0 %847
    %v851 = vadd.f32 %v809, %v846
    %v852 = vadd.f32 %v810, %v848
    %v853 = vld [vmem:[#allocation2 + $0x3] sm:$0xff]
    %v854 = vld [vmem:[#allocation2 + $0xb] sm:$0x3]
    %s855 = sld [smem:[#allocation3 + $0xf]]
    %v856 = vstv %s855
    %v857 = vmul.f32 %v856, %v853
    %v858 = vmul.f32 %v856, %v854
    %v859 = vadd.f32 %v823, %v857
    %v860 = vadd.f32 %v824, %v858
    %s861 = sld [smem:[#allocation3 + $0x5a]]
    %v862 = vstv %s861
    %v863 = vmul.f32 %v862, %v853
    %v864 = vmul.f32 %v862, %v854
    %v865 = vadd.f32 %v837, %v863
    %v866 = vadd.f32 %v838, %v864
    %s867 = sld [smem:[#allocation3 + $0xa5]]
    %v868 = vstv %s867
    %v869 = vmul.f32 %v868, %v853
    %v870 = vmul.f32 %v868, %v854
    %v871 = vadd.f32 %v851, %v869
    %v872 = vadd.f32 %v852, %v870
    %s873 = sld [smem:[#allocation3 + $0x10]]
    %v874 = vstv %s873
    %v875 = vmul.f32 %v874, %v853
    %v876 = vmul.f32 %v874, %v854
    %879 = vrot.lane.b32.xlu0 %v875, 127
    %v880 = vpop.permute.xlu0 %879
    %881 = vrot.lane.b32.xlu0 %v876, 127
    %v882 = vpop.permute.xlu0 %881
    %v885 = vadd.f32 %v859, %v880
    %v886 = vadd.f32 %v860, %v882
    %s887 = sld [smem:[#allocation3 + $0x5b]]
    %v888 = vstv %s887
    %v889 = vmul.f32 %v888, %v853
    %v890 = vmul.f32 %v888, %v854
    %893 = vrot.lane.b32.xlu0 %v889, 127
    %v894 = vpop.permute.xlu0 %893
    %895 = vrot.lane.b32.xlu0 %v890, 127
    %v896 = vpop.permute.xlu0 %895
    %v899 = vadd.f32 %v865, %v894
    %v900 = vadd.f32 %v866, %v896
    %s901 = sld [smem:[#allocation3 + $0xa6]]
    %v902 = vstv %s901
    %v903 = vmul.f32 %v902, %v853
    %v904 = vmul.f32 %v902, %v854
    %907 = vrot.lane.b32.xlu0 %v903, 127
    %v908 = vpop.permute.xlu0 %907
    %909 = vrot.lane.b32.xlu0 %v904, 127
    %v910 = vpop.permute.xlu0 %909
    %v913 = vadd.f32 %v871, %v908
    %v914 = vadd.f32 %v872, %v910
    %s915 = sld [smem:[#allocation3 + $0x11]]
    %v916 = vstv %s915
    %v917 = vmul.f32 %v916, %v853
    %v918 = vmul.f32 %v916, %v854
    %921 = vrot.lane.b32.xlu0 %v917, 126
    %v922 = vpop.permute.xlu0 %921
    %923 = vrot.lane.b32.xlu0 %v918, 126
    %v924 = vpop.permute.xlu0 %923
    %v927 = vadd.f32 %v885, %v922
    %v928 = vadd.f32 %v886, %v924
    %s929 = sld [smem:[#allocation3 + $0x5c]]
    %v930 = vstv %s929
    %v931 = vmul.f32 %v930, %v853
    %v932 = vmul.f32 %v930, %v854
    %935 = vrot.lane.b32.xlu0 %v931, 126
    %v936 = vpop.permute.xlu0 %935
    %937 = vrot.lane.b32.xlu0 %v932, 126
    %v938 = vpop.permute.xlu0 %937
    %v941 = vadd.f32 %v899, %v936
    %v942 = vadd.f32 %v900, %v938
    %s943 = sld [smem:[#allocation3 + $0xa7]]
    %v944 = vstv %s943
    %v945 = vmul.f32 %v944, %v853
    %v946 = vmul.f32 %v944, %v854
    %949 = vrot.lane.b32.xlu0 %v945, 126
    %v950 = vpop.permute.xlu0 %949
    %951 = vrot.lane.b32.xlu0 %v946, 126
    %v952 = vpop.permute.xlu0 %951
    %v955 = vadd.f32 %v913, %v950
    %v956 = vadd.f32 %v914, %v952
    %s957 = sld [smem:[#allocation3 + $0x12]]
    %v958 = vstv %s957
    %v959 = vmul.f32 %v958, %v853
    %v960 = vmul.f32 %v958, %v854
    %963 = vrot.lane.b32.xlu0 %v959, 125
    %v964 = vpop.permute.xlu0 %963
    %965 = vrot.lane.b32.xlu0 %v960, 125
    %v966 = vpop.permute.xlu0 %965
    %v969 = vadd.f32 %v927, %v964
    %v970 = vadd.f32 %v928, %v966
    %s971 = sld [smem:[#allocation3 + $0x5d]]
    %v972 = vstv %s971
    %v973 = vmul.f32 %v972, %v853
    %v974 = vmul.f32 %v972, %v854
    %977 = vrot.lane.b32.xlu0 %v973, 125
    %v978 = vpop.permute.xlu0 %977
    %979 = vrot.lane.b32.xlu0 %v974, 125
    %v980 = vpop.permute.xlu0 %979
    %v983 = vadd.f32 %v941, %v978
    %v984 = vadd.f32 %v942, %v980
    %s985 = sld [smem:[#allocation3 + $0xa8]]
    %v986 = vstv %s985
    %v987 = vmul.f32 %v986, %v853
    %v988 = vmul.f32 %v986, %v854
    %991 = vrot.lane.b32.xlu0 %v987, 125
    %v992 = vpop.permute.xlu0 %991
    %993 = vrot.lane.b32.xlu0 %v988, 125
    %v994 = vpop.permute.xlu0 %993
    %v997 = vadd.f32 %v955, %v992
    %v998 = vadd.f32 %v956, %v994
    %s999 = sld [smem:[#allocation3 + $0x13]]
    %v1000 = vstv %s999
    %v1001 = vmul.f32 %v1000, %v853
    %v1002 = vmul.f32 %v1000, %v854
    %1005 = vrot.lane.b32.xlu0 %v1001, 124
    %v1006 = vpop.permute.xlu0 %1005
    %1007 = vrot.lane.b32.xlu0 %v1002, 124
    %v1008 = vpop.permute.xlu0 %1007
    %v1011 = vadd.f32 %v969, %v1006
    %v1012 = vadd.f32 %v970, %v1008
    %s1013 = sld [smem:[#allocation3 + $0x5e]]
    %v1014 = vstv %s1013
    %v1015 = vmul.f32 %v1014, %v853
    %v1016 = vmul.f32 %v1014, %v854
    %1019 = vrot.lane.b32.xlu0 %v1015, 124
    %v1020 = vpop.permute.xlu0 %1019
    %1021 = vrot.lane.b32.xlu0 %v1016, 124
    %v1022 = vpop.permute.xlu0 %1021
    %v1025 = vadd.f32 %v983, %v1020
    %v1026 = vadd.f32 %v984, %v1022
    %s1027 = sld [smem:[#allocation3 + $0xa9]]
    %v1028 = vstv %s1027
    %v1029 = vmul.f32 %v1028, %v853
    %v1030 = vmul.f32 %v1028, %v854
    %1033 = vrot.lane.b32.xlu0 %v1029, 124
    %v1034 = vpop.permute.xlu0 %1033
    %1035 = vrot.lane.b32.xlu0 %v1030, 124
    %v1036 = vpop.permute.xlu0 %1035
    %v1039 = vadd.f32 %v997, %v1034
    %v1040 = vadd.f32 %v998, %v1036
    %v1041 = vld [vmem:[#allocation2 + $0x4] sm:$0xff]
    %v1042 = vld [vmem:[#allocation2 + $0xc] sm:$0x3]
    %s1043 = sld [smem:[#allocation3 + $0x14]]
    %v1044 = vstv %s1043
    %v1045 = vmul.f32 %v1044, %v1041
    %v1046 = vmul.f32 %v1044, %v1042
    %v1047 = vadd.f32 %v1011, %v1045
    %v1048 = vadd.f32 %v1012, %v1046
    %s1049 = sld [smem:[#allocation3 + $0x5f]]
    %v1050 = vstv %s1049
    %v1051 = vmul.f32 %v1050, %v1041
    %v1052 = vmul.f32 %v1050, %v1042
    %v1053 = vadd.f32 %v1025, %v1051
    %v1054 = vadd.f32 %v1026, %v1052
    %s1055 = sld [smem:[#allocation3 + $0xaa]]
    %v1056 = vstv %s1055
    %v1057 = vmul.f32 %v1056, %v1041
    %v1058 = vmul.f32 %v1056, %v1042
    %v1059 = vadd.f32 %v1039, %v1057
    %v1060 = vadd.f32 %v1040, %v1058
    %s1061 = sld [smem:[#allocation3 + $0x15]]
    %v1062 = vstv %s1061
    %v1063 = vmul.f32 %v1062, %v1041
    %v1064 = vmul.f32 %v1062, %v1042
    %1067 = vrot.lane.b32.xlu0 %v1063, 127
    %v1068 = vpop.permute.xlu0 %1067
    %1069 = vrot.lane.b32.xlu0 %v1064, 127
    %v1070 = vpop.permute.xlu0 %1069
    %v1073 = vadd.f32 %v1047, %v1068
    %v1074 = vadd.f32 %v1048, %v1070
    %s1075 = sld [smem:[#allocation3 + $0x60]]
    %v1076 = vstv %s1075
    %v1077 = vmul.f32 %v1076, %v1041
    %v1078 = vmul.f32 %v1076, %v1042
    %1081 = vrot.lane.b32.xlu0 %v1077, 127
    %v1082 = vpop.permute.xlu0 %1081
    %1083 = vrot.lane.b32.xlu0 %v1078, 127
    %v1084 = vpop.permute.xlu0 %1083
    %v1087 = vadd.f32 %v1053, %v1082
    %v1088 = vadd.f32 %v1054, %v1084
    %s1089 = sld [smem:[#allocation3 + $0xab]]
    %v1090 = vstv %s1089
    %v1091 = vmul.f32 %v1090, %v1041
    %v1092 = vmul.f32 %v1090, %v1042
    %1095 = vrot.lane.b32.xlu0 %v1091, 127
    %v1096 = vpop.permute.xlu0 %1095
    %1097 = vrot.lane.b32.xlu0 %v1092, 127
    %v1098 = vpop.permute.xlu0 %1097
    %v1101 = vadd.f32 %v1059, %v1096
    %v1102 = vadd.f32 %v1060, %v1098
    %s1103 = sld [smem:[#allocation3 + $0x16]]
    %v1104 = vstv %s1103
    %v1105 = vmul.f32 %v1104, %v1041
    %v1106 = vmul.f32 %v1104, %v1042
    %1109 = vrot.lane.b32.xlu0 %v1105, 126
    %v1110 = vpop.permute.xlu0 %1109
    %1111 = vrot.lane.b32.xlu0 %v1106, 126
    %v1112 = vpop.permute.xlu0 %1111
    %v1115 = vadd.f32 %v1073, %v1110
    %v1116 = vadd.f32 %v1074, %v1112
    %s1117 = sld [smem:[#allocation3 + $0x61]]
    %v1118 = vstv %s1117
    %v1119 = vmul.f32 %v1118, %v1041
    %v1120 = vmul.f32 %v1118, %v1042
    %1123 = vrot.lane.b32.xlu0 %v1119, 126
    %v1124 = vpop.permute.xlu0 %1123
    %1125 = vrot.lane.b32.xlu0 %v1120, 126
    %v1126 = vpop.permute.xlu0 %1125
    %v1129 = vadd.f32 %v1087, %v1124
    %v1130 = vadd.f32 %v1088, %v1126
    %s1131 = sld [smem:[#allocation3 + $0xac]]
    %v1132 = vstv %s1131
    %v1133 = vmul.f32 %v1132, %v1041
    %v1134 = vmul.f32 %v1132, %v1042
    %1137 = vrot.lane.b32.xlu0 %v1133, 126
    %v1138 = vpop.permute.xlu0 %1137
    %1139 = vrot.lane.b32.xlu0 %v1134, 126
    %v1140 = vpop.permute.xlu0 %1139
    %v1143 = vadd.f32 %v1101, %v1138
    %v1144 = vadd.f32 %v1102, %v1140
    %s1145 = sld [smem:[#allocation3 + $0x17]]
    %v1146 = vstv %s1145
    %v1147 = vmul.f32 %v1146, %v1041
    %v1148 = vmul.f32 %v1146, %v1042
    %1151 = vrot.lane.b32.xlu0 %v1147, 125
    %v1152 = vpop.permute.xlu0 %1151
    %1153 = vrot.lane.b32.xlu0 %v1148, 125
    %v1154 = vpop.permute.xlu0 %1153
    %v1157 = vadd.f32 %v1115, %v1152
    %v1158 = vadd.f32 %v1116, %v1154
    %s1159 = sld [smem:[#allocation3 + $0x62]]
    %v1160 = vstv %s1159
    %v1161 = vmul.f32 %v1160, %v1041
    %v1162 = vmul.f32 %v1160, %v1042
    %1165 = vrot.lane.b32.xlu0 %v1161, 125
    %v1166 = vpop.permute.xlu0 %1165
    %1167 = vrot.lane.b32.xlu0 %v1162, 125
    %v1168 = vpop.permute.xlu0 %1167
    %v1171 = vadd.f32 %v1129, %v1166
    %v1172 = vadd.f32 %v1130, %v1168
    %s1173 = sld [smem:[#allocation3 + $0xad]]
    %v1174 = vstv %s1173
    %v1175 = vmul.f32 %v1174, %v1041
    %v1176 = vmul.f32 %v1174, %v1042
    %1179 = vrot.lane.b32.xlu0 %v1175, 125
    %v1180 = vpop.permute.xlu0 %1179
    %1181 = vrot.lane.b32.xlu0 %v1176, 125
    %v1182 = vpop.permute.xlu0 %1181
    %v1185 = vadd.f32 %v1143, %v1180
    %v1186 = vadd.f32 %v1144, %v1182
    %s1187 = sld [smem:[#allocation3 + $0x18]]
    %v1188 = vstv %s1187
    %v1189 = vmul.f32 %v1188, %v1041
    %v1190 = vmul.f32 %v1188, %v1042
    %1193 = vrot.lane.b32.xlu0 %v1189, 124
    %v1194 = vpop.permute.xlu0 %1193
    %1195 = vrot.lane.b32.xlu0 %v1190, 124
    %v1196 = vpop.permute.xlu0 %1195
    %v1199 = vadd.f32 %v1157, %v1194
    %v1200 = vadd.f32 %v1158, %v1196
    %s1201 = sld [smem:[#allocation3 + $0x63]]
    %v1202 = vstv %s1201
    %v1203 = vmul.f32 %v1202, %v1041
    %v1204 = vmul.f32 %v1202, %v1042
    %1207 = vrot.lane.b32.xlu0 %v1203, 124
    %v1208 = vpop.permute.xlu0 %1207
    %1209 = vrot.lane.b32.xlu0 %v1204, 124
    %v1210 = vpop.permute.xlu0 %1209
    %v1213 = vadd.f32 %v1171, %v1208
    %v1214 = vadd.f32 %v1172, %v1210
    %s1215 = sld [smem:[#allocation3 + $0xae]]
    %v1216 = vstv %s1215
    %v1217 = vmul.f32 %v1216, %v1041
    %v1218 = vmul.f32 %v1216, %v1042
    %1221 = vrot.lane.b32.xlu0 %v1217, 124
    %v1222 = vpop.permute.xlu0 %1221
    %1223 = vrot.lane.b32.xlu0 %v1218, 124
    %v1224 = vpop.permute.xlu0 %1223
    %v1227 = vadd.f32 %v1185, %v1222
    %v1228 = vadd.f32 %v1186, %v1224
    %v1229 = vld [vmem:[#allocation2 + $0xe] sm:$0xff]
    %v1230 = vld [vmem:[#allocation2 + $0x16] sm:$0x3]
    %s1231 = sld [smem:[#allocation3 + $0x19]]
    %v1232 = vstv %s1231
    %v1233 = vmul.f32 %v1232, %v1229
    %v1234 = vmul.f32 %v1232, %v1230
    %v1235 = vadd.f32 %v1199, %v1233
    %v1236 = vadd.f32 %v1200, %v1234
    %s1237 = sld [smem:[#allocation3 + $0x64]]
    %v1238 = vstv %s1237
    %v1239 = vmul.f32 %v1238, %v1229
    %v1240 = vmul.f32 %v1238, %v1230
    %v1241 = vadd.f32 %v1213, %v1239
    %v1242 = vadd.f32 %v1214, %v1240
    %s1243 = sld [smem:[#allocation3 + $0xaf]]
    %v1244 = vstv %s1243
    %v1245 = vmul.f32 %v1244, %v1229
    %v1246 = vmul.f32 %v1244, %v1230
    %v1247 = vadd.f32 %v1227, %v1245
    %v1248 = vadd.f32 %v1228, %v1246
    %s1249 = sld [smem:[#allocation3 + $0x1a]]
    %v1250 = vstv %s1249
    %v1251 = vmul.f32 %v1250, %v1229
    %v1252 = vmul.f32 %v1250, %v1230
    %1255 = vrot.lane.b32.xlu0 %v1251, 127
    %v1256 = vpop.permute.xlu0 %1255
    %1257 = vrot.lane.b32.xlu0 %v1252, 127
    %v1258 = vpop.permute.xlu0 %1257
    %v1261 = vadd.f32 %v1235, %v1256
    %v1262 = vadd.f32 %v1236, %v1258
    %s1263 = sld [smem:[#allocation3 + $0x65]]
    %v1264 = vstv %s1263
    %v1265 = vmul.f32 %v1264, %v1229
    %v1266 = vmul.f32 %v1264, %v1230
    %1269 = vrot.lane.b32.xlu0 %v1265, 127
    %v1270 = vpop.permute.xlu0 %1269
    %1271 = vrot.lane.b32.xlu0 %v1266, 127
    %v1272 = vpop.permute.xlu0 %1271
    %v1275 = vadd.f32 %v1241, %v1270
    %v1276 = vadd.f32 %v1242, %v1272
    %s1277 = sld [smem:[#allocation3 + $0xb0]]
    %v1278 = vstv %s1277
    %v1279 = vmul.f32 %v1278, %v1229
    %v1280 = vmul.f32 %v1278, %v1230
    %1283 = vrot.lane.b32.xlu0 %v1279, 127
    %v1284 = vpop.permute.xlu0 %1283
    %1285 = vrot.lane.b32.xlu0 %v1280, 127
    %v1286 = vpop.permute.xlu0 %1285
    %v1289 = vadd.f32 %v1247, %v1284
    %v1290 = vadd.f32 %v1248, %v1286
    %s1291 = sld [smem:[#allocation3 + $0x1b]]
    %v1292 = vstv %s1291
    %v1293 = vmul.f32 %v1292, %v1229
    %v1294 = vmul.f32 %v1292, %v1230
    %1297 = vrot.lane.b32.xlu0 %v1293, 126
    %v1298 = vpop.permute.xlu0 %1297
    %1299 = vrot.lane.b32.xlu0 %v1294, 126
    %v1300 = vpop.permute.xlu0 %1299
    %v1303 = vadd.f32 %v1261, %v1298
    %v1304 = vadd.f32 %v1262, %v1300
    %s1305 = sld [smem:[#allocation3 + $0x66]]
    %v1306 = vstv %s1305
    %v1307 = vmul.f32 %v1306, %v1229
    %v1308 = vmul.f32 %v1306, %v1230
    %1311 = vrot.lane.b32.xlu0 %v1307, 126
    %v1312 = vpop.permute.xlu0 %1311
    %1313 = vrot.lane.b32.xlu0 %v1308, 126
    %v1314 = vpop.permute.xlu0 %1313
    %v1317 = vadd.f32 %v1275, %v1312
    %v1318 = vadd.f32 %v1276, %v1314
    %s1319 = sld [smem:[#allocation3 + $0xb1]]
    %v1320 = vstv %s1319
    %v1321 = vmul.f32 %v1320, %v1229
    %v1322 = vmul.f32 %v1320, %v1230
    %1325 = vrot.lane.b32.xlu0 %v1321, 126
    %v1326 = vpop.permute.xlu0 %1325
    %1327 = vrot.lane.b32.xlu0 %v1322, 126
    %v1328 = vpop.permute.xlu0 %1327
    %v1331 = vadd.f32 %v1289, %v1326
    %v1332 = vadd.f32 %v1290, %v1328
    %s1333 = sld [smem:[#allocation3 + $0x1c]]
    %v1334 = vstv %s1333
    %v1335 = vmul.f32 %v1334, %v1229
    %v1336 = vmul.f32 %v1334, %v1230
    %1339 = vrot.lane.b32.xlu0 %v1335, 125
    %v1340 = vpop.permute.xlu0 %1339
    %1341 = vrot.lane.b32.xlu0 %v1336, 125
    %v1342 = vpop.permute.xlu0 %1341
    %v1345 = vadd.f32 %v1303, %v1340
    %v1346 = vadd.f32 %v1304, %v1342
    %s1347 = sld [smem:[#allocation3 + $0x67]]
    %v1348 = vstv %s1347
    %v1349 = vmul.f32 %v1348, %v1229
    %v1350 = vmul.f32 %v1348, %v1230
    %1353 = vrot.lane.b32.xlu0 %v1349, 125
    %v1354 = vpop.permute.xlu0 %1353
    %1355 = vrot.lane.b32.xlu0 %v1350, 125
    %v1356 = vpop.permute.xlu0 %1355
    %v1359 = vadd.f32 %v1317, %v1354
    %v1360 = vadd.f32 %v1318, %v1356
    %s1361 = sld [smem:[#allocation3 + $0xb2]]
    %v1362 = vstv %s1361
    %v1363 = vmul.f32 %v1362, %v1229
    %v1364 = vmul.f32 %v1362, %v1230
    %1367 = vrot.lane.b32.xlu0 %v1363, 125
    %v1368 = vpop.permute.xlu0 %1367
    %1369 = vrot.lane.b32.xlu0 %v1364, 125
    %v1370 = vpop.permute.xlu0 %1369
    %v1373 = vadd.f32 %v1331, %v1368
    %v1374 = vadd.f32 %v1332, %v1370
    %s1375 = sld [smem:[#allocation3 + $0x1d]]
    %v1376 = vstv %s1375
    %v1377 = vmul.f32 %v1376, %v1229
    %v1378 = vmul.f32 %v1376, %v1230
    %1381 = vrot.lane.b32.xlu0 %v1377, 124
    %v1382 = vpop.permute.xlu0 %1381
    %1383 = vrot.lane.b32.xlu0 %v1378, 124
    %v1384 = vpop.permute.xlu0 %1383
    %v1387 = vadd.f32 %v1345, %v1382
    %v1388 = vadd.f32 %v1346, %v1384
    %s1389 = sld [smem:[#allocation3 + $0x68]]
    %v1390 = vstv %s1389
    %v1391 = vmul.f32 %v1390, %v1229
    %v1392 = vmul.f32 %v1390, %v1230
    %1395 = vrot.lane.b32.xlu0 %v1391, 124
    %v1396 = vpop.permute.xlu0 %1395
    %1397 = vrot.lane.b32.xlu0 %v1392, 124
    %v1398 = vpop.permute.xlu0 %1397
    %v1401 = vadd.f32 %v1359, %v1396
    %v1402 = vadd.f32 %v1360, %v1398
    %s1403 = sld [smem:[#allocation3 + $0xb3]]
    %v1404 = vstv %s1403
    %v1405 = vmul.f32 %v1404, %v1229
    %v1406 = vmul.f32 %v1404, %v1230
    %1409 = vrot.lane.b32.xlu0 %v1405, 124
    %v1410 = vpop.permute.xlu0 %1409
    %1411 = vrot.lane.b32.xlu0 %v1406, 124
    %v1412 = vpop.permute.xlu0 %1411
    %v1415 = vadd.f32 %v1373, %v1410
    %v1416 = vadd.f32 %v1374, %v1412
    %v1417 = vld [vmem:[#allocation2 + $0xf] sm:$0xff]
    %v1418 = vld [vmem:[#allocation2 + $0x17] sm:$0x3]
    %s1419 = sld [smem:[#allocation3 + $0x1e]]
    %v1420 = vstv %s1419
    %v1421 = vmul.f32 %v1420, %v1417
    %v1422 = vmul.f32 %v1420, %v1418
    %v1423 = vadd.f32 %v1387, %v1421
    %v1424 = vadd.f32 %v1388, %v1422
    %s1425 = sld [smem:[#allocation3 + $0x69]]
    %v1426 = vstv %s1425
    %v1427 = vmul.f32 %v1426, %v1417
    %v1428 = vmul.f32 %v1426, %v1418
    %v1429 = vadd.f32 %v1401, %v1427
    %v1430 = vadd.f32 %v1402, %v1428
    %s1431 = sld [smem:[#allocation3 + $0xb4]]
    %v1432 = vstv %s1431
    %v1433 = vmul.f32 %v1432, %v1417
    %v1434 = vmul.f32 %v1432, %v1418
    %v1435 = vadd.f32 %v1415, %v1433
    %v1436 = vadd.f32 %v1416, %v1434
    %s1437 = sld [smem:[#allocation3 + $0x1f]]
    %v1438 = vstv %s1437
    %v1439 = vmul.f32 %v1438, %v1417
    %v1440 = vmul.f32 %v1438, %v1418
    %1443 = vrot.lane.b32.xlu0 %v1439, 127
    %v1444 = vpop.permute.xlu0 %1443
    %1445 = vrot.lane.b32.xlu0 %v1440, 127
    %v1446 = vpop.permute.xlu0 %1445
    %v1449 = vadd.f32 %v1423, %v1444
    %v1450 = vadd.f32 %v1424, %v1446
    %s1451 = sld [smem:[#allocation3 + $0x6a]]
    %v1452 = vstv %s1451
    %v1453 = vmul.f32 %v1452, %v1417
    %v1454 = vmul.f32 %v1452, %v1418
    %1457 = vrot.lane.b32.xlu0 %v1453, 127
    %v1458 = vpop.permute.xlu0 %1457
    %1459 = vrot.lane.b32.xlu0 %v1454, 127
    %v1460 = vpop.permute.xlu0 %1459
    %v1463 = vadd.f32 %v1429, %v1458
    %v1464 = vadd.f32 %v1430, %v1460
    %s1465 = sld [smem:[#allocation3 + $0xb5]]
    %v1466 = vstv %s1465
    %v1467 = vmul.f32 %v1466, %v1417
    %v1468 = vmul.f32 %v1466, %v1418
    %1471 = vrot.lane.b32.xlu0 %v1467, 127
    %v1472 = vpop.permute.xlu0 %1471
    %1473 = vrot.lane.b32.xlu0 %v1468, 127
    %v1474 = vpop.permute.xlu0 %1473
    %v1477 = vadd.f32 %v1435, %v1472
    %v1478 = vadd.f32 %v1436, %v1474
    %s1479 = sld [smem:[#allocation3 + $0x20]]
    %v1480 = vstv %s1479
    %v1481 = vmul.f32 %v1480, %v1417
    %v1482 = vmul.f32 %v1480, %v1418
    %1485 = vrot.lane.b32.xlu0 %v1481, 126
    %v1486 = vpop.permute.xlu0 %1485
    %1487 = vrot.lane.b32.xlu0 %v1482, 126
    %v1488 = vpop.permute.xlu0 %1487
    %v1491 = vadd.f32 %v1449, %v1486
    %v1492 = vadd.f32 %v1450, %v1488
    %s1493 = sld [smem:[#allocation3 + $0x6b]]
    %v1494 = vstv %s1493
    %v1495 = vmul.f32 %v1494, %v1417
    %v1496 = vmul.f32 %v1494, %v1418
    %1499 = vrot.lane.b32.xlu0 %v1495, 126
    %v1500 = vpop.permute.xlu0 %1499
    %1501 = vrot.lane.b32.xlu0 %v1496, 126
    %v1502 = vpop.permute.xlu0 %1501
    %v1505 = vadd.f32 %v1463, %v1500
    %v1506 = vadd.f32 %v1464, %v1502
    %s1507 = sld [smem:[#allocation3 + $0xb6]]
    %v1508 = vstv %s1507
    %v1509 = vmul.f32 %v1508, %v1417
    %v1510 = vmul.f32 %v1508, %v1418
    %1513 = vrot.lane.b32.xlu0 %v1509, 126
    %v1514 = vpop.permute.xlu0 %1513
    %1515 = vrot.lane.b32.xlu0 %v1510, 126
    %v1516 = vpop.permute.xlu0 %1515
    %v1519 = vadd.f32 %v1477, %v1514
    %v1520 = vadd.f32 %v1478, %v1516
    %s1521 = sld [smem:[#allocation3 + $0x21]]
    %v1522 = vstv %s1521
    %v1523 = vmul.f32 %v1522, %v1417
    %v1524 = vmul.f32 %v1522, %v1418
    %1527 = vrot.lane.b32.xlu0 %v1523, 125
    %v1528 = vpop.permute.xlu0 %1527
    %1529 = vrot.lane.b32.xlu0 %v1524, 125
    %v1530 = vpop.permute.xlu0 %1529
    %v1533 = vadd.f32 %v1491, %v1528
    %v1534 = vadd.f32 %v1492, %v1530
    %s1535 = sld [smem:[#allocation3 + $0x6c]]
    %v1536 = vstv %s1535
    %v1537 = vmul.f32 %v1536, %v1417
    %v1538 = vmul.f32 %v1536, %v1418
    %1541 = vrot.lane.b32.xlu0 %v1537, 125
    %v1542 = vpop.permute.xlu0 %1541
    %1543 = vrot.lane.b32.xlu0 %v1538, 125
    %v1544 = vpop.permute.xlu0 %1543
    %v1547 = vadd.f32 %v1505, %v1542
    %v1548 = vadd.f32 %v1506, %v1544
    %s1549 = sld [smem:[#allocation3 + $0xb7]]
    %v1550 = vstv %s1549
    %v1551 = vmul.f32 %v1550, %v1417
    %v1552 = vmul.f32 %v1550, %v1418
    %1555 = vrot.lane.b32.xlu0 %v1551, 125
    %v1556 = vpop.permute.xlu0 %1555
    %1557 = vrot.lane.b32.xlu0 %v1552, 125
    %v1558 = vpop.permute.xlu0 %1557
    %v1561 = vadd.f32 %v1519, %v1556
    %v1562 = vadd.f32 %v1520, %v1558
    %s1563 = sld [smem:[#allocation3 + $0x22]]
    %v1564 = vstv %s1563
    %v1565 = vmul.f32 %v1564, %v1417
    %v1566 = vmul.f32 %v1564, %v1418
    %1569 = vrot.lane.b32.xlu0 %v1565, 124
    %v1570 = vpop.permute.xlu0 %1569
    %1571 = vrot.lane.b32.xlu0 %v1566, 124
    %v1572 = vpop.permute.xlu0 %1571
    %v1575 = vadd.f32 %v1533, %v1570
    %v1576 = vadd.f32 %v1534, %v1572
    %s1577 = sld [smem:[#allocation3 + $0x6d]]
    %v1578 = vstv %s1577
    %v1579 = vmul.f32 %v1578, %v1417
    %v1580 = vmul.f32 %v1578, %v1418
    %1583 = vrot.lane.b32.xlu0 %v1579, 124
    %v1584 = vpop.permute.xlu0 %1583
    %1585 = vrot.lane.b32.xlu0 %v1580, 124
    %v1586 = vpop.permute.xlu0 %1585
    %v1589 = vadd.f32 %v1547, %v1584
    %v1590 = vadd.f32 %v1548, %v1586
    %s1591 = sld [smem:[#allocation3 + $0xb8]]
    %v1592 = vstv %s1591
    %v1593 = vmul.f32 %v1592, %v1417
    %v1594 = vmul.f32 %v1592, %v1418
    %1597 = vrot.lane.b32.xlu0 %v1593, 124
    %v1598 = vpop.permute.xlu0 %1597
    %1599 = vrot.lane.b32.xlu0 %v1594, 124
    %v1600 = vpop.permute.xlu0 %1599
    %v1603 = vadd.f32 %v1561, %v1598
    %v1604 = vadd.f32 %v1562, %v1600
    %v1605 = vld [vmem:[#allocation2 + $0x10] sm:$0xff]
    %v1606 = vld [vmem:[#allocation2 + $0x18] sm:$0x3]
    %s1607 = sld [smem:[#allocation3 + $0x23]]
    %v1608 = vstv %s1607
    %v1609 = vmul.f32 %v1608, %v1605
    %v1610 = vmul.f32 %v1608, %v1606
    %v1611 = vadd.f32 %v1575, %v1609
    %v1612 = vadd.f32 %v1576, %v1610
    %s1613 = sld [smem:[#allocation3 + $0x6e]]
    %v1614 = vstv %s1613
    %v1615 = vmul.f32 %v1614, %v1605
    %v1616 = vmul.f32 %v1614, %v1606
    %v1617 = vadd.f32 %v1589, %v1615
    %v1618 = vadd.f32 %v1590, %v1616
    %s1619 = sld [smem:[#allocation3 + $0xb9]]
    %v1620 = vstv %s1619
    %v1621 = vmul.f32 %v1620, %v1605
    %v1622 = vmul.f32 %v1620, %v1606
    %v1623 = vadd.f32 %v1603, %v1621
    %v1624 = vadd.f32 %v1604, %v1622
    %s1625 = sld [smem:[#allocation3 + $0x24]]
    %v1626 = vstv %s1625
    %v1627 = vmul.f32 %v1626, %v1605
    %v1628 = vmul.f32 %v1626, %v1606
    %1631 = vrot.lane.b32.xlu0 %v1627, 127
    %v1632 = vpop.permute.xlu0 %1631
    %1633 = vrot.lane.b32.xlu0 %v1628, 127
    %v1634 = vpop.permute.xlu0 %1633
    %v1637 = vadd.f32 %v1611, %v1632
    %v1638 = vadd.f32 %v1612, %v1634
    %s1639 = sld [smem:[#allocation3 + $0x6f]]
    %v1640 = vstv %s1639
    %v1641 = vmul.f32 %v1640, %v1605
    %v1642 = vmul.f32 %v1640, %v1606
    %1645 = vrot.lane.b32.xlu0 %v1641, 127
    %v1646 = vpop.permute.xlu0 %1645
    %1647 = vrot.lane.b32.xlu0 %v1642, 127
    %v1648 = vpop.permute.xlu0 %1647
    %v1651 = vadd.f32 %v1617, %v1646
    %v1652 = vadd.f32 %v1618, %v1648
    %s1653 = sld [smem:[#allocation3 + $0xba]]
    %v1654 = vstv %s1653
    %v1655 = vmul.f32 %v1654, %v1605
    %v1656 = vmul.f32 %v1654, %v1606
    %1659 = vrot.lane.b32.xlu0 %v1655, 127
    %v1660 = vpop.permute.xlu0 %1659
    %1661 = vrot.lane.b32.xlu0 %v1656, 127
    %v1662 = vpop.permute.xlu0 %1661
    %v1665 = vadd.f32 %v1623, %v1660
    %v1666 = vadd.f32 %v1624, %v1662
    %s1667 = sld [smem:[#allocation3 + $0x25]]
    %v1668 = vstv %s1667
    %v1669 = vmul.f32 %v1668, %v1605
    %v1670 = vmul.f32 %v1668, %v1606
    %1673 = vrot.lane.b32.xlu0 %v1669, 126
    %v1674 = vpop.permute.xlu0 %1673
    %1675 = vrot.lane.b32.xlu0 %v1670, 126
    %v1676 = vpop.permute.xlu0 %1675
    %v1679 = vadd.f32 %v1637, %v1674
    %v1680 = vadd.f32 %v1638, %v1676
    %s1681 = sld [smem:[#allocation3 + $0x70]]
    %v1682 = vstv %s1681
    %v1683 = vmul.f32 %v1682, %v1605
    %v1684 = vmul.f32 %v1682, %v1606
    %1687 = vrot.lane.b32.xlu0 %v1683, 126
    %v1688 = vpop.permute.xlu0 %1687
    %1689 = vrot.lane.b32.xlu0 %v1684, 126
    %v1690 = vpop.permute.xlu0 %1689
    %v1693 = vadd.f32 %v1651, %v1688
    %v1694 = vadd.f32 %v1652, %v1690
    %s1695 = sld [smem:[#allocation3 + $0xbb]]
    %v1696 = vstv %s1695
    %v1697 = vmul.f32 %v1696, %v1605
    %v1698 = vmul.f32 %v1696, %v1606
    %1701 = vrot.lane.b32.xlu0 %v1697, 126
    %v1702 = vpop.permute.xlu0 %1701
    %1703 = vrot.lane.b32.xlu0 %v1698, 126
    %v1704 = vpop.permute.xlu0 %1703
    %v1707 = vadd.f32 %v1665, %v1702
    %v1708 = vadd.f32 %v1666, %v1704
    %s1709 = sld [smem:[#allocation3 + $0x26]]
    %v1710 = vstv %s1709
    %v1711 = vmul.f32 %v1710, %v1605
    %v1712 = vmul.f32 %v1710, %v1606
    %1715 = vrot.lane.b32.xlu0 %v1711, 125
    %v1716 = vpop.permute.xlu0 %1715
    %1717 = vrot.lane.b32.xlu0 %v1712, 125
    %v1718 = vpop.permute.xlu0 %1717
    %v1721 = vadd.f32 %v1679, %v1716
    %v1722 = vadd.f32 %v1680, %v1718
    %s1723 = sld [smem:[#allocation3 + $0x71]]
    %v1724 = vstv %s1723
    %v1725 = vmul.f32 %v1724, %v1605
    %v1726 = vmul.f32 %v1724, %v1606
    %1729 = vrot.lane.b32.xlu0 %v1725, 125
    %v1730 = vpop.permute.xlu0 %1729
    %1731 = vrot.lane.b32.xlu0 %v1726, 125
    %v1732 = vpop.permute.xlu0 %1731
    %v1735 = vadd.f32 %v1693, %v1730
    %v1736 = vadd.f32 %v1694, %v1732
    %s1737 = sld [smem:[#allocation3 + $0xbc]]
    %v1738 = vstv %s1737
    %v1739 = vmul.f32 %v1738, %v1605
    %v1740 = vmul.f32 %v1738, %v1606
    %1743 = vrot.lane.b32.xlu0 %v1739, 125
    %v1744 = vpop.permute.xlu0 %1743
    %1745 = vrot.lane.b32.xlu0 %v1740, 125
    %v1746 = vpop.permute.xlu0 %1745
    %v1749 = vadd.f32 %v1707, %v1744
    %v1750 = vadd.f32 %v1708, %v1746
    %s1751 = sld [smem:[#allocation3 + $0x27]]
    %v1752 = vstv %s1751
    %v1753 = vmul.f32 %v1752, %v1605
    %v1754 = vmul.f32 %v1752, %v1606
    %1757 = vrot.lane.b32.xlu0 %v1753, 124
    %v1758 = vpop.permute.xlu0 %1757
    %1759 = vrot.lane.b32.xlu0 %v1754, 124
    %v1760 = vpop.permute.xlu0 %1759
    %v1763 = vadd.f32 %v1721, %v1758
    %v1764 = vadd.f32 %v1722, %v1760
    %s1765 = sld [smem:[#allocation3 + $0x72]]
    %v1766 = vstv %s1765
    %v1767 = vmul.f32 %v1766, %v1605
    %v1768 = vmul.f32 %v1766, %v1606
    %1771 = vrot.lane.b32.xlu0 %v1767, 124
    %v1772 = vpop.permute.xlu0 %1771
    %1773 = vrot.lane.b32.xlu0 %v1768, 124
    %v1774 = vpop.permute.xlu0 %1773
    %v1777 = vadd.f32 %v1735, %v1772
    %v1778 = vadd.f32 %v1736, %v1774
    %s1779 = sld [smem:[#allocation3 + $0xbd]]
    %v1780 = vstv %s1779
    %v1781 = vmul.f32 %v1780, %v1605
    %v1782 = vmul.f32 %v1780, %v1606
    %1785 = vrot.lane.b32.xlu0 %v1781, 124
    %v1786 = vpop.permute.xlu0 %1785
    %1787 = vrot.lane.b32.xlu0 %v1782, 124
    %v1788 = vpop.permute.xlu0 %1787
    %v1791 = vadd.f32 %v1749, %v1786
    %v1792 = vadd.f32 %v1750, %v1788
    %v1793 = vld [vmem:[#allocation2 + $0x11] sm:$0xff]
    %v1794 = vld [vmem:[#allocation2 + $0x19] sm:$0x3]
    %s1795 = sld [smem:[#allocation3 + $0x28]]
    %v1796 = vstv %s1795
    %v1797 = vmul.f32 %v1796, %v1793
    %v1798 = vmul.f32 %v1796, %v1794
    %v1799 = vadd.f32 %v1763, %v1797
    %v1800 = vadd.f32 %v1764, %v1798
    %s1801 = sld [smem:[#allocation3 + $0x73]]
    %v1802 = vstv %s1801
    %v1803 = vmul.f32 %v1802, %v1793
    %v1804 = vmul.f32 %v1802, %v1794
    %v1805 = vadd.f32 %v1777, %v1803
    %v1806 = vadd.f32 %v1778, %v1804
    %s1807 = sld [smem:[#allocation3 + $0xbe]]
    %v1808 = vstv %s1807
    %v1809 = vmul.f32 %v1808, %v1793
    %v1810 = vmul.f32 %v1808, %v1794
    %v1811 = vadd.f32 %v1791, %v1809
    %v1812 = vadd.f32 %v1792, %v1810
    %s1813 = sld [smem:[#allocation3 + $0x29]]
    %v1814 = vstv %s1813
    %v1815 = vmul.f32 %v1814, %v1793
    %v1816 = vmul.f32 %v1814, %v1794
    %1819 = vrot.lane.b32.xlu0 %v1815, 127
    %v1820 = vpop.permute.xlu0 %1819
    %1821 = vrot.lane.b32.xlu0 %v1816, 127
    %v1822 = vpop.permute.xlu0 %1821
    %v1825 = vadd.f32 %v1799, %v1820
    %v1826 = vadd.f32 %v1800, %v1822
    %s1827 = sld [smem:[#allocation3 + $0x74]]
    %v1828 = vstv %s1827
    %v1829 = vmul.f32 %v1828, %v1793
    %v1830 = vmul.f32 %v1828, %v1794
    %1833 = vrot.lane.b32.xlu0 %v1829, 127
    %v1834 = vpop.permute.xlu0 %1833
    %1835 = vrot.lane.b32.xlu0 %v1830, 127
    %v1836 = vpop.permute.xlu0 %1835
    %v1839 = vadd.f32 %v1805, %v1834
    %v1840 = vadd.f32 %v1806, %v1836
    %s1841 = sld [smem:[#allocation3 + $0xbf]]
    %v1842 = vstv %s1841
    %v1843 = vmul.f32 %v1842, %v1793
    %v1844 = vmul.f32 %v1842, %v1794
    %1847 = vrot.lane.b32.xlu0 %v1843, 127
    %v1848 = vpop.permute.xlu0 %1847
    %1849 = vrot.lane.b32.xlu0 %v1844, 127
    %v1850 = vpop.permute.xlu0 %1849
    %v1853 = vadd.f32 %v1811, %v1848
    %v1854 = vadd.f32 %v1812, %v1850
    %s1855 = sld [smem:[#allocation3 + $0x2a]]
    %v1856 = vstv %s1855
    %v1857 = vmul.f32 %v1856, %v1793
    %v1858 = vmul.f32 %v1856, %v1794
    %1861 = vrot.lane.b32.xlu0 %v1857, 126
    %v1862 = vpop.permute.xlu0 %1861
    %1863 = vrot.lane.b32.xlu0 %v1858, 126
    %v1864 = vpop.permute.xlu0 %1863
    %v1867 = vadd.f32 %v1825, %v1862
    %v1868 = vadd.f32 %v1826, %v1864
    %s1869 = sld [smem:[#allocation3 + $0x75]]
    %v1870 = vstv %s1869
    %v1871 = vmul.f32 %v1870, %v1793
    %v1872 = vmul.f32 %v1870, %v1794
    %1875 = vrot.lane.b32.xlu0 %v1871, 126
    %v1876 = vpop.permute.xlu0 %1875
    %1877 = vrot.lane.b32.xlu0 %v1872, 126
    %v1878 = vpop.permute.xlu0 %1877
    %v1881 = vadd.f32 %v1839, %v1876
    %v1882 = vadd.f32 %v1840, %v1878
    %s1883 = sld [smem:[#allocation3 + $0xc0]]
    %v1884 = vstv %s1883
    %v1885 = vmul.f32 %v1884, %v1793
    %v1886 = vmul.f32 %v1884, %v1794
    %1889 = vrot.lane.b32.xlu0 %v1885, 126
    %v1890 = vpop.permute.xlu0 %1889
    %1891 = vrot.lane.b32.xlu0 %v1886, 126
    %v1892 = vpop.permute.xlu0 %1891
    %v1895 = vadd.f32 %v1853, %v1890
    %v1896 = vadd.f32 %v1854, %v1892
    %s1897 = sld [smem:[#allocation3 + $0x2b]]
    %v1898 = vstv %s1897
    %v1899 = vmul.f32 %v1898, %v1793
    %v1900 = vmul.f32 %v1898, %v1794
    %1903 = vrot.lane.b32.xlu0 %v1899, 125
    %v1904 = vpop.permute.xlu0 %1903
    %1905 = vrot.lane.b32.xlu0 %v1900, 125
    %v1906 = vpop.permute.xlu0 %1905
    %v1909 = vadd.f32 %v1867, %v1904
    %v1910 = vadd.f32 %v1868, %v1906
    %s1911 = sld [smem:[#allocation3 + $0x76]]
    %v1912 = vstv %s1911
    %v1913 = vmul.f32 %v1912, %v1793
    %v1914 = vmul.f32 %v1912, %v1794
    %1917 = vrot.lane.b32.xlu0 %v1913, 125
    %v1918 = vpop.permute.xlu0 %1917
    %1919 = vrot.lane.b32.xlu0 %v1914, 125
    %v1920 = vpop.permute.xlu0 %1919
    %v1923 = vadd.f32 %v1881, %v1918
    %v1924 = vadd.f32 %v1882, %v1920
    %s1925 = sld [smem:[#allocation3 + $0xc1]]
    %v1926 = vstv %s1925
    %v1927 = vmul.f32 %v1926, %v1793
    %v1928 = vmul.f32 %v1926, %v1794
    %1931 = vrot.lane.b32.xlu0 %v1927, 125
    %v1932 = vpop.permute.xlu0 %1931
    %1933 = vrot.lane.b32.xlu0 %v1928, 125
    %v1934 = vpop.permute.xlu0 %1933
    %v1937 = vadd.f32 %v1895, %v1932
    %v1938 = vadd.f32 %v1896, %v1934
    %s1939 = sld [smem:[#allocation3 + $0x2c]]
    %v1940 = vstv %s1939
    %v1941 = vmul.f32 %v1940, %v1793
    %v1942 = vmul.f32 %v1940, %v1794
    %1945 = vrot.lane.b32.xlu0 %v1941, 124
    %v1946 = vpop.permute.xlu0 %1945
    %1947 = vrot.lane.b32.xlu0 %v1942, 124
    %v1948 = vpop.permute.xlu0 %1947
    %v1951 = vadd.f32 %v1909, %v1946
    %v1952 = vadd.f32 %v1910, %v1948
    %s1953 = sld [smem:[#allocation3 + $0x77]]
    %v1954 = vstv %s1953
    %v1955 = vmul.f32 %v1954, %v1793
    %v1956 = vmul.f32 %v1954, %v1794
    %1959 = vrot.lane.b32.xlu0 %v1955, 124
    %v1960 = vpop.permute.xlu0 %1959
    %1961 = vrot.lane.b32.xlu0 %v1956, 124
    %v1962 = vpop.permute.xlu0 %1961
    %v1965 = vadd.f32 %v1923, %v1960
    %v1966 = vadd.f32 %v1924, %v1962
    %s1967 = sld [smem:[#allocation3 + $0xc2]]
    %v1968 = vstv %s1967
    %v1969 = vmul.f32 %v1968, %v1793
    %v1970 = vmul.f32 %v1968, %v1794
    %1973 = vrot.lane.b32.xlu0 %v1969, 124
    %v1974 = vpop.permute.xlu0 %1973
    %1975 = vrot.lane.b32.xlu0 %v1970, 124
    %v1976 = vpop.permute.xlu0 %1975
    %v1979 = vadd.f32 %v1937, %v1974
    %v1980 = vadd.f32 %v1938, %v1976
    %v1981 = vld [vmem:[#allocation2 + $0x12] sm:$0xff]
    %v1982 = vld [vmem:[#allocation2 + $0x1a] sm:$0x3]
    %s1983 = sld [smem:[#allocation3 + $0x2d]]
    %v1984 = vstv %s1983
    %v1985 = vmul.f32 %v1984, %v1981
    %v1986 = vmul.f32 %v1984, %v1982
    %v1987 = vadd.f32 %v1951, %v1985
    %v1988 = vadd.f32 %v1952, %v1986
    %s1989 = sld [smem:[#allocation3 + $0x78]]
    %v1990 = vstv %s1989
    %v1991 = vmul.f32 %v1990, %v1981
    %v1992 = vmul.f32 %v1990, %v1982
    %v1993 = vadd.f32 %v1965, %v1991
    %v1994 = vadd.f32 %v1966, %v1992
    %s1995 = sld [smem:[#allocation3 + $0xc3]]
    %v1996 = vstv %s1995
    %v1997 = vmul.f32 %v1996, %v1981
    %v1998 = vmul.f32 %v1996, %v1982
    %v1999 = vadd.f32 %v1979, %v1997
    %v2000 = vadd.f32 %v1980, %v1998
    %s2001 = sld [smem:[#allocation3 + $0x2e]]
    %v2002 = vstv %s2001
    %v2003 = vmul.f32 %v2002, %v1981
    %v2004 = vmul.f32 %v2002, %v1982
    %2007 = vrot.lane.b32.xlu0 %v2003, 127
    %v2008 = vpop.permute.xlu0 %2007
    %2009 = vrot.lane.b32.xlu0 %v2004, 127
    %v2010 = vpop.permute.xlu0 %2009
    %v2013 = vadd.f32 %v1987, %v2008
    %v2014 = vadd.f32 %v1988, %v2010
    %s2015 = sld [smem:[#allocation3 + $0x79]]
    %v2016 = vstv %s2015
    %v2017 = vmul.f32 %v2016, %v1981
    %v2018 = vmul.f32 %v2016, %v1982
    %2021 = vrot.lane.b32.xlu0 %v2017, 127
    %v2022 = vpop.permute.xlu0 %2021
    %2023 = vrot.lane.b32.xlu0 %v2018, 127
    %v2024 = vpop.permute.xlu0 %2023
    %v2027 = vadd.f32 %v1993, %v2022
    %v2028 = vadd.f32 %v1994, %v2024
    %s2029 = sld [smem:[#allocation3 + $0xc4]]
    %v2030 = vstv %s2029
    %v2031 = vmul.f32 %v2030, %v1981
    %v2032 = vmul.f32 %v2030, %v1982
    %2035 = vrot.lane.b32.xlu0 %v2031, 127
    %v2036 = vpop.permute.xlu0 %2035
    %2037 = vrot.lane.b32.xlu0 %v2032, 127
    %v2038 = vpop.permute.xlu0 %2037
    %v2041 = vadd.f32 %v1999, %v2036
    %v2042 = vadd.f32 %v2000, %v2038
    %s2043 = sld [smem:[#allocation3 + $0x2f]]
    %v2044 = vstv %s2043
    %v2045 = vmul.f32 %v2044, %v1981
    %v2046 = vmul.f32 %v2044, %v1982
    %2049 = vrot.lane.b32.xlu0 %v2045, 126
    %v2050 = vpop.permute.xlu0 %2049
    %2051 = vrot.lane.b32.xlu0 %v2046, 126
    %v2052 = vpop.permute.xlu0 %2051
    %v2055 = vadd.f32 %v2013, %v2050
    %v2056 = vadd.f32 %v2014, %v2052
    %s2057 = sld [smem:[#allocation3 + $0x7a]]
    %v2058 = vstv %s2057
    %v2059 = vmul.f32 %v2058, %v1981
    %v2060 = vmul.f32 %v2058, %v1982
    %2063 = vrot.lane.b32.xlu0 %v2059, 126
    %v2064 = vpop.permute.xlu0 %2063
    %2065 = vrot.lane.b32.xlu0 %v2060, 126
    %v2066 = vpop.permute.xlu0 %2065
    %v2069 = vadd.f32 %v2027, %v2064
    %v2070 = vadd.f32 %v2028, %v2066
    %s2071 = sld [smem:[#allocation3 + $0xc5]]
    %v2072 = vstv %s2071
    %v2073 = vmul.f32 %v2072, %v1981
    %v2074 = vmul.f32 %v2072, %v1982
    %2077 = vrot.lane.b32.xlu0 %v2073, 126
    %v2078 = vpop.permute.xlu0 %2077
    %2079 = vrot.lane.b32.xlu0 %v2074, 126
    %v2080 = vpop.permute.xlu0 %2079
    %v2083 = vadd.f32 %v2041, %v2078
    %v2084 = vadd.f32 %v2042, %v2080
    %s2085 = sld [smem:[#allocation3 + $0x30]]
    %v2086 = vstv %s2085
    %v2087 = vmul.f32 %v2086, %v1981
    %v2088 = vmul.f32 %v2086, %v1982
    %2091 = vrot.lane.b32.xlu0 %v2087, 125
    %v2092 = vpop.permute.xlu0 %2091
    %2093 = vrot.lane.b32.xlu0 %v2088, 125
    %v2094 = vpop.permute.xlu0 %2093
    %v2097 = vadd.f32 %v2055, %v2092
    %v2098 = vadd.f32 %v2056, %v2094
    %s2099 = sld [smem:[#allocation3 + $0x7b]]
    %v2100 = vstv %s2099
    %v2101 = vmul.f32 %v2100, %v1981
    %v2102 = vmul.f32 %v2100, %v1982
    %2105 = vrot.lane.b32.xlu0 %v2101, 125
    %v2106 = vpop.permute.xlu0 %2105
    %2107 = vrot.lane.b32.xlu0 %v2102, 125
    %v2108 = vpop.permute.xlu0 %2107
    %v2111 = vadd.f32 %v2069, %v2106
    %v2112 = vadd.f32 %v2070, %v2108
    %s2113 = sld [smem:[#allocation3 + $0xc6]]
    %v2114 = vstv %s2113
    %v2115 = vmul.f32 %v2114, %v1981
    %v2116 = vmul.f32 %v2114, %v1982
    %2119 = vrot.lane.b32.xlu0 %v2115, 125
    %v2120 = vpop.permute.xlu0 %2119
    %2121 = vrot.lane.b32.xlu0 %v2116, 125
    %v2122 = vpop.permute.xlu0 %2121
    %v2125 = vadd.f32 %v2083, %v2120
    %v2126 = vadd.f32 %v2084, %v2122
    %s2127 = sld [smem:[#allocation3 + $0x31]]
    %v2128 = vstv %s2127
    %v2129 = vmul.f32 %v2128, %v1981
    %v2130 = vmul.f32 %v2128, %v1982
    %2133 = vrot.lane.b32.xlu0 %v2129, 124
    %v2134 = vpop.permute.xlu0 %2133
    %2135 = vrot.lane.b32.xlu0 %v2130, 124
    %v2136 = vpop.permute.xlu0 %2135
    %v2139 = vadd.f32 %v2097, %v2134
    %v2140 = vadd.f32 %v2098, %v2136
    %s2141 = sld [smem:[#allocation3 + $0x7c]]
    %v2142 = vstv %s2141
    %v2143 = vmul.f32 %v2142, %v1981
    %v2144 = vmul.f32 %v2142, %v1982
    %2147 = vrot.lane.b32.xlu0 %v2143, 124
    %v2148 = vpop.permute.xlu0 %2147
    %2149 = vrot.lane.b32.xlu0 %v2144, 124
    %v2150 = vpop.permute.xlu0 %2149
    %v2153 = vadd.f32 %v2111, %v2148
    %v2154 = vadd.f32 %v2112, %v2150
    %s2155 = sld [smem:[#allocation3 + $0xc7]]
    %v2156 = vstv %s2155
    %v2157 = vmul.f32 %v2156, %v1981
    %v2158 = vmul.f32 %v2156, %v1982
    %2161 = vrot.lane.b32.xlu0 %v2157, 124
    %v2162 = vpop.permute.xlu0 %2161
    %2163 = vrot.lane.b32.xlu0 %v2158, 124
    %v2164 = vpop.permute.xlu0 %2163
    %v2167 = vadd.f32 %v2125, %v2162
    %v2168 = vadd.f32 %v2126, %v2164
    %v2169 = vld [vmem:[#allocation2 + $0x1c] sm:$0xff]
    %v2170 = vld [vmem:[#allocation2 + $0x24] sm:$0x3]
    %s2171 = sld [smem:[#allocation3 + $0x32]]
    %v2172 = vstv %s2171
    %v2173 = vmul.f32 %v2172, %v2169
    %v2174 = vmul.f32 %v2172, %v2170
    %v2175 = vadd.f32 %v2139, %v2173
    %v2176 = vadd.f32 %v2140, %v2174
    %s2177 = sld [smem:[#allocation3 + $0x7d]]
    %v2178 = vstv %s2177
    %v2179 = vmul.f32 %v2178, %v2169
    %v2180 = vmul.f32 %v2178, %v2170
    %v2181 = vadd.f32 %v2153, %v2179
    %v2182 = vadd.f32 %v2154, %v2180
    %s2183 = sld [smem:[#allocation3 + $0xc8]]
    %v2184 = vstv %s2183
    %v2185 = vmul.f32 %v2184, %v2169
    %v2186 = vmul.f32 %v2184, %v2170
    %v2187 = vadd.f32 %v2167, %v2185
    %v2188 = vadd.f32 %v2168, %v2186
    %s2189 = sld [smem:[#allocation3 + $0x33]]
    %v2190 = vstv %s2189
    %v2191 = vmul.f32 %v2190, %v2169
    %v2192 = vmul.f32 %v2190, %v2170
    %2195 = vrot.lane.b32.xlu0 %v2191, 127
    %v2196 = vpop.permute.xlu0 %2195
    %2197 = vrot.lane.b32.xlu0 %v2192, 127
    %v2198 = vpop.permute.xlu0 %2197
    %v2201 = vadd.f32 %v2175, %v2196
    %v2202 = vadd.f32 %v2176, %v2198
    %s2203 = sld [smem:[#allocation3 + $0x7e]]
    %v2204 = vstv %s2203
    %v2205 = vmul.f32 %v2204, %v2169
    %v2206 = vmul.f32 %v2204, %v2170
    %2209 = vrot.lane.b32.xlu0 %v2205, 127
    %v2210 = vpop.permute.xlu0 %2209
    %2211 = vrot.lane.b32.xlu0 %v2206, 127
    %v2212 = vpop.permute.xlu0 %2211
    %v2215 = vadd.f32 %v2181, %v2210
    %v2216 = vadd.f32 %v2182, %v2212
    %s2217 = sld [smem:[#allocation3 + $0xc9]]
    %v2218 = vstv %s2217
    %v2219 = vmul.f32 %v2218, %v2169
    %v2220 = vmul.f32 %v2218, %v2170
    %2223 = vrot.lane.b32.xlu0 %v2219, 127
    %v2224 = vpop.permute.xlu0 %2223
    %2225 = vrot.lane.b32.xlu0 %v2220, 127
    %v2226 = vpop.permute.xlu0 %2225
    %v2229 = vadd.f32 %v2187, %v2224
    %v2230 = vadd.f32 %v2188, %v2226
    %s2231 = sld [smem:[#allocation3 + $0x34]]
    %v2232 = vstv %s2231
    %v2233 = vmul.f32 %v2232, %v2169
    %v2234 = vmul.f32 %v2232, %v2170
    %2237 = vrot.lane.b32.xlu0 %v2233, 126
    %v2238 = vpop.permute.xlu0 %2237
    %2239 = vrot.lane.b32.xlu0 %v2234, 126
    %v2240 = vpop.permute.xlu0 %2239
    %v2243 = vadd.f32 %v2201, %v2238
    %v2244 = vadd.f32 %v2202, %v2240
    %s2245 = sld [smem:[#allocation3 + $0x7f]]
    %v2246 = vstv %s2245
    %v2247 = vmul.f32 %v2246, %v2169
    %v2248 = vmul.f32 %v2246, %v2170
    %2251 = vrot.lane.b32.xlu0 %v2247, 126
    %v2252 = vpop.permute.xlu0 %2251
    %2253 = vrot.lane.b32.xlu0 %v2248, 126
    %v2254 = vpop.permute.xlu0 %2253
    %v2257 = vadd.f32 %v2215, %v2252
    %v2258 = vadd.f32 %v2216, %v2254
    %s2259 = sld [smem:[#allocation3 + $0xca]]
    %v2260 = vstv %s2259
    %v2261 = vmul.f32 %v2260, %v2169
    %v2262 = vmul.f32 %v2260, %v2170
    %2265 = vrot.lane.b32.xlu0 %v2261, 126
    %v2266 = vpop.permute.xlu0 %2265
    %2267 = vrot.lane.b32.xlu0 %v2262, 126
    %v2268 = vpop.permute.xlu0 %2267
    %v2271 = vadd.f32 %v2229, %v2266
    %v2272 = vadd.f32 %v2230, %v2268
    %s2273 = sld [smem:[#allocation3 + $0x35]]
    %v2274 = vstv %s2273
    %v2275 = vmul.f32 %v2274, %v2169
    %v2276 = vmul.f32 %v2274, %v2170
    %2279 = vrot.lane.b32.xlu0 %v2275, 125
    %v2280 = vpop.permute.xlu0 %2279
    %2281 = vrot.lane.b32.xlu0 %v2276, 125
    %v2282 = vpop.permute.xlu0 %2281
    %v2285 = vadd.f32 %v2243, %v2280
    %v2286 = vadd.f32 %v2244, %v2282
    %s2287 = sld [smem:[#allocation3 + $0x80]]
    %v2288 = vstv %s2287
    %v2289 = vmul.f32 %v2288, %v2169
    %v2290 = vmul.f32 %v2288, %v2170
    %2293 = vrot.lane.b32.xlu0 %v2289, 125
    %v2294 = vpop.permute.xlu0 %2293
    %2295 = vrot.lane.b32.xlu0 %v2290, 125
    %v2296 = vpop.permute.xlu0 %2295
    %v2299 = vadd.f32 %v2257, %v2294
    %v2300 = vadd.f32 %v2258, %v2296
    %s2301 = sld [smem:[#allocation3 + $0xcb]]
    %v2302 = vstv %s2301
    %v2303 = vmul.f32 %v2302, %v2169
    %v2304 = vmul.f32 %v2302, %v2170
    %2307 = vrot.lane.b32.xlu0 %v2303, 125
    %v2308 = vpop.permute.xlu0 %2307
    %2309 = vrot.lane.b32.xlu0 %v2304, 125
    %v2310 = vpop.permute.xlu0 %2309
    %v2313 = vadd.f32 %v2271, %v2308
    %v2314 = vadd.f32 %v2272, %v2310
    %s2315 = sld [smem:[#allocation3 + $0x36]]
    %v2316 = vstv %s2315
    %v2317 = vmul.f32 %v2316, %v2169
    %v2318 = vmul.f32 %v2316, %v2170
    %2321 = vrot.lane.b32.xlu0 %v2317, 124
    %v2322 = vpop.permute.xlu0 %2321
    %2323 = vrot.lane.b32.xlu0 %v2318, 124
    %v2324 = vpop.permute.xlu0 %2323
    %v2327 = vadd.f32 %v2285, %v2322
    %v2328 = vadd.f32 %v2286, %v2324
    %s2329 = sld [smem:[#allocation3 + $0x81]]
    %v2330 = vstv %s2329
    %v2331 = vmul.f32 %v2330, %v2169
    %v2332 = vmul.f32 %v2330, %v2170
    %2335 = vrot.lane.b32.xlu0 %v2331, 124
    %v2336 = vpop.permute.xlu0 %2335
    %2337 = vrot.lane.b32.xlu0 %v2332, 124
    %v2338 = vpop.permute.xlu0 %2337
    %v2341 = vadd.f32 %v2299, %v2336
    %v2342 = vadd.f32 %v2300, %v2338
    %s2343 = sld [smem:[#allocation3 + $0xcc]]
    %v2344 = vstv %s2343
    %v2345 = vmul.f32 %v2344, %v2169
    %v2346 = vmul.f32 %v2344, %v2170
    %2349 = vrot.lane.b32.xlu0 %v2345, 124
    %v2350 = vpop.permute.xlu0 %2349
    %2351 = vrot.lane.b32.xlu0 %v2346, 124
    %v2352 = vpop.permute.xlu0 %2351
    %v2355 = vadd.f32 %v2313, %v2350
    %v2356 = vadd.f32 %v2314, %v2352
    %v2357 = vld [vmem:[#allocation2 + $0x1d] sm:$0xff]
    %v2358 = vld [vmem:[#allocation2 + $0x25] sm:$0x3]
    %s2359 = sld [smem:[#allocation3 + $0x37]]
    %v2360 = vstv %s2359
    %v2361 = vmul.f32 %v2360, %v2357
    %v2362 = vmul.f32 %v2360, %v2358
    %v2363 = vadd.f32 %v2327, %v2361
    %v2364 = vadd.f32 %v2328, %v2362
    %s2365 = sld [smem:[#allocation3 + $0x82]]
    %v2366 = vstv %s2365
    %v2367 = vmul.f32 %v2366, %v2357
    %v2368 = vmul.f32 %v2366, %v2358
    %v2369 = vadd.f32 %v2341, %v2367
    %v2370 = vadd.f32 %v2342, %v2368
    %s2371 = sld [smem:[#allocation3 + $0xcd]]
    %v2372 = vstv %s2371
    %v2373 = vmul.f32 %v2372, %v2357
    %v2374 = vmul.f32 %v2372, %v2358
    %v2375 = vadd.f32 %v2355, %v2373
    %v2376 = vadd.f32 %v2356, %v2374
    %s2377 = sld [smem:[#allocation3 + $0x38]]
    %v2378 = vstv %s2377
    %v2379 = vmul.f32 %v2378, %v2357
    %v2380 = vmul.f32 %v2378, %v2358
    %2383 = vrot.lane.b32.xlu0 %v2379, 127
    %v2384 = vpop.permute.xlu0 %2383
    %2385 = vrot.lane.b32.xlu0 %v2380, 127
    %v2386 = vpop.permute.xlu0 %2385
    %v2389 = vadd.f32 %v2363, %v2384
    %v2390 = vadd.f32 %v2364, %v2386
    %s2391 = sld [smem:[#allocation3 + $0x83]]
    %v2392 = vstv %s2391
    %v2393 = vmul.f32 %v2392, %v2357
    %v2394 = vmul.f32 %v2392, %v2358
    %2397 = vrot.lane.b32.xlu0 %v2393, 127
    %v2398 = vpop.permute.xlu0 %2397
    %2399 = vrot.lane.b32.xlu0 %v2394, 127
    %v2400 = vpop.permute.xlu0 %2399
    %v2403 = vadd.f32 %v2369, %v2398
    %v2404 = vadd.f32 %v2370, %v2400
    %s2405 = sld [smem:[#allocation3 + $0xce]]
    %v2406 = vstv %s2405
    %v2407 = vmul.f32 %v2406, %v2357
    %v2408 = vmul.f32 %v2406, %v2358
    %2411 = vrot.lane.b32.xlu0 %v2407, 127
    %v2412 = vpop.permute.xlu0 %2411
    %2413 = vrot.lane.b32.xlu0 %v2408, 127
    %v2414 = vpop.permute.xlu0 %2413
    %v2417 = vadd.f32 %v2375, %v2412
    %v2418 = vadd.f32 %v2376, %v2414
    %s2419 = sld [smem:[#allocation3 + $0x39]]
    %v2420 = vstv %s2419
    %v2421 = vmul.f32 %v2420, %v2357
    %v2422 = vmul.f32 %v2420, %v2358
    %2425 = vrot.lane.b32.xlu0 %v2421, 126
    %v2426 = vpop.permute.xlu0 %2425
    %2427 = vrot.lane.b32.xlu0 %v2422, 126
    %v2428 = vpop.permute.xlu0 %2427
    %v2431 = vadd.f32 %v2389, %v2426
    %v2432 = vadd.f32 %v2390, %v2428
    %s2433 = sld [smem:[#allocation3 + $0x84]]
    %v2434 = vstv %s2433
    %v2435 = vmul.f32 %v2434, %v2357
    %v2436 = vmul.f32 %v2434, %v2358
    %2439 = vrot.lane.b32.xlu0 %v2435, 126
    %v2440 = vpop.permute.xlu0 %2439
    %2441 = vrot.lane.b32.xlu0 %v2436, 126
    %v2442 = vpop.permute.xlu0 %2441
    %v2445 = vadd.f32 %v2403, %v2440
    %v2446 = vadd.f32 %v2404, %v2442
    %s2447 = sld [smem:[#allocation3 + $0xcf]]
    %v2448 = vstv %s2447
    %v2449 = vmul.f32 %v2448, %v2357
    %v2450 = vmul.f32 %v2448, %v2358
    %2453 = vrot.lane.b32.xlu0 %v2449, 126
    %v2454 = vpop.permute.xlu0 %2453
    %2455 = vrot.lane.b32.xlu0 %v2450, 126
    %v2456 = vpop.permute.xlu0 %2455
    %v2459 = vadd.f32 %v2417, %v2454
    %v2460 = vadd.f32 %v2418, %v2456
    %s2461 = sld [smem:[#allocation3 + $0x3a]]
    %v2462 = vstv %s2461
    %v2463 = vmul.f32 %v2462, %v2357
    %v2464 = vmul.f32 %v2462, %v2358
    %2467 = vrot.lane.b32.xlu0 %v2463, 125
    %v2468 = vpop.permute.xlu0 %2467
    %2469 = vrot.lane.b32.xlu0 %v2464, 125
    %v2470 = vpop.permute.xlu0 %2469
    %v2473 = vadd.f32 %v2431, %v2468
    %v2474 = vadd.f32 %v2432, %v2470
    %s2475 = sld [smem:[#allocation3 + $0x85]]
    %v2476 = vstv %s2475
    %v2477 = vmul.f32 %v2476, %v2357
    %v2478 = vmul.f32 %v2476, %v2358
    %2481 = vrot.lane.b32.xlu0 %v2477, 125
    %v2482 = vpop.permute.xlu0 %2481
    %2483 = vrot.lane.b32.xlu0 %v2478, 125
    %v2484 = vpop.permute.xlu0 %2483
    %v2487 = vadd.f32 %v2445, %v2482
    %v2488 = vadd.f32 %v2446, %v2484
    %s2489 = sld [smem:[#allocation3 + $0xd0]]
    %v2490 = vstv %s2489
    %v2491 = vmul.f32 %v2490, %v2357
    %v2492 = vmul.f32 %v2490, %v2358
    %2495 = vrot.lane.b32.xlu0 %v2491, 125
    %v2496 = vpop.permute.xlu0 %2495
    %2497 = vrot.lane.b32.xlu0 %v2492, 125
    %v2498 = vpop.permute.xlu0 %2497
    %v2501 = vadd.f32 %v2459, %v2496
    %v2502 = vadd.f32 %v2460, %v2498
    %s2503 = sld [smem:[#allocation3 + $0x3b]]
    %v2504 = vstv %s2503
    %v2505 = vmul.f32 %v2504, %v2357
    %v2506 = vmul.f32 %v2504, %v2358
    %2509 = vrot.lane.b32.xlu0 %v2505, 124
    %v2510 = vpop.permute.xlu0 %2509
    %2511 = vrot.lane.b32.xlu0 %v2506, 124
    %v2512 = vpop.permute.xlu0 %2511
    %v2515 = vadd.f32 %v2473, %v2510
    %v2516 = vadd.f32 %v2474, %v2512
    %s2517 = sld [smem:[#allocation3 + $0x86]]
    %v2518 = vstv %s2517
    %v2519 = vmul.f32 %v2518, %v2357
    %v2520 = vmul.f32 %v2518, %v2358
    %2523 = vrot.lane.b32.xlu0 %v2519, 124
    %v2524 = vpop.permute.xlu0 %2523
    %2525 = vrot.lane.b32.xlu0 %v2520, 124
    %v2526 = vpop.permute.xlu0 %2525
    %v2529 = vadd.f32 %v2487, %v2524
    %v2530 = vadd.f32 %v2488, %v2526
    %s2531 = sld [smem:[#allocation3 + $0xd1]]
    %v2532 = vstv %s2531
    %v2533 = vmul.f32 %v2532, %v2357
    %v2534 = vmul.f32 %v2532, %v2358
    %2537 = vrot.lane.b32.xlu0 %v2533, 124
    %v2538 = vpop.permute.xlu0 %2537
    %2539 = vrot.lane.b32.xlu0 %v2534, 124
    %v2540 = vpop.permute.xlu0 %2539
    %v2543 = vadd.f32 %v2501, %v2538
    %v2544 = vadd.f32 %v2502, %v2540
    %v2545 = vld [vmem:[#allocation2 + $0x1e] sm:$0xff]
    %v2546 = vld [vmem:[#allocation2 + $0x26] sm:$0x3]
    %s2547 = sld [smem:[#allocation3 + $0x3c]]
    %v2548 = vstv %s2547
    %v2549 = vmul.f32 %v2548, %v2545
    %v2550 = vmul.f32 %v2548, %v2546
    %v2551 = vadd.f32 %v2515, %v2549
    %v2552 = vadd.f32 %v2516, %v2550
    %s2553 = sld [smem:[#allocation3 + $0x87]]
    %v2554 = vstv %s2553
    %v2555 = vmul.f32 %v2554, %v2545
    %v2556 = vmul.f32 %v2554, %v2546
    %v2557 = vadd.f32 %v2529, %v2555
    %v2558 = vadd.f32 %v2530, %v2556
    %s2559 = sld [smem:[#allocation3 + $0xd2]]
    %v2560 = vstv %s2559
    %v2561 = vmul.f32 %v2560, %v2545
    %v2562 = vmul.f32 %v2560, %v2546
    %v2563 = vadd.f32 %v2543, %v2561
    %v2564 = vadd.f32 %v2544, %v2562
    %s2565 = sld [smem:[#allocation3 + $0x3d]]
    %v2566 = vstv %s2565
    %v2567 = vmul.f32 %v2566, %v2545
    %v2568 = vmul.f32 %v2566, %v2546
    %2571 = vrot.lane.b32.xlu0 %v2567, 127
    %v2572 = vpop.permute.xlu0 %2571
    %2573 = vrot.lane.b32.xlu0 %v2568, 127
    %v2574 = vpop.permute.xlu0 %2573
    %v2577 = vadd.f32 %v2551, %v2572
    %v2578 = vadd.f32 %v2552, %v2574
    %s2579 = sld [smem:[#allocation3 + $0x88]]
    %v2580 = vstv %s2579
    %v2581 = vmul.f32 %v2580, %v2545
    %v2582 = vmul.f32 %v2580, %v2546
    %2585 = vrot.lane.b32.xlu0 %v2581, 127
    %v2586 = vpop.permute.xlu0 %2585
    %2587 = vrot.lane.b32.xlu0 %v2582, 127
    %v2588 = vpop.permute.xlu0 %2587
    %v2591 = vadd.f32 %v2557, %v2586
    %v2592 = vadd.f32 %v2558, %v2588
    %s2593 = sld [smem:[#allocation3 + $0xd3]]
    %v2594 = vstv %s2593
    %v2595 = vmul.f32 %v2594, %v2545
    %v2596 = vmul.f32 %v2594, %v2546
    %2599 = vrot.lane.b32.xlu0 %v2595, 127
    %v2600 = vpop.permute.xlu0 %2599
    %2601 = vrot.lane.b32.xlu0 %v2596, 127
    %v2602 = vpop.permute.xlu0 %2601
    %v2605 = vadd.f32 %v2563, %v2600
    %v2606 = vadd.f32 %v2564, %v2602
    %s2607 = sld [smem:[#allocation3 + $0x3e]]
    %v2608 = vstv %s2607
    %v2609 = vmul.f32 %v2608, %v2545
    %v2610 = vmul.f32 %v2608, %v2546
    %2613 = vrot.lane.b32.xlu0 %v2609, 126
    %v2614 = vpop.permute.xlu0 %2613
    %2615 = vrot.lane.b32.xlu0 %v2610, 126
    %v2616 = vpop.permute.xlu0 %2615
    %v2619 = vadd.f32 %v2577, %v2614
    %v2620 = vadd.f32 %v2578, %v2616
    %s2621 = sld [smem:[#allocation3 + $0x89]]
    %v2622 = vstv %s2621
    %v2623 = vmul.f32 %v2622, %v2545
    %v2624 = vmul.f32 %v2622, %v2546
    %2627 = vrot.lane.b32.xlu0 %v2623, 126
    %v2628 = vpop.permute.xlu0 %2627
    %2629 = vrot.lane.b32.xlu0 %v2624, 126
    %v2630 = vpop.permute.xlu0 %2629
    %v2633 = vadd.f32 %v2591, %v2628
    %v2634 = vadd.f32 %v2592, %v2630
    %s2635 = sld [smem:[#allocation3 + $0xd4]]
    %v2636 = vstv %s2635
    %v2637 = vmul.f32 %v2636, %v2545
    %v2638 = vmul.f32 %v2636, %v2546
    %2641 = vrot.lane.b32.xlu0 %v2637, 126
    %v2642 = vpop.permute.xlu0 %2641
    %2643 = vrot.lane.b32.xlu0 %v2638, 126
    %v2644 = vpop.permute.xlu0 %2643
    %v2647 = vadd.f32 %v2605, %v2642
    %v2648 = vadd.f32 %v2606, %v2644
    %s2649 = sld [smem:[#allocation3 + $0x3f]]
    %v2650 = vstv %s2649
    %v2651 = vmul.f32 %v2650, %v2545
    %v2652 = vmul.f32 %v2650, %v2546
    %2655 = vrot.lane.b32.xlu0 %v2651, 125
    %v2656 = vpop.permute.xlu0 %2655
    %2657 = vrot.lane.b32.xlu0 %v2652, 125
    %v2658 = vpop.permute.xlu0 %2657
    %v2661 = vadd.f32 %v2619, %v2656
    %v2662 = vadd.f32 %v2620, %v2658
    %s2663 = sld [smem:[#allocation3 + $0x8a]]
    %v2664 = vstv %s2663
    %v2665 = vmul.f32 %v2664, %v2545
    %v2666 = vmul.f32 %v2664, %v2546
    %2669 = vrot.lane.b32.xlu0 %v2665, 125
    %v2670 = vpop.permute.xlu0 %2669
    %2671 = vrot.lane.b32.xlu0 %v2666, 125
    %v2672 = vpop.permute.xlu0 %2671
    %v2675 = vadd.f32 %v2633, %v2670
    %v2676 = vadd.f32 %v2634, %v2672
    %s2677 = sld [smem:[#allocation3 + $0xd5]]
    %v2678 = vstv %s2677
    %v2679 = vmul.f32 %v2678, %v2545
    %v2680 = vmul.f32 %v2678, %v2546
    %2683 = vrot.lane.b32.xlu0 %v2679, 125
    %v2684 = vpop.permute.xlu0 %2683
    %2685 = vrot.lane.b32.xlu0 %v2680, 125
    %v2686 = vpop.permute.xlu0 %2685
    %v2689 = vadd.f32 %v2647, %v2684
    %v2690 = vadd.f32 %v2648, %v2686
    %s2691 = sld [smem:[#allocation3 + $0x40]]
    %v2692 = vstv %s2691
    %v2693 = vmul.f32 %v2692, %v2545
    %v2694 = vmul.f32 %v2692, %v2546
    %2697 = vrot.lane.b32.xlu0 %v2693, 124
    %v2698 = vpop.permute.xlu0 %2697
    %2699 = vrot.lane.b32.xlu0 %v2694, 124
    %v2700 = vpop.permute.xlu0 %2699
    %v2703 = vadd.f32 %v2661, %v2698
    %v2704 = vadd.f32 %v2662, %v2700
    %s2705 = sld [smem:[#allocation3 + $0x8b]]
    %v2706 = vstv %s2705
    %v2707 = vmul.f32 %v2706, %v2545
    %v2708 = vmul.f32 %v2706, %v2546
    %2711 = vrot.lane.b32.xlu0 %v2707, 124
    %v2712 = vpop.permute.xlu0 %2711
    %2713 = vrot.lane.b32.xlu0 %v2708, 124
    %v2714 = vpop.permute.xlu0 %2713
    %v2717 = vadd.f32 %v2675, %v2712
    %v2718 = vadd.f32 %v2676, %v2714
    %s2719 = sld [smem:[#allocation3 + $0xd6]]
    %v2720 = vstv %s2719
    %v2721 = vmul.f32 %v2720, %v2545
    %v2722 = vmul.f32 %v2720, %v2546
    %2725 = vrot.lane.b32.xlu0 %v2721, 124
    %v2726 = vpop.permute.xlu0 %2725
    %2727 = vrot.lane.b32.xlu0 %v2722, 124
    %v2728 = vpop.permute.xlu0 %2727
    %v2731 = vadd.f32 %v2689, %v2726
    %v2732 = vadd.f32 %v2690, %v2728
    %v2733 = vld [vmem:[#allocation2 + $0x1f] sm:$0xff]
    %v2734 = vld [vmem:[#allocation2 + $0x27] sm:$0x3]
    %s2735 = sld [smem:[#allocation3 + $0x41]]
    %v2736 = vstv %s2735
    %v2737 = vmul.f32 %v2736, %v2733
    %v2738 = vmul.f32 %v2736, %v2734
    %v2739 = vadd.f32 %v2703, %v2737
    %v2740 = vadd.f32 %v2704, %v2738
    %s2741 = sld [smem:[#allocation3 + $0x8c]]
    %v2742 = vstv %s2741
    %v2743 = vmul.f32 %v2742, %v2733
    %v2744 = vmul.f32 %v2742, %v2734
    %v2745 = vadd.f32 %v2717, %v2743
    %v2746 = vadd.f32 %v2718, %v2744
    %s2747 = sld [smem:[#allocation3 + $0xd7]]
    %v2748 = vstv %s2747
    %v2749 = vmul.f32 %v2748, %v2733
    %v2750 = vmul.f32 %v2748, %v2734
    %v2751 = vadd.f32 %v2731, %v2749
    %v2752 = vadd.f32 %v2732, %v2750
    %s2753 = sld [smem:[#allocation3 + $0x42]]
    %v2754 = vstv %s2753
    %v2755 = vmul.f32 %v2754, %v2733
    %v2756 = vmul.f32 %v2754, %v2734
    %2759 = vrot.lane.b32.xlu0 %v2755, 127
    %v2760 = vpop.permute.xlu0 %2759
    %2761 = vrot.lane.b32.xlu0 %v2756, 127
    %v2762 = vpop.permute.xlu0 %2761
    %v2765 = vadd.f32 %v2739, %v2760
    %v2766 = vadd.f32 %v2740, %v2762
    %s2767 = sld [smem:[#allocation3 + $0x8d]]
    %v2768 = vstv %s2767
    %v2769 = vmul.f32 %v2768, %v2733
    %v2770 = vmul.f32 %v2768, %v2734
    %2773 = vrot.lane.b32.xlu0 %v2769, 127
    %v2774 = vpop.permute.xlu0 %2773
    %2775 = vrot.lane.b32.xlu0 %v2770, 127
    %v2776 = vpop.permute.xlu0 %2775
    %v2779 = vadd.f32 %v2745, %v2774
    %v2780 = vadd.f32 %v2746, %v2776
    %s2781 = sld [smem:[#allocation3 + $0xd8]]
    %v2782 = vstv %s2781
    %v2783 = vmul.f32 %v2782, %v2733
    %v2784 = vmul.f32 %v2782, %v2734
    %2787 = vrot.lane.b32.xlu0 %v2783, 127
    %v2788 = vpop.permute.xlu0 %2787
    %2789 = vrot.lane.b32.xlu0 %v2784, 127
    %v2790 = vpop.permute.xlu0 %2789
    %v2793 = vadd.f32 %v2751, %v2788
    %v2794 = vadd.f32 %v2752, %v2790
    %s2795 = sld [smem:[#allocation3 + $0x43]]
    %v2796 = vstv %s2795
    %v2797 = vmul.f32 %v2796, %v2733
    %v2798 = vmul.f32 %v2796, %v2734
    %2801 = vrot.lane.b32.xlu0 %v2797, 126
    %v2802 = vpop.permute.xlu0 %2801
    %2803 = vrot.lane.b32.xlu0 %v2798, 126
    %v2804 = vpop.permute.xlu0 %2803
    %v2807 = vadd.f32 %v2765, %v2802
    %v2808 = vadd.f32 %v2766, %v2804
    %s2809 = sld [smem:[#allocation3 + $0x8e]]
    %v2810 = vstv %s2809
    %v2811 = vmul.f32 %v2810, %v2733
    %v2812 = vmul.f32 %v2810, %v2734
    %2815 = vrot.lane.b32.xlu0 %v2811, 126
    %v2816 = vpop.permute.xlu0 %2815
    %2817 = vrot.lane.b32.xlu0 %v2812, 126
    %v2818 = vpop.permute.xlu0 %2817
    %v2821 = vadd.f32 %v2779, %v2816
    %v2822 = vadd.f32 %v2780, %v2818
    %s2823 = sld [smem:[#allocation3 + $0xd9]]
    %v2824 = vstv %s2823
    %v2825 = vmul.f32 %v2824, %v2733
    %v2826 = vmul.f32 %v2824, %v2734
    %2829 = vrot.lane.b32.xlu0 %v2825, 126
    %v2830 = vpop.permute.xlu0 %2829
    %2831 = vrot.lane.b32.xlu0 %v2826, 126
    %v2832 = vpop.permute.xlu0 %2831
    %v2835 = vadd.f32 %v2793, %v2830
    %v2836 = vadd.f32 %v2794, %v2832
    %s2837 = sld [smem:[#allocation3 + $0x44]]
    %v2838 = vstv %s2837
    %v2839 = vmul.f32 %v2838, %v2733
    %v2840 = vmul.f32 %v2838, %v2734
    %2843 = vrot.lane.b32.xlu0 %v2839, 125
    %v2844 = vpop.permute.xlu0 %2843
    %2845 = vrot.lane.b32.xlu0 %v2840, 125
    %v2846 = vpop.permute.xlu0 %2845
    %v2849 = vadd.f32 %v2807, %v2844
    %v2850 = vadd.f32 %v2808, %v2846
    %s2851 = sld [smem:[#allocation3 + $0x8f]]
    %v2852 = vstv %s2851
    %v2853 = vmul.f32 %v2852, %v2733
    %v2854 = vmul.f32 %v2852, %v2734
    %2857 = vrot.lane.b32.xlu0 %v2853, 125
    %v2858 = vpop.permute.xlu0 %2857
    %2859 = vrot.lane.b32.xlu0 %v2854, 125
    %v2860 = vpop.permute.xlu0 %2859
    %v2863 = vadd.f32 %v2821, %v2858
    %v2864 = vadd.f32 %v2822, %v2860
    %s2865 = sld [smem:[#allocation3 + $0xda]]
    %v2866 = vstv %s2865
    %v2867 = vmul.f32 %v2866, %v2733
    %v2868 = vmul.f32 %v2866, %v2734
    %2871 = vrot.lane.b32.xlu0 %v2867, 125
    %v2872 = vpop.permute.xlu0 %2871
    %2873 = vrot.lane.b32.xlu0 %v2868, 125
    %v2874 = vpop.permute.xlu0 %2873
    %v2877 = vadd.f32 %v2835, %v2872
    %v2878 = vadd.f32 %v2836, %v2874
    %s2879 = sld [smem:[#allocation3 + $0x45]]
    %v2880 = vstv %s2879
    %v2881 = vmul.f32 %v2880, %v2733
    %v2882 = vmul.f32 %v2880, %v2734
    %2885 = vrot.lane.b32.xlu0 %v2881, 124
    %v2886 = vpop.permute.xlu0 %2885
    %2887 = vrot.lane.b32.xlu0 %v2882, 124
    %v2888 = vpop.permute.xlu0 %2887
    %v2891 = vadd.f32 %v2849, %v2886
    %v2892 = vadd.f32 %v2850, %v2888
    %s2893 = sld [smem:[#allocation3 + $0x90]]
    %v2894 = vstv %s2893
    %v2895 = vmul.f32 %v2894, %v2733
    %v2896 = vmul.f32 %v2894, %v2734
    %2899 = vrot.lane.b32.xlu0 %v2895, 124
    %v2900 = vpop.permute.xlu0 %2899
    %2901 = vrot.lane.b32.xlu0 %v2896, 124
    %v2902 = vpop.permute.xlu0 %2901
    %v2905 = vadd.f32 %v2863, %v2900
    %v2906 = vadd.f32 %v2864, %v2902
    %s2907 = sld [smem:[#allocation3 + $0xdb]]
    %v2908 = vstv %s2907
    %v2909 = vmul.f32 %v2908, %v2733
    %v2910 = vmul.f32 %v2908, %v2734
    %2913 = vrot.lane.b32.xlu0 %v2909, 124
    %v2914 = vpop.permute.xlu0 %2913
    %2915 = vrot.lane.b32.xlu0 %v2910, 124
    %v2916 = vpop.permute.xlu0 %2915
    %v2919 = vadd.f32 %v2877, %v2914
    %v2920 = vadd.f32 %v2878, %v2916
    %v2921 = vld [vmem:[#allocation2 + $0x20] sm:$0xff]
    %v2922 = vld [vmem:[#allocation2 + $0x28] sm:$0x3]
    %s2923 = sld [smem:[#allocation3 + $0x46]]
    %v2924 = vstv %s2923
    %v2925 = vmul.f32 %v2924, %v2921
    %v2926 = vmul.f32 %v2924, %v2922
    %v2927 = vadd.f32 %v2891, %v2925
    %v2928 = vadd.f32 %v2892, %v2926
    %s2929 = sld [smem:[#allocation3 + $0x91]]
    %v2930 = vstv %s2929
    %v2931 = vmul.f32 %v2930, %v2921
    %v2932 = vmul.f32 %v2930, %v2922
    %v2933 = vadd.f32 %v2905, %v2931
    %v2934 = vadd.f32 %v2906, %v2932
    %s2935 = sld [smem:[#allocation3 + $0xdc]]
    %v2936 = vstv %s2935
    %v2937 = vmul.f32 %v2936, %v2921
    %v2938 = vmul.f32 %v2936, %v2922
    %v2939 = vadd.f32 %v2919, %v2937
    %v2940 = vadd.f32 %v2920, %v2938
    %s2941 = sld [smem:[#allocation3 + $0x47]]
    %v2942 = vstv %s2941
    %v2943 = vmul.f32 %v2942, %v2921
    %v2944 = vmul.f32 %v2942, %v2922
    %2947 = vrot.lane.b32.xlu0 %v2943, 127
    %v2948 = vpop.permute.xlu0 %2947
    %2949 = vrot.lane.b32.xlu0 %v2944, 127
    %v2950 = vpop.permute.xlu0 %2949
    %v2953 = vadd.f32 %v2927, %v2948
    %v2954 = vadd.f32 %v2928, %v2950
    %s2955 = sld [smem:[#allocation3 + $0x92]]
    %v2956 = vstv %s2955
    %v2957 = vmul.f32 %v2956, %v2921
    %v2958 = vmul.f32 %v2956, %v2922
    %2961 = vrot.lane.b32.xlu0 %v2957, 127
    %v2962 = vpop.permute.xlu0 %2961
    %2963 = vrot.lane.b32.xlu0 %v2958, 127
    %v2964 = vpop.permute.xlu0 %2963
    %v2967 = vadd.f32 %v2933, %v2962
    %v2968 = vadd.f32 %v2934, %v2964
    %s2969 = sld [smem:[#allocation3 + $0xdd]]
    %v2970 = vstv %s2969
    %v2971 = vmul.f32 %v2970, %v2921
    %v2972 = vmul.f32 %v2970, %v2922
    %2975 = vrot.lane.b32.xlu0 %v2971, 127
    %v2976 = vpop.permute.xlu0 %2975
    %2977 = vrot.lane.b32.xlu0 %v2972, 127
    %v2978 = vpop.permute.xlu0 %2977
    %v2981 = vadd.f32 %v2939, %v2976
    %v2982 = vadd.f32 %v2940, %v2978
    %s2983 = sld [smem:[#allocation3 + $0x48]]
    %v2984 = vstv %s2983
    %v2985 = vmul.f32 %v2984, %v2921
    %v2986 = vmul.f32 %v2984, %v2922
    %2989 = vrot.lane.b32.xlu0 %v2985, 126
    %v2990 = vpop.permute.xlu0 %2989
    %2991 = vrot.lane.b32.xlu0 %v2986, 126
    %v2992 = vpop.permute.xlu0 %2991
    %v2995 = vadd.f32 %v2953, %v2990
    %v2996 = vadd.f32 %v2954, %v2992
    %s2997 = sld [smem:[#allocation3 + $0x93]]
    %v2998 = vstv %s2997
    %v2999 = vmul.f32 %v2998, %v2921
    %v3000 = vmul.f32 %v2998, %v2922
    %3003 = vrot.lane.b32.xlu0 %v2999, 126
    %v3004 = vpop.permute.xlu0 %3003
    %3005 = vrot.lane.b32.xlu0 %v3000, 126
    %v3006 = vpop.permute.xlu0 %3005
    %v3009 = vadd.f32 %v2967, %v3004
    %v3010 = vadd.f32 %v2968, %v3006
    %s3011 = sld [smem:[#allocation3 + $0xde]]
    %v3012 = vstv %s3011
    %v3013 = vmul.f32 %v3012, %v2921
    %v3014 = vmul.f32 %v3012, %v2922
    %3017 = vrot.lane.b32.xlu0 %v3013, 126
    %v3018 = vpop.permute.xlu0 %3017
    %3019 = vrot.lane.b32.xlu0 %v3014, 126
    %v3020 = vpop.permute.xlu0 %3019
    %v3023 = vadd.f32 %v2981, %v3018
    %v3024 = vadd.f32 %v2982, %v3020
    %s3025 = sld [smem:[#allocation3 + $0x49]]
    %v3026 = vstv %s3025
    %v3027 = vmul.f32 %v3026, %v2921
    %v3028 = vmul.f32 %v3026, %v2922
    %3031 = vrot.lane.b32.xlu0 %v3027, 125
    %v3032 = vpop.permute.xlu0 %3031
    %3033 = vrot.lane.b32.xlu0 %v3028, 125
    %v3034 = vpop.permute.xlu0 %3033
    %v3037 = vadd.f32 %v2995, %v3032
    %v3038 = vadd.f32 %v2996, %v3034
    %s3039 = sld [smem:[#allocation3 + $0x94]]
    %v3040 = vstv %s3039
    %v3041 = vmul.f32 %v3040, %v2921
    %v3042 = vmul.f32 %v3040, %v2922
    %3045 = vrot.lane.b32.xlu0 %v3041, 125
    %v3046 = vpop.permute.xlu0 %3045
    %3047 = vrot.lane.b32.xlu0 %v3042, 125
    %v3048 = vpop.permute.xlu0 %3047
    %v3051 = vadd.f32 %v3009, %v3046
    %v3052 = vadd.f32 %v3010, %v3048
    %s3053 = sld [smem:[#allocation3 + $0xdf]]
    %v3054 = vstv %s3053
    %v3055 = vmul.f32 %v3054, %v2921
    %v3056 = vmul.f32 %v3054, %v2922
    %3059 = vrot.lane.b32.xlu0 %v3055, 125
    %v3060 = vpop.permute.xlu0 %3059
    %3061 = vrot.lane.b32.xlu0 %v3056, 125
    %v3062 = vpop.permute.xlu0 %3061
    %v3065 = vadd.f32 %v3023, %v3060
    %v3066 = vadd.f32 %v3024, %v3062
    %s3067 = sld [smem:[#allocation3 + $0x4a]]
    %v3068 = vstv %s3067
    %v3069 = vmul.f32 %v3068, %v2921
    %v3070 = vmul.f32 %v3068, %v2922
    %3073 = vrot.lane.b32.xlu0 %v3069, 124
    %v3074 = vpop.permute.xlu0 %3073
    %3075 = vrot.lane.b32.xlu0 %v3070, 124
    %v3076 = vpop.permute.xlu0 %3075
    %v3079 = vadd.f32 %v3037, %v3074
    %v3080 = vadd.f32 %v3038, %v3076
    %s3081 = sld [smem:[#allocation3 + $0x95]]
    %v3082 = vstv %s3081
    %v3083 = vmul.f32 %v3082, %v2921
    %v3084 = vmul.f32 %v3082, %v2922
    %3087 = vrot.lane.b32.xlu0 %v3083, 124
    %v3088 = vpop.permute.xlu0 %3087
    %3089 = vrot.lane.b32.xlu0 %v3084, 124
    %v3090 = vpop.permute.xlu0 %3089
    %v3093 = vadd.f32 %v3051, %v3088
    %v3094 = vadd.f32 %v3052, %v3090
    %s3095 = sld [smem:[#allocation3 + $0xe0]]
    %v3096 = vstv %s3095
    %v3097 = vmul.f32 %v3096, %v2921
    %v3098 = vmul.f32 %v3096, %v2922
    %3101 = vrot.lane.b32.xlu0 %v3097, 124
    %v3102 = vpop.permute.xlu0 %3101
    %3103 = vrot.lane.b32.xlu0 %v3098, 124
    %v3104 = vpop.permute.xlu0 %3103
    %v3107 = vadd.f32 %v3065, %v3102
    %v3108 = vadd.f32 %v3066, %v3104
    %s3109 = sld [smem:[#allocation5]]
    %v3110 = vstv %s3109
    %v3111 = vadd.f32 %v3079, %v3110
    %v3112 = vadd.f32 %v3080, %v3110
    %v3113 = vtanh.pop %v3111
    %v3114 = vtanh.pop %v3112
    %3115 = vst.msk [vmem:[%s5] sm:$0xff] %vm55, %v3113
    %vm3116 = vcmask 74752
    %3117 = vst.msk [vmem:[%s5 + $0x8] sm:$0x3] %vm3116, %v3114
    %s3118 = sld [smem:[#allocation5 + $0x1]]
    %v3119 = vstv %s3118
    %v3120 = vadd.f32 %v3093, %v3119
    %v3121 = vadd.f32 %v3094, %v3119
    %v3122 = vtanh.pop %v3120
    %v3123 = vtanh.pop %v3121
    %s3124 = scalar_lea.vmem %s5, 16
    %3125 = vst.msk [vmem:[%s3124] sm:$0xff] %vm55, %v3122
    %3126 = vst.msk [vmem:[%s3124 + $0x8] sm:$0x3] %vm3116, %v3123
    %s3127 = sld [smem:[#allocation5 + $0x2]]
    %v3128 = vstv %s3127
    %v3129 = vadd.f32 %v3107, %v3128
    %v3130 = vadd.f32 %v3108, %v3128
    %v3131 = vtanh.pop %v3129
    %v3132 = vtanh.pop %v3130
    %s3133 = scalar_lea.vmem %s5, 32
    %3134 = vst.msk [vmem:[%s3133] sm:$0xff] %vm55, %v3131
    %3135 = vst.msk [vmem:[%s3133 + $0x8] sm:$0x3] %vm3116, %v3132
    // Predicated region
    $region30: #{model_tanh_forward.1} parent=1 // pred_check
      _
    $region31: #{model_tanh_forward.1} parent=1 // pred_check_branch
      %3137 = sbr.rel (0) target = $region33
    $region32: #{model_tanh_forward.1} parent=1 // pred_region
      _
    $region33: #{model_tanh_forward.1} parent=1 // pred_fallthru
      _
    // Predicated region
    $region34: #{model_tanh_forward.1} parent=1 // pred_check
      _
    $region35: #{model_tanh_forward.1} parent=1 // pred_check_branch
      %3139 = sbr.rel (0) target = $region37
    $region36: #{model_tanh_forward.1} parent=1 // pred_region
      _
    $region37: #{model_tanh_forward.1} parent=1 // pred_fallthru
      _
    %3140 = vsyncpa [#allocation4], 1
    %3141 = vsyncpa [#allocation6], 1

</llo_original>
